<compile_context>
chip_gen: v7x
topology: tpu7x:2x2x1
jax: 0.10.0
libtpu: 0.0.40
codegen_flags: <defaults>
</compile_context>

<pallas_src>
import functools

import jax
import jax.numpy as jnp
from jax.experimental import pallas as pl
from jax.experimental.pallas import tpu as pltpu


# --------------------------------------------------------------------------------------
# small helpers
# --------------------------------------------------------------------------------------

def _gelu(x):
    # TODO(synk): HF Whisper uses exact (erf) GELU; tanh approximation keeps lowering on the EUP.
    return jax.nn.gelu(x, approximate=True)


def _identity(x):
    return x


def _row_tile(m, cap=512):
    """Largest row tile <= cap that divides m (prefer multiples of 8)."""
    if m <= cap:
        return m
    for t in range(cap - cap % 8, 7, -8):
        if m % t == 0:
            return t
    for t in range(cap, 0, -1):
        if m % t == 0:
            return t
    return m


def _k_tile(f, cap=4096):
    """Largest contraction tile <= cap that divides f (prefer multiples of 128)."""
    if f <= cap:
        return f
    for t in range(cap - cap % 128, 127, -128):
        if f % t == 0:
            return t
    for t in range(cap, 0, -1):
        if f % t == 0:
            return t
    return f


# --------------------------------------------------------------------------------------
# Pallas kernels
# --------------------------------------------------------------------------------------

def _conv1_gelu_kernel(x_ref, w_ref, b_ref, o_ref):
    # Conv1d(k=3, s=1, p=1) + GELU as 3 shifted matmuls.  x_ref: (1, T+2, Cin) f32,
    # w_ref: (3, Cin, Cout) bf16, b_ref: (1, Cout) f32, o_ref: (1, T, Cout) f32.
    t_out = o_ref.shape[1]
    c_out = o_ref.shape[2]
    acc = jnp.zeros((t_out, c_out), jnp.float32)
    for j in range(3):
        xj = x_ref[0, pl.ds(j, t_out), :].astype(jnp.bfloat16)
        acc = acc + jnp.dot(xj, w_ref[j], preferred_element_type=jnp.float32)
    o_ref[0] = _gelu(acc + b_ref[...]).astype(o_ref.dtype)


def _conv2_gelu_pos_kernel(q_ref, w01_ref, w2_ref, b_ref, pos_ref, o_ref):
    # Conv1d(k=3, s=2, p=1) + GELU + positional embedding.
    # q_ref: (1, S+1, 2*Cin) pair-merged padded input, row t = [x[2t], x[2t+1]].
    # y[t] = x[2t]@W0 + x[2t+1]@W1 + x[2t+2]@W2 = Q[t]@W01 + Q[t+1][:Cin]@W2.
    t_out = o_ref.shape[1]
    cin = w2_ref.shape[0]
    xa = q_ref[0, pl.ds(0, t_out), :].astype(jnp.bfloat16)
    acc = jnp.dot(xa, w01_ref[...], preferred_element_type=jnp.float32)
    xb = q_ref[0, pl.ds(1, t_out), :][:, :cin].astype(jnp.bfloat16)
    acc = acc + jnp.dot(xb, w2_ref[...], preferred_element_type=jnp.float32)
    o_ref[0] = (_gelu(acc + b_ref[...]) + pos_ref[...]).astype(o_ref.dtype)


def _ln_linear_kernel(act, x_ref, g_ref, bln_ref, w_ref, b_ref, o_ref):
    # Fused LayerNorm + Linear (+ optional activation).  LN stats in f32, matmul in bf16.
    x = x_ref[...].astype(jnp.float32)
    mu = jnp.mean(x, axis=-1, keepdims=True)
    var = jnp.mean(jnp.square(x - mu), axis=-1, keepdims=True)
    xn = (x - mu) * jax.lax.rsqrt(var + 1e-5)
    xn = xn * g_ref[...] + bln_ref[...]
    y = jnp.dot(xn.astype(jnp.bfloat16), w_ref[...],
                preferred_element_type=jnp.float32) + b_ref[...]
    o_ref[...] = act(y).astype(o_ref.dtype)


def _linear_residual_kernel(x_ref, w_ref, b_ref, r_ref, o_ref):
    # Linear with the residual add folded into the same kernel.
    y = jnp.dot(x_ref[...].astype(jnp.bfloat16), w_ref[...],
                preferred_element_type=jnp.float32)
    o_ref[...] = (y + b_ref[...] + r_ref[...]).astype(o_ref.dtype)


def _layernorm_kernel(x_ref, g_ref, b_ref, o_ref):
    x = x_ref[...].astype(jnp.float32)
    mu = jnp.mean(x, axis=-1, keepdims=True)
    var = jnp.mean(jnp.square(x - mu), axis=-1, keepdims=True)
    xn = (x - mu) * jax.lax.rsqrt(var + 1e-5)
    o_ref[...] = (xn * g_ref[...] + b_ref[...]).astype(o_ref.dtype)


def _attn_block_kernel(num_heads, hd, scale, qkv_ref, r_ref, wo_ref, bo_ref, o_ref):
    # One batch element per grid step; all heads handled in-kernel; fuses
    # attention core + output projection + residual add; output is lane-dense (S, D).
    d_model = num_heads * hd
    qkv = qkv_ref[0]                                 # (S, 3*D) f32 (post-LN QKV)
    acc = r_ref[0] + bo_ref[...]                     # residual + out-proj bias, f32
    for h in range(num_heads):
        q = qkv[:, h * hd:(h + 1) * hd].astype(jnp.bfloat16)
        k = qkv[:, d_model + h * hd:d_model + (h + 1) * hd].astype(jnp.bfloat16)
        v = qkv[:, 2 * d_model + h * hd:2 * d_model + (h + 1) * hd].astype(jnp.bfloat16)
        # q @ k^T via dot_general contracting last dims (no in-kernel transpose).
        s = jax.lax.dot_general(q, k, (((1,), (1,)), ((), ())),
                                preferred_element_type=jnp.float32) * scale
        s = s - jnp.max(s, axis=-1, keepdims=True)
        p = jnp.exp(s)
        p = p * pl.reciprocal(jnp.sum(p, axis=-1, keepdims=True), approx=True)
        ctx = jnp.dot(p.astype(jnp.bfloat16), v, preferred_element_type=jnp.float32)
        acc = acc + jnp.dot(ctx.astype(jnp.bfloat16),
                            wo_ref[pl.ds(h * hd, hd), :],
                            preferred_element_type=jnp.float32)
    o_ref[0] = acc.astype(o_ref.dtype)
    # TODO(synk): for very long sequences on v7x, tile the KV axis (online softmax)
    # to cap the (S, S) score working set.


def _head_kernel(x_ref, w1_ref, b1_ref, w2_ref, b2_ref, o_ref, acc_ref):
    # Classifier head, K-tiled over the flattened feature axis with a VMEM accumulator:
    #   acc += x_tile @ w1_tile ; at the last step: ReLU -> (.)@w2 + b2 -> sigmoid.
    @pl.when(pl.program_id(0) == 0)
    def _init():
        acc_ref[...] = jnp.zeros_like(acc_ref)

    acc_ref[...] += jnp.dot(x_ref[...].astype(jnp.bfloat16), w1_ref[...],
                            preferred_element_type=jnp.float32)

    @pl.when(pl.program_id(0) == pl.num_programs(0) - 1)
    def _finalize():
        hidden = jnp.maximum(acc_ref[...] + b1_ref[...], 0.0)                  # ReLU, (B, 10)
        y = jnp.sum(hidden * w2_ref[...], axis=-1, keepdims=True) + b2_ref[...]
        o_ref[...] = jax.nn.sigmoid(y)


# --------------------------------------------------------------------------------------
# pallas_call wrappers
# --------------------------------------------------------------------------------------

def conv1_gelu(x_pad, w, b, t_out):
    batch, t_pad, c_in = x_pad.shape
    c_out = w.shape[-1]
    return pl.pallas_call(
        _conv1_gelu_kernel,
        out_shape=jax.ShapeDtypeStruct((batch, t_out, c_out), jnp.float32),
        grid=(batch,),
        in_specs=[pl.BlockSpec((1, t_pad, c_in), lambda bi: (bi, 0, 0)),
                  pl.BlockSpec(w.shape, lambda bi: (0, 0, 0)),
                  pl.BlockSpec(b.shape, lambda bi: (0, 0))],
        out_specs=pl.BlockSpec((1, t_out, c_out), lambda bi: (bi, 0, 0)),
        compiler_params=pltpu.CompilerParams(dimension_semantics=("parallel",)),
    )(x_pad, w, b)


def conv2_gelu_pos(q_in, w01, w2, b, pos, t_out):
    batch, t_half, c2 = q_in.shape
    c_out = w01.shape[-1]
    return pl.pallas_call(
        _conv2_gelu_pos_kernel,
        out_shape=jax.ShapeDtypeStruct((batch, t_out, c_out), jnp.float32),
        grid=(batch,),
        in_specs=[pl.BlockSpec((1, t_half, c2), lambda bi: (bi, 0, 0)),
                  pl.BlockSpec(w01.shape, lambda bi: (0, 0)),
                  pl.BlockSpec(w2.shape, lambda bi: (0, 0)),
                  pl.BlockSpec(b.shape, lambda bi: (0, 0)),
                  pl.BlockSpec(pos.shape, lambda bi: (0, 0))],
        out_specs=pl.BlockSpec((1, t_out, c_out), lambda bi: (bi, 0, 0)),
        compiler_params=pltpu.CompilerParams(dimension_semantics=("parallel",)),
    )(q_in, w01, w2, b, pos)


def ln_linear(x, g, b_ln, w, b, act=_identity):
    m, d = x.shape
    n = w.shape[1]
    tm = _row_tile(m)
    kernel = functools.partial(_ln_linear_kernel, act)
    return pl.pallas_call(
        kernel,
        out_shape=jax.ShapeDtypeStruct((m, n), jnp.float32),
        grid=(m // tm,),
        in_specs=[pl.BlockSpec((tm, d), lambda i: (i, 0)),
                  pl.BlockSpec((1, d), lambda i: (0, 0)),
                  pl.BlockSpec((1, d), lambda i: (0, 0)),
                  pl.BlockSpec((d, n), lambda i: (0, 0)),
                  pl.BlockSpec((1, n), lambda i: (0, 0))],
        out_specs=pl.BlockSpec((tm, n), lambda i: (i, 0)),
        compiler_params=pltpu.CompilerParams(dimension_semantics=("parallel",)),
    )(x, g, b_ln, w, b)


def linear_residual(x, w, b, resid):
    m, k = x.shape
    n = w.shape[1]
    tm = _row_tile(m)
    return pl.pallas_call(
        _linear_residual_kernel,
        out_shape=jax.ShapeDtypeStruct((m, n), jnp.float32),
        grid=(m // tm,),
        in_specs=[pl.BlockSpec((tm, k), lambda i: (i, 0)),
                  pl.BlockSpec((k, n), lambda i: (0, 0)),
                  pl.BlockSpec((1, n), lambda i: (0, 0)),
                  pl.BlockSpec((tm, n), lambda i: (i, 0))],
        out_specs=pl.BlockSpec((tm, n), lambda i: (i, 0)),
        compiler_params=pltpu.CompilerParams(dimension_semantics=("parallel",)),
    )(x, w, b, resid)


def layernorm(x, g, b):
    m, d = x.shape
    tm = _row_tile(m)
    return pl.pallas_call(
        _layernorm_kernel,
        out_shape=jax.ShapeDtypeStruct((m, d), jnp.float32),
        grid=(m // tm,),
        in_specs=[pl.BlockSpec((tm, d), lambda i: (i, 0)),
                  pl.BlockSpec((1, d), lambda i: (0, 0)),
                  pl.BlockSpec((1, d), lambda i: (0, 0))],
        out_specs=pl.BlockSpec((tm, d), lambda i: (i, 0)),
        compiler_params=pltpu.CompilerParams(dimension_semantics=("parallel",)),
    )(x, g, b)


def attn_block(qkv, resid, w_o, b_o, num_heads, scale):
    batch, s, three_d = qkv.shape
    d_model = resid.shape[-1]
    kernel = functools.partial(_attn_block_kernel, num_heads, d_model // num_heads, scale)
    return pl.pallas_call(
        kernel,
        out_shape=jax.ShapeDtypeStruct((batch, s, d_model), jnp.float32),
        grid=(batch,),
        in_specs=[pl.BlockSpec((1, s, three_d), lambda bi: (bi, 0, 0)),
                  pl.BlockSpec((1, s, d_model), lambda bi: (bi, 0, 0)),
                  pl.BlockSpec((d_model, d_model), lambda bi: (0, 0)),
                  pl.BlockSpec((1, d_model), lambda bi: (0, 0))],
        out_specs=pl.BlockSpec((1, s, d_model), lambda bi: (bi, 0, 0)),
        compiler_params=pltpu.CompilerParams(dimension_semantics=("parallel",)),
    )(qkv, resid, w_o, b_o)


def classifier_head(x_flat, w1, b1, w2, b2):
    batch, f = x_flat.shape
    n_h = w1.shape[1]
    tk = _k_tile(f)
    return pl.pallas_call(
        _head_kernel,
        out_shape=jax.ShapeDtypeStruct((batch, 1), jnp.float32),
        grid=(f // tk,),
        in_specs=[pl.BlockSpec((batch, tk), lambda k: (0, k)),
                  pl.BlockSpec((tk, n_h), lambda k: (k, 0)),
                  pl.BlockSpec((1, n_h), lambda k: (0, 0)),
                  pl.BlockSpec((1, n_h), lambda k: (0, 0)),
                  pl.BlockSpec((1, 1), lambda k: (0, 0))],
        out_specs=pl.BlockSpec((batch, 1), lambda k: (0, 0)),
        scratch_shapes=[pltpu.VMEM((batch, n_h), jnp.float32)],
        compiler_params=pltpu.CompilerParams(dimension_semantics=("arbitrary",)),
    )(x_flat, w1, b1, w2, b2)


# --------------------------------------------------------------------------------------
# model wiring
# --------------------------------------------------------------------------------------

def encoder_forward(x_ncl, params, num_heads):
    """Whisper-style encoder.  Input NCL (B, n_mels, T); returns last_hidden_state (B, S, D)."""
    batch = x_ncl.shape[0]
    t_in = x_ncl.shape[2]
    x = jnp.transpose(x_ncl, (0, 2, 1))                         # (B, T, n_mels), channels-last

    # conv1: k=3, s=1, p=1, GELU
    x_pad = jnp.pad(x, ((0, 0), (1, 1), (0, 0)))
    h = conv1_gelu(x_pad, params["conv1_w"], params["conv1_b"], t_in)        # (B, T, D)

    # conv2: k=3, s=2, p=1, GELU, + positional embedding (pair-merged input)
    d_model = h.shape[-1]
    s_len = (t_in - 1) // 2 + 1
    pad_r = 2 * s_len + 1 - t_in                                 # padded length -> 2*(S+1), even
    h_pad = jnp.pad(h, ((0, 0), (1, pad_r), (0, 0)))
    q_in = h_pad.reshape(batch, s_len + 1, 2 * d_model)          # free row-major pair merge
    h = conv2_gelu_pos(q_in, params["conv2_w01"], params["conv2_w2"],
                       params["conv2_b"], params["pos_emb"], s_len)          # (B, S, D)

    hd = d_model // num_heads
    scale = float(hd) ** -0.5
    m = batch * s_len

    for lyr in params["layers"]:
        # fused LN1 + packed QKV projection
        qkv = ln_linear(h.reshape(m, d_model), lyr["ln1_g"], lyr["ln1_b"],
                        lyr["w_qkv"], lyr["b_qkv"])                          # (M, 3D)
        # fused attention (all heads) + out-proj + residual add
        h = attn_block(qkv.reshape(batch, s_len, 3 * d_model), h,
                       lyr["w_o"], lyr["b_o"], num_heads, scale)             # (B, S, D)
        # fused LN2 + fc1 + GELU
        ff = ln_linear(h.reshape(m, d_model), lyr["ln2_g"], lyr["ln2_b"],
                       lyr["w_fc1"], lyr["b_fc1"], act=_gelu)                # (M, ffn)
        # fc2 with the residual add folded in
        h = linear_residual(ff, lyr["w_fc2"], lyr["b_fc2"],
                            h.reshape(m, d_model)).reshape(batch, s_len, d_model)

    h = layernorm(h.reshape(m, d_model), params["lnf_g"], params["lnf_b"])
    return h.reshape(batch, s_len, d_model)


@functools.partial(jax.jit, static_argnames=("num_heads",))
def classifier_forward(x_ncl, params, *, num_heads):
    h = encoder_forward(x_ncl, params, num_heads)                # last_hidden_state (B, S, D)
    batch = h.shape[0]
    x_flat = h.reshape(batch, -1)                                # nn.Flatten (row-major over S, D)
    return classifier_head(x_flat, params["head_w1"], params["head_b1"],
                           params["head_w2"], params["head_b2"])


def init_params(key, *, n_mels, d_model, n_heads, ffn_dim, n_layers, seq_len, n_hidden=10):
    assert d_model % n_heads == 0
    keys = iter(jax.random.split(key, 16 + 6 * n_layers))

    def w(shape, scale=0.02, dtype=jnp.bfloat16):
        return (scale * jax.random.normal(next(keys), shape, dtype=jnp.float32)).astype(dtype)

    def zeros(shape):
        return jnp.zeros(shape, jnp.float32)

    def ones(shape):
        return jnp.ones(shape, jnp.float32)

    d = d_model
    flat_dim = seq_len * d
    params = {
        # conv weights are stored matmul-ready: conv1_w[j] == W_tap_j (Cin, Cout);
        # conv2_w01 = vstack(W_tap0, W_tap1), conv2_w2 = W_tap2.
        "conv1_w": w((3, n_mels, d)),
        "conv1_b": zeros((1, d)),
        "conv2_w01": w((2 * d, d)),
        "conv2_w2": w((d, d)),
        "conv2_b": zeros((1, d)),
        "pos_emb": w((seq_len, d), dtype=jnp.float32),
        "lnf_g": ones((1, d)), "lnf_b": zeros((1, d)),
        "layers": [],
        # classifier head (nn.Linear(flat_dim, 10), nn.Linear(10, 1)); w2 kept as a
        # (1, 10) row since the second "matmul" is a cheap lane-reduce.
        "head_w1": w((flat_dim, n_hidden)),
        "head_b1": zeros((1, n_hidden)),
        "head_w2": w((1, n_hidden), dtype=jnp.float32),
        "head_b2": zeros((1, 1)),
    }
    for _ in range(n_layers):
        wq, wk, wv = w((d, d)), w((d, d)), w((d, d))
        params["layers"].append({
            "ln1_g": ones((1, d)), "ln1_b": zeros((1, d)),
            "w_qkv": jnp.concatenate([wq, wk, wv], axis=1),      # packed (D, 3D) bf16
            "b_qkv": zeros((1, 3 * d)),                          # k_proj has no bias in Whisper
            "w_o": w((d, d)), "b_o": zeros((1, d)),
            "ln2_g": ones((1, d)), "ln2_b": zeros((1, d)),
            "w_fc1": w((d, ffn_dim)), "b_fc1": zeros((1, ffn_dim)),
            "w_fc2": w((ffn_dim, d)), "b_fc2": zeros((1, d)),
        })
    return params


if __name__ == "__main__":
    B, N_MELS, T = 2, 8, 16                  # scaled-down mel spectrogram input (NCL)
    D_MODEL, N_HEADS, FFN_DIM, N_LAYERS = 32, 2, 64, 2
    S = (T - 1) // 2 + 1                     # = 8 frames after the stride-2 conv

    key = jax.random.PRNGKey(0)
    pkey, xkey = jax.random.split(key)
    params = init_params(pkey, n_mels=N_MELS, d_model=D_MODEL, n_heads=N_HEADS,
                         ffn_dim=FFN_DIM, n_layers=N_LAYERS, seq_len=S)
    x = jax.random.normal(xkey, (B, N_MELS, T), dtype=jnp.float32)

    y = classifier_forward(x, params, num_heads=N_HEADS)
    y = jax.block_until_ready(y)
    assert y.shape == (B, 1)
    assert bool(jnp.all((y >= 0.0) & (y <= 1.0)))    # sigmoid range sanity check
    print("KERNEL_OK")
</pallas_src>

<mosaic_0001>
module attributes {stable_mosaic.version = 11 : i64} {
  func.func @_conv1_gelu_kernel(%arg0: i32, %arg1: memref<1x18x8xf32, #tpu.memory_space<vmem>>, %arg2: memref<3x8x32xbf16, #tpu.memory_space<vmem>>, %arg3: memref<1x32xf32, #tpu.memory_space<vmem>>, %arg4: memref<1x16x32xf32, #tpu.memory_space<vmem>>) attributes {dimension_semantics = [#tpu.dimension_semantics<parallel>], iteration_bounds = array<i64: 2>, scalar_prefetch = 0 : i64, scratch_operands = 0 : i64, tpu.core_type = #tpu.core_type<tc>, window_params = [{transform_indices = @transform_0, window_bounds = array<i64: 1, 18, 8>}, {pipeline_mode = #tpu.pipeline_mode<synchronous>, transform_indices = @transform_1, window_bounds = array<i64: 3, 8, 32>}, {pipeline_mode = #tpu.pipeline_mode<synchronous>, transform_indices = @transform_2, window_bounds = array<i64: 1, 32>}, {transform_indices = @transform_3, window_bounds = array<i64: 1, 16, 32>}]} {
    %cst = arith.constant 0.000000e+00 : f32
    %0 = vector.broadcast %cst : f32 to vector<16x32xf32>
    %c0 = arith.constant 0 : index
    %c0_0 = arith.constant 0 : index
    %c0_1 = arith.constant 0 : index
    %1 = vector.load %arg1[%c0, %c0_0, %c0_1] : memref<1x18x8xf32, #tpu.memory_space<vmem>>, vector<1x16x8xf32>
    %2 = vector.shape_cast %1 : vector<1x16x8xf32> to vector<16x8xf32>
    %3 = arith.truncf %2 : vector<16x8xf32> to vector<16x8xbf16>
    %c0_2 = arith.constant 0 : index
    %c0_3 = arith.constant 0 : index
    %c0_4 = arith.constant 0 : index
    %4 = vector.load %arg2[%c0_2, %c0_3, %c0_4] : memref<3x8x32xbf16, #tpu.memory_space<vmem>>, vector<1x8x32xbf16>
    %5 = vector.shape_cast %4 : vector<1x8x32xbf16> to vector<8x32xbf16>
    %cst_5 = arith.constant dense<0.000000e+00> : vector<16x32xf32>
    %6 = tpu.matmul %3, %5, %cst_5 {dimension_numbers = #tpu.dot_dimension_numbers<[1], [0], [0], [1], [0, 0, 1, 1], [], []>} : vector<16x8xbf16>, vector<8x32xbf16>, vector<16x32xf32> -> vector<16x32xf32>
    %7 = arith.addf %0, %6 : vector<16x32xf32>
    %c0_6 = arith.constant 0 : index
    %c1 = arith.constant 1 : index
    %c0_7 = arith.constant 0 : index
    %8 = vector.load %arg1[%c0_6, %c1, %c0_7] : memref<1x18x8xf32, #tpu.memory_space<vmem>>, vector<1x16x8xf32>
    %9 = vector.shape_cast %8 : vector<1x16x8xf32> to vector<16x8xf32>
    %10 = arith.truncf %9 : vector<16x8xf32> to vector<16x8xbf16>
    %c1_8 = arith.constant 1 : index
    %c0_9 = arith.constant 0 : index
    %c0_10 = arith.constant 0 : index
    %11 = vector.load %arg2[%c1_8, %c0_9, %c0_10] : memref<3x8x32xbf16, #tpu.memory_space<vmem>>, vector<1x8x32xbf16>
    %12 = vector.shape_cast %11 : vector<1x8x32xbf16> to vector<8x32xbf16>
    %cst_11 = arith.constant dense<0.000000e+00> : vector<16x32xf32>
    %13 = tpu.matmul %10, %12, %cst_11 {dimension_numbers = #tpu.dot_dimension_numbers<[1], [0], [0], [1], [0, 0, 1, 1], [], []>} : vector<16x8xbf16>, vector<8x32xbf16>, vector<16x32xf32> -> vector<16x32xf32>
    %14 = arith.addf %7, %13 : vector<16x32xf32>
    %c0_12 = arith.constant 0 : index
    %c2 = arith.constant 2 : index
    %c0_13 = arith.constant 0 : index
    %15 = vector.load %arg1[%c0_12, %c2, %c0_13] : memref<1x18x8xf32, #tpu.memory_space<vmem>>, vector<1x16x8xf32>
    %16 = vector.shape_cast %15 : vector<1x16x8xf32> to vector<16x8xf32>
    %17 = arith.truncf %16 : vector<16x8xf32> to vector<16x8xbf16>
    %c2_14 = arith.constant 2 : index
    %c0_15 = arith.constant 0 : index
    %c0_16 = arith.constant 0 : index
    %18 = vector.load %arg2[%c2_14, %c0_15, %c0_16] : memref<3x8x32xbf16, #tpu.memory_space<vmem>>, vector<1x8x32xbf16>
    %19 = vector.shape_cast %18 : vector<1x8x32xbf16> to vector<8x32xbf16>
    %cst_17 = arith.constant dense<0.000000e+00> : vector<16x32xf32>
    %20 = tpu.matmul %17, %19, %cst_17 {dimension_numbers = #tpu.dot_dimension_numbers<[1], [0], [0], [1], [0, 0, 1, 1], [], []>} : vector<16x8xbf16>, vector<8x32xbf16>, vector<16x32xf32> -> vector<16x32xf32>
    %21 = arith.addf %14, %20 : vector<16x32xf32>
    %c0_18 = arith.constant 0 : index
    %c0_19 = arith.constant 0 : index
    %22 = vector.load %arg3[%c0_18, %c0_19] : memref<1x32xf32, #tpu.memory_space<vmem>>, vector<1x32xf32>
    %23 = vector.broadcast %22 : vector<1x32xf32> to vector<16x32xf32>
    %24 = arith.addf %21, %23 : vector<16x32xf32>
    %25 = arith.mulf %24, %24 : vector<16x32xf32>
    %26 = arith.mulf %24, %25 : vector<16x32xf32>
    %cst_20 = arith.constant 4.471500e-02 : f32
    %27 = vector.broadcast %cst_20 : f32 to vector<16x32xf32>
    %28 = arith.mulf %27, %26 : vector<16x32xf32>
    %29 = arith.addf %24, %28 : vector<16x32xf32>
    %cst_21 = arith.constant 0.797884583 : f32
    %30 = vector.broadcast %cst_21 : f32 to vector<16x32xf32>
    %31 = arith.mulf %30, %29 : vector<16x32xf32>
    %32 = math.tanh %31 : vector<16x32xf32>
    %cst_22 = arith.constant 1.000000e+00 : f32
    %33 = vector.broadcast %cst_22 : f32 to vector<16x32xf32>
    %34 = arith.addf %33, %32 : vector<16x32xf32>
    %cst_23 = arith.constant 5.000000e-01 : f32
    %35 = vector.broadcast %cst_23 : f32 to vector<16x32xf32>
    %36 = arith.mulf %35, %34 : vector<16x32xf32>
    %37 = arith.mulf %24, %36 : vector<16x32xf32>
    %c0_24 = arith.constant 0 : index
    %c0_25 = arith.constant 0 : index
    %c0_26 = arith.constant 0 : index
    %38 = vector.load %arg4[%c0_24, %c0_25, %c0_26] : memref<1x16x32xf32, #tpu.memory_space<vmem>>, vector<1x16x32xf32>
    %39 = vector.shape_cast %38 : vector<1x16x32xf32> to vector<16x32xf32>
    %40 = vector.shape_cast %37 : vector<16x32xf32> to vector<1x16x32xf32>
    tpu.vector_store %arg4[%c0_24, %c0_25, %c0_26], %40 {strides = array<i32>} : memref<1x16x32xf32, #tpu.memory_space<vmem>>, vector<1x16x32xf32>,
    return
  }
  func.func @transform_0(%arg0: i32) -> (i32, i32, i32) {
    %c0_i32 = arith.constant 0 : i32
    %c0_i32_0 = arith.constant 0 : i32
    %c0_i32_1 = arith.constant 0 : i32
    return %arg0, %c0_i32, %c0_i32_0 : i32, i32, i32
  }
  func.func @transform_1(%arg0: i32) -> (i32, i32, i32) {
    %c0_i32 = arith.constant 0 : i32
    %c0_i32_0 = arith.constant 0 : i32
    %c0_i32_1 = arith.constant 0 : i32
    %c0_i32_2 = arith.constant 0 : i32
    return %c0_i32, %c0_i32_0, %c0_i32_1 : i32, i32, i32
  }
  func.func @transform_2(%arg0: i32) -> (i32, i32) {
    %c0_i32 = arith.constant 0 : i32
    %c0_i32_0 = arith.constant 0 : i32
    %c0_i32_1 = arith.constant 0 : i32
    return %c0_i32, %c0_i32_0 : i32, i32
  }
  func.func @transform_3(%arg0: i32) -> (i32, i32, i32) {
    %c0_i32 = arith.constant 0 : i32
    %c0_i32_0 = arith.constant 0 : i32
    %c0_i32_1 = arith.constant 0 : i32
    return %arg0, %c0_i32, %c0_i32_0 : i32, i32, i32
  }
}

module attributes {stable_mosaic.version = 11 : i64} {
  func.func @_ln_linear_kernel(%arg0: i32, %arg1: memref<16x32xf32, #tpu.memory_space<vmem>>, %arg2: memref<1x32xf32, #tpu.memory_space<vmem>>, %arg3: memref<1x32xf32, #tpu.memory_space<vmem>>, %arg4: memref<32x96xbf16, #tpu.memory_space<vmem>>, %arg5: memref<1x96xf32, #tpu.memory_space<vmem>>, %arg6: memref<16x96xf32, #tpu.memory_space<vmem>>) attributes {dimension_semantics = [#tpu.dimension_semantics<parallel>], iteration_bounds = array<i64: 1>, scalar_prefetch = 0 : i64, scratch_operands = 0 : i64, tpu.core_type = #tpu.core_type<tc>, window_params = [{transform_indices = @transform_0, window_bounds = array<i64: 16, 32>}, {pipeline_mode = #tpu.pipeline_mode<synchronous>, transform_indices = @transform_1, window_bounds = array<i64: 1, 32>}, {pipeline_mode = #tpu.pipeline_mode<synchronous>, transform_indices = @transform_2, window_bounds = array<i64: 1, 32>}, {pipeline_mode = #tpu.pipeline_mode<synchronous>, transform_indices = @transform_3, window_bounds = array<i64: 32, 96>}, {pipeline_mode = #tpu.pipeline_mode<synchronous>, transform_indices = @transform_4, window_bounds = array<i64: 1, 96>}, {transform_indices = @transform_5, window_bounds = array<i64: 16, 96>}]} {
    %c0 = arith.constant 0 : index
    %c0_0 = arith.constant 0 : index
    %0 = vector.load %arg1[%c0, %c0_0] : memref<16x32xf32, #tpu.memory_space<vmem>>, vector<16x32xf32>
    %cst = arith.constant dense<0.000000e+00> : vector<16xf32>
    %1 = vector.multi_reduction <add>, %0, %cst [1] : vector<16x32xf32> to vector<16xf32>
    %2 = vector.shape_cast %1 : vector<16xf32> to vector<16x1xf32>
    %cst_1 = arith.constant 3.200000e+01 : f32
    %3 = vector.broadcast %cst_1 : f32 to vector<16x1xf32>
    %4 = arith.divf %2, %3 : vector<16x1xf32>
    %5 = vector.broadcast %4 : vector<16x1xf32> to vector<16x32xf32>
    %6 = arith.subf %0, %5 : vector<16x32xf32>
    %7 = arith.mulf %6, %6 : vector<16x32xf32>
    %cst_2 = arith.constant dense<0.000000e+00> : vector<16xf32>
    %8 = vector.multi_reduction <add>, %7, %cst_2 [1] : vector<16x32xf32> to vector<16xf32>
    %9 = vector.shape_cast %8 : vector<16xf32> to vector<16x1xf32>
    %cst_3 = arith.constant 3.200000e+01 : f32
    %10 = vector.broadcast %cst_3 : f32 to vector<16x1xf32>
    %11 = arith.divf %9, %10 : vector<16x1xf32>
    %12 = vector.broadcast %4 : vector<16x1xf32> to vector<16x32xf32>
    %13 = arith.subf %0, %12 : vector<16x32xf32>
    %cst_4 = arith.constant 9.99999974E-6 : f32
    %14 = vector.broadcast %cst_4 : f32 to vector<16x1xf32>
    %15 = arith.addf %11, %14 : vector<16x1xf32>
    %16 = math.rsqrt %15 : vector<16x1xf32>
    %17 = vector.broadcast %16 : vector<16x1xf32> to vector<16x32xf32>
    %18 = arith.mulf %13, %17 : vector<16x32xf32>
    %c0_5 = arith.constant 0 : index
    %c0_6 = arith.constant 0 : index
    %19 = vector.load %arg2[%c0_5, %c0_6] : memref<1x32xf32, #tpu.memory_space<vmem>>, vector<1x32xf32>
    %20 = vector.broadcast %19 : vector<1x32xf32> to vector<16x32xf32>
    %21 = arith.mulf %18, %20 : vector<16x32xf32>
    %c0_7 = arith.constant 0 : index
    %c0_8 = arith.constant 0 : index
    %22 = vector.load %arg3[%c0_7, %c0_8] : memref<1x32xf32, #tpu.memory_space<vmem>>, vector<1x32xf32>
    %23 = vector.broadcast %22 : vector<1x32xf32> to vector<16x32xf32>
    %24 = arith.addf %21, %23 : vector<16x32xf32>
    %25 = arith.truncf %24 : vector<16x32xf32> to vector<16x32xbf16>
    %c0_9 = arith.constant 0 : index
    %c0_10 = arith.constant 0 : index
    %26 = vector.load %arg4[%c0_9, %c0_10] : memref<32x96xbf16, #tpu.memory_space<vmem>>, vector<32x96xbf16>
    %cst_11 = arith.constant dense<0.000000e+00> : vector<16x96xf32>
    %27 = tpu.matmul %25, %26, %cst_11 {dimension_numbers = #tpu.dot_dimension_numbers<[1], [0], [0], [1], [0, 0, 1, 1], [], []>} : vector<16x32xbf16>, vector<32x96xbf16>, vector<16x96xf32> -> vector<16x96xf32>
    %c0_12 = arith.constant 0 : index
    %c0_13 = arith.constant 0 : index
    %28 = vector.load %arg5[%c0_12, %c0_13] : memref<1x96xf32, #tpu.memory_space<vmem>>, vector<1x96xf32>
    %29 = vector.broadcast %28 : vector<1x96xf32> to vector<16x96xf32>
    %30 = arith.addf %27, %29 : vector<16x96xf32>
    %c0_14 = arith.constant 0 : index
    %c0_15 = arith.constant 0 : index
    %31 = vector.load %arg6[%c0_14, %c0_15] : memref<16x96xf32, #tpu.memory_space<vmem>>, vector<16x96xf32>
    tpu.vector_store %arg6[%c0_14, %c0_15], %30 {strides = array<i32>} : memref<16x96xf32, #tpu.memory_space<vmem>>, vector<16x96xf32>,
    return
  }
  func.func @transform_0(%arg0: i32) -> (i32, i32) {
    %c0_i32 = arith.constant 0 : i32
    %c0_i32_0 = arith.constant 0 : i32
    return %arg0, %c0_i32 : i32, i32
  }
  func.func @transform_1(%arg0: i32) -> (i32, i32) {
    %c0_i32 = arith.constant 0 : i32
    %c0_i32_0 = arith.constant 0 : i32
    %c0_i32_1 = arith.constant 0 : i32
    return %c0_i32, %c0_i32_0 : i32, i32
  }
  func.func @transform_2(%arg0: i32) -> (i32, i32) {
    %c0_i32 = arith.constant 0 : i32
    %c0_i32_0 = arith.constant 0 : i32
    %c0_i32_1 = arith.constant 0 : i32
    return %c0_i32, %c0_i32_0 : i32, i32
  }
  func.func @transform_3(%arg0: i32) -> (i32, i32) {
    %c0_i32 = arith.constant 0 : i32
    %c0_i32_0 = arith.constant 0 : i32
    %c0_i32_1 = arith.constant 0 : i32
    return %c0_i32, %c0_i32_0 : i32, i32
  }
  func.func @transform_4(%arg0: i32) -> (i32, i32) {
    %c0_i32 = arith.constant 0 : i32
    %c0_i32_0 = arith.constant 0 : i32
    %c0_i32_1 = arith.constant 0 : i32
    return %c0_i32, %c0_i32_0 : i32, i32
  }
  func.func @transform_5(%arg0: i32) -> (i32, i32) {
    %c0_i32 = arith.constant 0 : i32
    %c0_i32_0 = arith.constant 0 : i32
    return %arg0, %c0_i32 : i32, i32
  }
}

module attributes {stable_mosaic.version = 11 : i64} {
  func.func @_conv2_gelu_pos_kernel(%arg0: i32, %arg1: memref<1x9x64xf32, #tpu.memory_space<vmem>>, %arg2: memref<64x32xbf16, #tpu.memory_space<vmem>>, %arg3: memref<32x32xbf16, #tpu.memory_space<vmem>>, %arg4: memref<1x32xf32, #tpu.memory_space<vmem>>, %arg5: memref<8x32xf32, #tpu.memory_space<vmem>>, %arg6: memref<1x8x32xf32, #tpu.memory_space<vmem>>) attributes {dimension_semantics = [#tpu.dimension_semantics<parallel>], iteration_bounds = array<i64: 2>, scalar_prefetch = 0 : i64, scratch_operands = 0 : i64, tpu.core_type = #tpu.core_type<tc>, window_params = [{transform_indices = @transform_0, window_bounds = array<i64: 1, 9, 64>}, {pipeline_mode = #tpu.pipeline_mode<synchronous>, transform_indices = @transform_1, window_bounds = array<i64: 64, 32>}, {pipeline_mode = #tpu.pipeline_mode<synchronous>, transform_indices = @transform_2, window_bounds = array<i64: 32, 32>}, {pipeline_mode = #tpu.pipeline_mode<synchronous>, transform_indices = @transform_3, window_bounds = array<i64: 1, 32>}, {pipeline_mode = #tpu.pipeline_mode<synchronous>, transform_indices = @transform_4, window_bounds = array<i64: 8, 32>}, {transform_indices = @transform_5, window_bounds = array<i64: 1, 8, 32>}]} {
    %c0 = arith.constant 0 : index
    %c0_0 = arith.constant 0 : index
    %c0_1 = arith.constant 0 : index
    %0 = vector.load %arg1[%c0, %c0_0, %c0_1] : memref<1x9x64xf32, #tpu.memory_space<vmem>>, vector<1x8x64xf32>
    %1 = vector.shape_cast %0 : vector<1x8x64xf32> to vector<8x64xf32>
    %2 = arith.truncf %1 : vector<8x64xf32> to vector<8x64xbf16>
    %c0_2 = arith.constant 0 : index
    %c0_3 = arith.constant 0 : index
    %3 = vector.load %arg2[%c0_2, %c0_3] : memref<64x32xbf16, #tpu.memory_space<vmem>>, vector<64x32xbf16>
    %cst = arith.constant dense<0.000000e+00> : vector<8x32xf32>
    %4 = tpu.matmul %2, %3, %cst {dimension_numbers = #tpu.dot_dimension_numbers<[1], [0], [0], [1], [0, 0, 1, 1], [], []>} : vector<8x64xbf16>, vector<64x32xbf16>, vector<8x32xf32> -> vector<8x32xf32>
    %c0_4 = arith.constant 0 : index
    %c1 = arith.constant 1 : index
    %c0_5 = arith.constant 0 : index
    %5 = vector.load %arg1[%c0_4, %c1, %c0_5] : memref<1x9x64xf32, #tpu.memory_space<vmem>>, vector<1x8x64xf32>
    %6 = vector.shape_cast %5 : vector<1x8x64xf32> to vector<8x64xf32>
    %7 = vector.extract_strided_slice %6 {offsets = [0, 0], sizes = [8, 32], strides = [1, 1]} : vector<8x64xf32> to vector<8x32xf32>
    %8 = arith.truncf %7 : vector<8x32xf32> to vector<8x32xbf16>
    %c0_6 = arith.constant 0 : index
    %c0_7 = arith.constant 0 : index
    %9 = vector.load %arg3[%c0_6, %c0_7] : memref<32x32xbf16, #tpu.memory_space<vmem>>, vector<32x32xbf16>
    %cst_8 = arith.constant dense<0.000000e+00> : vector<8x32xf32>
    %10 = tpu.matmul %8, %9, %cst_8 {dimension_numbers = #tpu.dot_dimension_numbers<[1], [0], [0], [1], [0, 0, 1, 1], [], []>} : vector<8x32xbf16>, vector<32x32xbf16>, vector<8x32xf32> -> vector<8x32xf32>
    %11 = arith.addf %4, %10 : vector<8x32xf32>
    %c0_9 = arith.constant 0 : index
    %c0_10 = arith.constant 0 : index
    %12 = vector.load %arg4[%c0_9, %c0_10] : memref<1x32xf32, #tpu.memory_space<vmem>>, vector<1x32xf32>
    %13 = vector.broadcast %12 : vector<1x32xf32> to vector<8x32xf32>
    %14 = arith.addf %11, %13 : vector<8x32xf32>
    %15 = arith.mulf %14, %14 : vector<8x32xf32>
    %16 = arith.mulf %14, %15 : vector<8x32xf32>
    %cst_11 = arith.constant 4.471500e-02 : f32
    %17 = vector.broadcast %cst_11 : f32 to vector<8x32xf32>
    %18 = arith.mulf %17, %16 : vector<8x32xf32>
    %19 = arith.addf %14, %18 : vector<8x32xf32>
    %cst_12 = arith.constant 0.797884583 : f32
    %20 = vector.broadcast %cst_12 : f32 to vector<8x32xf32>
    %21 = arith.mulf %20, %19 : vector<8x32xf32>
    %22 = math.tanh %21 : vector<8x32xf32>
    %cst_13 = arith.constant 1.000000e+00 : f32
    %23 = vector.broadcast %cst_13 : f32 to vector<8x32xf32>
    %24 = arith.addf %23, %22 : vector<8x32xf32>
    %cst_14 = arith.constant 5.000000e-01 : f32
    %25 = vector.broadcast %cst_14 : f32 to vector<8x32xf32>
    %26 = arith.mulf %25, %24 : vector<8x32xf32>
    %27 = arith.mulf %14, %26 : vector<8x32xf32>
    %c0_15 = arith.constant 0 : index
    %c0_16 = arith.constant 0 : index
    %28 = vector.load %arg5[%c0_15, %c0_16] : memref<8x32xf32, #tpu.memory_space<vmem>>, vector<8x32xf32>
    %29 = arith.addf %27, %28 : vector<8x32xf32>
    %c0_17 = arith.constant 0 : index
    %c0_18 = arith.constant 0 : index
    %c0_19 = arith.constant 0 : index
    %30 = vector.load %arg6[%c0_17, %c0_18, %c0_19] : memref<1x8x32xf32, #tpu.memory_space<vmem>>, vector<1x8x32xf32>
    %31 = vector.shape_cast %30 : vector<1x8x32xf32> to vector<8x32xf32>
    %32 = vector.shape_cast %29 : vector<8x32xf32> to vector<1x8x32xf32>
    tpu.vector_store %arg6[%c0_17, %c0_18, %c0_19], %32 {strides = array<i32>} : memref<1x8x32xf32, #tpu.memory_space<vmem>>, vector<1x8x32xf32>,
    return
  }
  func.func @transform_0(%arg0: i32) -> (i32, i32, i32) {
    %c0_i32 = arith.constant 0 : i32
    %c0_i32_0 = arith.constant 0 : i32
    %c0_i32_1 = arith.constant 0 : i32
    return %arg0, %c0_i32, %c0_i32_0 : i32, i32, i32
  }
  func.func @transform_1(%arg0: i32) -> (i32, i32) {
    %c0_i32 = arith.constant 0 : i32
    %c0_i32_0 = arith.constant 0 : i32
    %c0_i32_1 = arith.constant 0 : i32
    return %c0_i32, %c0_i32_0 : i32, i32
  }
  func.func @transform_2(%arg0: i32) -> (i32, i32) {
    %c0_i32 = arith.constant 0 : i32
    %c0_i32_0 = arith.constant 0 : i32
    %c0_i32_1 = arith.constant 0 : i32
    return %c0_i32, %c0_i32_0 : i32, i32
  }
  func.func @transform_3(%arg0: i32) -> (i32, i32) {
    %c0_i32 = arith.constant 0 : i32
    %c0_i32_0 = arith.constant 0 : i32
    %c0_i32_1 = arith.constant 0 : i32
    return %c0_i32, %c0_i32_0 : i32, i32
  }
  func.func @transform_4(%arg0: i32) -> (i32, i32) {
    %c0_i32 = arith.constant 0 : i32
    %c0_i32_0 = arith.constant 0 : i32
    %c0_i32_1 = arith.constant 0 : i32
    return %c0_i32, %c0_i32_0 : i32, i32
  }
  func.func @transform_5(%arg0: i32) -> (i32, i32, i32) {
    %c0_i32 = arith.constant 0 : i32
    %c0_i32_0 = arith.constant 0 : i32
    %c0_i32_1 = arith.constant 0 : i32
    return %arg0, %c0_i32, %c0_i32_0 : i32, i32, i32
  }
}

module attributes {stable_mosaic.version = 11 : i64} {
  func.func @_attn_block_kernel(%arg0: i32, %arg1: memref<1x8x96xf32, #tpu.memory_space<vmem>>, %arg2: memref<1x8x32xf32, #tpu.memory_space<vmem>>, %arg3: memref<32x32xbf16, #tpu.memory_space<vmem>>, %arg4: memref<1x32xf32, #tpu.memory_space<vmem>>, %arg5: memref<1x8x32xf32, #tpu.memory_space<vmem>>) attributes {dimension_semantics = [#tpu.dimension_semantics<parallel>], iteration_bounds = array<i64: 2>, scalar_prefetch = 0 : i64, scratch_operands = 0 : i64, tpu.core_type = #tpu.core_type<tc>, window_params = [{transform_indices = @transform_0, window_bounds = array<i64: 1, 8, 96>}, {transform_indices = @transform_1, window_bounds = array<i64: 1, 8, 32>}, {pipeline_mode = #tpu.pipeline_mode<synchronous>, transform_indices = @transform_2, window_bounds = array<i64: 32, 32>}, {pipeline_mode = #tpu.pipeline_mode<synchronous>, transform_indices = @transform_3, window_bounds = array<i64: 1, 32>}, {transform_indices = @transform_4, window_bounds = array<i64: 1, 8, 32>}]} {
    %c0 = arith.constant 0 : index
    %c0_0 = arith.constant 0 : index
    %c0_1 = arith.constant 0 : index
    %0 = vector.load %arg1[%c0, %c0_0, %c0_1] : memref<1x8x96xf32, #tpu.memory_space<vmem>>, vector<1x8x96xf32>
    %1 = vector.shape_cast %0 : vector<1x8x96xf32> to vector<8x96xf32>
    %c0_2 = arith.constant 0 : index
    %c0_3 = arith.constant 0 : index
    %c0_4 = arith.constant 0 : index
    %2 = vector.load %arg2[%c0_2, %c0_3, %c0_4] : memref<1x8x32xf32, #tpu.memory_space<vmem>>, vector<1x8x32xf32>
    %3 = vector.shape_cast %2 : vector<1x8x32xf32> to vector<8x32xf32>
    %c0_5 = arith.constant 0 : index
    %c0_6 = arith.constant 0 : index
    %4 = vector.load %arg4[%c0_5, %c0_6] : memref<1x32xf32, #tpu.memory_space<vmem>>, vector<1x32xf32>
    %5 = vector.broadcast %4 : vector<1x32xf32> to vector<8x32xf32>
    %6 = arith.addf %3, %5 : vector<8x32xf32>
    %7 = vector.extract_strided_slice %1 {offsets = [0, 0], sizes = [8, 16], strides = [1, 1]} : vector<8x96xf32> to vector<8x16xf32>
    %8 = arith.truncf %7 : vector<8x16xf32> to vector<8x16xbf16>
    %9 = vector.extract_strided_slice %1 {offsets = [0, 32], sizes = [8, 16], strides = [1, 1]} : vector<8x96xf32> to vector<8x16xf32>
    %10 = arith.truncf %9 : vector<8x16xf32> to vector<8x16xbf16>
    %11 = vector.extract_strided_slice %1 {offsets = [0, 64], sizes = [8, 16], strides = [1, 1]} : vector<8x96xf32> to vector<8x16xf32>
    %12 = arith.truncf %11 : vector<8x16xf32> to vector<8x16xbf16>
    %cst = arith.constant dense<0.000000e+00> : vector<8x8xf32>
    %13 = tpu.matmul %8, %10, %cst {dimension_numbers = #tpu.dot_dimension_numbers<[1], [1], [0], [0], [0, 0, 1, 0], [], []>} : vector<8x16xbf16>, vector<8x16xbf16>, vector<8x8xf32> -> vector<8x8xf32>
    %cst_7 = arith.constant 2.500000e-01 : f32
    %14 = vector.broadcast %cst_7 : f32 to vector<8x8xf32>
    %15 = arith.mulf %13, %14 : vector<8x8xf32>
    %cst_8 = arith.constant dense<0xFF800000> : vector<8xf32>
    %16 = vector.multi_reduction <maximumf>, %15, %cst_8 [1] : vector<8x8xf32> to vector<8xf32>
    %17 = vector.shape_cast %16 : vector<8xf32> to vector<8x1xf32>
    %18 = vector.broadcast %17 : vector<8x1xf32> to vector<8x8xf32>
    %19 = arith.subf %15, %18 : vector<8x8xf32>
    %20 = math.exp %19 : vector<8x8xf32>
    %cst_9 = arith.constant dense<0.000000e+00> : vector<8xf32>
    %21 = vector.multi_reduction <add>, %20, %cst_9 [1] : vector<8x8xf32> to vector<8xf32>
    %22 = vector.shape_cast %21 : vector<8xf32> to vector<8x1xf32>
    %23 = tpu.reciprocal %22 {approx = true} : vector<8x1xf32> -> vector<8x1xf32>
    %24 = vector.broadcast %23 : vector<8x1xf32> to vector<8x8xf32>
    %25 = arith.mulf %20, %24 : vector<8x8xf32>
    %26 = arith.truncf %25 : vector<8x8xf32> to vector<8x8xbf16>
    %cst_10 = arith.constant dense<0.000000e+00> : vector<8x16xf32>
    %27 = tpu.matmul %26, %12, %cst_10 {dimension_numbers = #tpu.dot_dimension_numbers<[1], [0], [0], [1], [0, 0, 1, 1], [], []>} : vector<8x8xbf16>, vector<8x16xbf16>, vector<8x16xf32> -> vector<8x16xf32>
    %28 = arith.truncf %27 : vector<8x16xf32> to vector<8x16xbf16>
    %c0_11 = arith.constant 0 : index
    %c0_12 = arith.constant 0 : index
    %29 = vector.load %arg3[%c0_11, %c0_12] : memref<32x32xbf16, #tpu.memory_space<vmem>>, vector<16x32xbf16>
    %cst_13 = arith.constant dense<0.000000e+00> : vector<8x32xf32>
    %30 = tpu.matmul %28, %29, %cst_13 {dimension_numbers = #tpu.dot_dimension_numbers<[1], [0], [0], [1], [0, 0, 1, 1], [], []>} : vector<8x16xbf16>, vector<16x32xbf16>, vector<8x32xf32> -> vector<8x32xf32>
    %31 = arith.addf %6, %30 : vector<8x32xf32>
    %32 = vector.extract_strided_slice %1 {offsets = [0, 16], sizes = [8, 16], strides = [1, 1]} : vector<8x96xf32> to vector<8x16xf32>
    %33 = arith.truncf %32 : vector<8x16xf32> to vector<8x16xbf16>
    %34 = vector.extract_strided_slice %1 {offsets = [0, 48], sizes = [8, 16], strides = [1, 1]} : vector<8x96xf32> to vector<8x16xf32>
    %35 = arith.truncf %34 : vector<8x16xf32> to vector<8x16xbf16>
    %36 = vector.extract_strided_slice %1 {offsets = [0, 80], sizes = [8, 16], strides = [1, 1]} : vector<8x96xf32> to vector<8x16xf32>
    %37 = arith.truncf %36 : vector<8x16xf32> to vector<8x16xbf16>
    %cst_14 = arith.constant dense<0.000000e+00> : vector<8x8xf32>
    %38 = tpu.matmul %33, %35, %cst_14 {dimension_numbers = #tpu.dot_dimension_numbers<[1], [1], [0], [0], [0, 0, 1, 0], [], []>} : vector<8x16xbf16>, vector<8x16xbf16>, vector<8x8xf32> -> vector<8x8xf32>
    %cst_15 = arith.constant 2.500000e-01 : f32
    %39 = vector.broadcast %cst_15 : f32 to vector<8x8xf32>
    %40 = arith.mulf %38, %39 : vector<8x8xf32>
    %cst_16 = arith.constant dense<0xFF800000> : vector<8xf32>
    %41 = vector.multi_reduction <maximumf>, %40, %cst_16 [1] : vector<8x8xf32> to vector<8xf32>
    %42 = vector.shape_cast %41 : vector<8xf32> to vector<8x1xf32>
    %43 = vector.broadcast %42 : vector<8x1xf32> to vector<8x8xf32>
    %44 = arith.subf %40, %43 : vector<8x8xf32>
    %45 = math.exp %44 : vector<8x8xf32>
    %cst_17 = arith.constant dense<0.000000e+00> : vector<8xf32>
    %46 = vector.multi_reduction <add>, %45, %cst_17 [1] : vector<8x8xf32> to vector<8xf32>
    %47 = vector.shape_cast %46 : vector<8xf32> to vector<8x1xf32>
    %48 = tpu.reciprocal %47 {approx = true} : vector<8x1xf32> -> vector<8x1xf32>
    %49 = vector.broadcast %48 : vector<8x1xf32> to vector<8x8xf32>
    %50 = arith.mulf %45, %49 : vector<8x8xf32>
    %51 = arith.truncf %50 : vector<8x8xf32> to vector<8x8xbf16>
    %cst_18 = arith.constant dense<0.000000e+00> : vector<8x16xf32>
    %52 = tpu.matmul %51, %37, %cst_18 {dimension_numbers = #tpu.dot_dimension_numbers<[1], [0], [0], [1], [0, 0, 1, 1], [], []>} : vector<8x8xbf16>, vector<8x16xbf16>, vector<8x16xf32> -> vector<8x16xf32>
    %53 = arith.truncf %52 : vector<8x16xf32> to vector<8x16xbf16>
    %c16 = arith.constant 16 : index
    %c0_19 = arith.constant 0 : index
    %54 = vector.load %arg3[%c16, %c0_19] : memref<32x32xbf16, #tpu.memory_space<vmem>>, vector<16x32xbf16>
    %cst_20 = arith.constant dense<0.000000e+00> : vector<8x32xf32>
    %55 = tpu.matmul %53, %54, %cst_20 {dimension_numbers = #tpu.dot_dimension_numbers<[1], [0], [0], [1], [0, 0, 1, 1], [], []>} : vector<8x16xbf16>, vector<16x32xbf16>, vector<8x32xf32> -> vector<8x32xf32>
    %56 = arith.addf %31, %55 : vector<8x32xf32>
    %c0_21 = arith.constant 0 : index
    %c0_22 = arith.constant 0 : index
    %c0_23 = arith.constant 0 : index
    %57 = vector.load %arg5[%c0_21, %c0_22, %c0_23] : memref<1x8x32xf32, #tpu.memory_space<vmem>>, vector<1x8x32xf32>
    %58 = vector.shape_cast %57 : vector<1x8x32xf32> to vector<8x32xf32>
    %59 = vector.shape_cast %56 : vector<8x32xf32> to vector<1x8x32xf32>
    tpu.vector_store %arg5[%c0_21, %c0_22, %c0_23], %59 {strides = array<i32>} : memref<1x8x32xf32, #tpu.memory_space<vmem>>, vector<1x8x32xf32>,
    return
  }
  func.func @transform_0(%arg0: i32) -> (i32, i32, i32) {
    %c0_i32 = arith.constant 0 : i32
    %c0_i32_0 = arith.constant 0 : i32
    %c0_i32_1 = arith.constant 0 : i32
    return %arg0, %c0_i32, %c0_i32_0 : i32, i32, i32
  }
  func.func @transform_1(%arg0: i32) -> (i32, i32, i32) {
    %c0_i32 = arith.constant 0 : i32
    %c0_i32_0 = arith.constant 0 : i32
    %c0_i32_1 = arith.constant 0 : i32
    return %arg0, %c0_i32, %c0_i32_0 : i32, i32, i32
  }
  func.func @transform_2(%arg0: i32) -> (i32, i32) {
    %c0_i32 = arith.constant 0 : i32
    %c0_i32_0 = arith.constant 0 : i32
    %c0_i32_1 = arith.constant 0 : i32
    return %c0_i32, %c0_i32_0 : i32, i32
  }
  func.func @transform_3(%arg0: i32) -> (i32, i32) {
    %c0_i32 = arith.constant 0 : i32
    %c0_i32_0 = arith.constant 0 : i32
    %c0_i32_1 = arith.constant 0 : i32
    return %c0_i32, %c0_i32_0 : i32, i32
  }
  func.func @transform_4(%arg0: i32) -> (i32, i32, i32) {
    %c0_i32 = arith.constant 0 : i32
    %c0_i32_0 = arith.constant 0 : i32
    %c0_i32_1 = arith.constant 0 : i32
    return %arg0, %c0_i32, %c0_i32_0 : i32, i32, i32
  }
}

module attributes {stable_mosaic.version = 11 : i64} {
  func.func @_ln_linear_kernel(%arg0: i32, %arg1: memref<16x32xf32, #tpu.memory_space<vmem>>, %arg2: memref<1x32xf32, #tpu.memory_space<vmem>>, %arg3: memref<1x32xf32, #tpu.memory_space<vmem>>, %arg4: memref<32x64xbf16, #tpu.memory_space<vmem>>, %arg5: memref<1x64xf32, #tpu.memory_space<vmem>>, %arg6: memref<16x64xf32, #tpu.memory_space<vmem>>) attributes {dimension_semantics = [#tpu.dimension_semantics<parallel>], iteration_bounds = array<i64: 1>, scalar_prefetch = 0 : i64, scratch_operands = 0 : i64, tpu.core_type = #tpu.core_type<tc>, window_params = [{transform_indices = @transform_0, window_bounds = array<i64: 16, 32>}, {pipeline_mode = #tpu.pipeline_mode<synchronous>, transform_indices = @transform_1, window_bounds = array<i64: 1, 32>}, {pipeline_mode = #tpu.pipeline_mode<synchronous>, transform_indices = @transform_2, window_bounds = array<i64: 1, 32>}, {pipeline_mode = #tpu.pipeline_mode<synchronous>, transform_indices = @transform_3, window_bounds = array<i64: 32, 64>}, {pipeline_mode = #tpu.pipeline_mode<synchronous>, transform_indices = @transform_4, window_bounds = array<i64: 1, 64>}, {transform_indices = @transform_5, window_bounds = array<i64: 16, 64>}]} {
    %c0 = arith.constant 0 : index
    %c0_0 = arith.constant 0 : index
    %0 = vector.load %arg1[%c0, %c0_0] : memref<16x32xf32, #tpu.memory_space<vmem>>, vector<16x32xf32>
    %cst = arith.constant dense<0.000000e+00> : vector<16xf32>
    %1 = vector.multi_reduction <add>, %0, %cst [1] : vector<16x32xf32> to vector<16xf32>
    %2 = vector.shape_cast %1 : vector<16xf32> to vector<16x1xf32>
    %cst_1 = arith.constant 3.200000e+01 : f32
    %3 = vector.broadcast %cst_1 : f32 to vector<16x1xf32>
    %4 = arith.divf %2, %3 : vector<16x1xf32>
    %5 = vector.broadcast %4 : vector<16x1xf32> to vector<16x32xf32>
    %6 = arith.subf %0, %5 : vector<16x32xf32>
    %7 = arith.mulf %6, %6 : vector<16x32xf32>
    %cst_2 = arith.constant dense<0.000000e+00> : vector<16xf32>
    %8 = vector.multi_reduction <add>, %7, %cst_2 [1] : vector<16x32xf32> to vector<16xf32>
    %9 = vector.shape_cast %8 : vector<16xf32> to vector<16x1xf32>
    %cst_3 = arith.constant 3.200000e+01 : f32
    %10 = vector.broadcast %cst_3 : f32 to vector<16x1xf32>
    %11 = arith.divf %9, %10 : vector<16x1xf32>
    %12 = vector.broadcast %4 : vector<16x1xf32> to vector<16x32xf32>
    %13 = arith.subf %0, %12 : vector<16x32xf32>
    %cst_4 = arith.constant 9.99999974E-6 : f32
    %14 = vector.broadcast %cst_4 : f32 to vector<16x1xf32>
    %15 = arith.addf %11, %14 : vector<16x1xf32>
    %16 = math.rsqrt %15 : vector<16x1xf32>
    %17 = vector.broadcast %16 : vector<16x1xf32> to vector<16x32xf32>
    %18 = arith.mulf %13, %17 : vector<16x32xf32>
    %c0_5 = arith.constant 0 : index
    %c0_6 = arith.constant 0 : index
    %19 = vector.load %arg2[%c0_5, %c0_6] : memref<1x32xf32, #tpu.memory_space<vmem>>, vector<1x32xf32>
    %20 = vector.broadcast %19 : vector<1x32xf32> to vector<16x32xf32>
    %21 = arith.mulf %18, %20 : vector<16x32xf32>
    %c0_7 = arith.constant 0 : index
    %c0_8 = arith.constant 0 : index
    %22 = vector.load %arg3[%c0_7, %c0_8] : memref<1x32xf32, #tpu.memory_space<vmem>>, vector<1x32xf32>
    %23 = vector.broadcast %22 : vector<1x32xf32> to vector<16x32xf32>
    %24 = arith.addf %21, %23 : vector<16x32xf32>
    %25 = arith.truncf %24 : vector<16x32xf32> to vector<16x32xbf16>
    %c0_9 = arith.constant 0 : index
    %c0_10 = arith.constant 0 : index
    %26 = vector.load %arg4[%c0_9, %c0_10] : memref<32x64xbf16, #tpu.memory_space<vmem>>, vector<32x64xbf16>
    %cst_11 = arith.constant dense<0.000000e+00> : vector<16x64xf32>
    %27 = tpu.matmul %25, %26, %cst_11 {dimension_numbers = #tpu.dot_dimension_numbers<[1], [0], [0], [1], [0, 0, 1, 1], [], []>} : vector<16x32xbf16>, vector<32x64xbf16>, vector<16x64xf32> -> vector<16x64xf32>
    %c0_12 = arith.constant 0 : index
    %c0_13 = arith.constant 0 : index
    %28 = vector.load %arg5[%c0_12, %c0_13] : memref<1x64xf32, #tpu.memory_space<vmem>>, vector<1x64xf32>
    %29 = vector.broadcast %28 : vector<1x64xf32> to vector<16x64xf32>
    %30 = arith.addf %27, %29 : vector<16x64xf32>
    %31 = arith.mulf %30, %30 : vector<16x64xf32>
    %32 = arith.mulf %30, %31 : vector<16x64xf32>
    %cst_14 = arith.constant 4.471500e-02 : f32
    %33 = vector.broadcast %cst_14 : f32 to vector<16x64xf32>
    %34 = arith.mulf %33, %32 : vector<16x64xf32>
    %35 = arith.addf %30, %34 : vector<16x64xf32>
    %cst_15 = arith.constant 0.797884583 : f32
    %36 = vector.broadcast %cst_15 : f32 to vector<16x64xf32>
    %37 = arith.mulf %36, %35 : vector<16x64xf32>
    %38 = math.tanh %37 : vector<16x64xf32>
    %cst_16 = arith.constant 1.000000e+00 : f32
    %39 = vector.broadcast %cst_16 : f32 to vector<16x64xf32>
    %40 = arith.addf %39, %38 : vector<16x64xf32>
    %cst_17 = arith.constant 5.000000e-01 : f32
    %41 = vector.broadcast %cst_17 : f32 to vector<16x64xf32>
    %42 = arith.mulf %41, %40 : vector<16x64xf32>
    %43 = arith.mulf %30, %42 : vector<16x64xf32>
    %c0_18 = arith.constant 0 : index
    %c0_19 = arith.constant 0 : index
    %44 = vector.load %arg6[%c0_18, %c0_19] : memref<16x64xf32, #tpu.memory_space<vmem>>, vector<16x64xf32>
    tpu.vector_store %arg6[%c0_18, %c0_19], %43 {strides = array<i32>} : memref<16x64xf32, #tpu.memory_space<vmem>>, vector<16x64xf32>,
    return
  }
  func.func @transform_0(%arg0: i32) -> (i32, i32) {
    %c0_i32 = arith.constant 0 : i32
    %c0_i32_0 = arith.constant 0 : i32
    return %arg0, %c0_i32 : i32, i32
  }
  func.func @transform_1(%arg0: i32) -> (i32, i32) {
    %c0_i32 = arith.constant 0 : i32
    %c0_i32_0 = arith.constant 0 : i32
    %c0_i32_1 = arith.constant 0 : i32
    return %c0_i32, %c0_i32_0 : i32, i32
  }
  func.func @transform_2(%arg0: i32) -> (i32, i32) {
    %c0_i32 = arith.constant 0 : i32
    %c0_i32_0 = arith.constant 0 : i32
    %c0_i32_1 = arith.constant 0 : i32
    return %c0_i32, %c0_i32_0 : i32, i32
  }
  func.func @transform_3(%arg0: i32) -> (i32, i32) {
    %c0_i32 = arith.constant 0 : i32
    %c0_i32_0 = arith.constant 0 : i32
    %c0_i32_1 = arith.constant 0 : i32
    return %c0_i32, %c0_i32_0 : i32, i32
  }
  func.func @transform_4(%arg0: i32) -> (i32, i32) {
    %c0_i32 = arith.constant 0 : i32
    %c0_i32_0 = arith.constant 0 : i32
    %c0_i32_1 = arith.constant 0 : i32
    return %c0_i32, %c0_i32_0 : i32, i32
  }
  func.func @transform_5(%arg0: i32) -> (i32, i32) {
    %c0_i32 = arith.constant 0 : i32
    %c0_i32_0 = arith.constant 0 : i32
    return %arg0, %c0_i32 : i32, i32
  }
}

module attributes {stable_mosaic.version = 11 : i64} {
  func.func @_layernorm_kernel(%arg0: i32, %arg1: memref<16x32xf32, #tpu.memory_space<vmem>>, %arg2: memref<1x32xf32, #tpu.memory_space<vmem>>, %arg3: memref<1x32xf32, #tpu.memory_space<vmem>>, %arg4: memref<16x32xf32, #tpu.memory_space<vmem>>) attributes {dimension_semantics = [#tpu.dimension_semantics<parallel>], iteration_bounds = array<i64: 1>, scalar_prefetch = 0 : i64, scratch_operands = 0 : i64, tpu.core_type = #tpu.core_type<tc>, window_params = [{transform_indices = @transform_0, window_bounds = array<i64: 16, 32>}, {pipeline_mode = #tpu.pipeline_mode<synchronous>, transform_indices = @transform_1, window_bounds = array<i64: 1, 32>}, {pipeline_mode = #tpu.pipeline_mode<synchronous>, transform_indices = @transform_2, window_bounds = array<i64: 1, 32>}, {transform_indices = @transform_3, window_bounds = array<i64: 16, 32>}]} {
    %c0 = arith.constant 0 : index
    %c0_0 = arith.constant 0 : index
    %0 = vector.load %arg1[%c0, %c0_0] : memref<16x32xf32, #tpu.memory_space<vmem>>, vector<16x32xf32>
    %cst = arith.constant dense<0.000000e+00> : vector<16xf32>
    %1 = vector.multi_reduction <add>, %0, %cst [1] : vector<16x32xf32> to vector<16xf32>
    %2 = vector.shape_cast %1 : vector<16xf32> to vector<16x1xf32>
    %cst_1 = arith.constant 3.200000e+01 : f32
    %3 = vector.broadcast %cst_1 : f32 to vector<16x1xf32>
    %4 = arith.divf %2, %3 : vector<16x1xf32>
    %5 = vector.broadcast %4 : vector<16x1xf32> to vector<16x32xf32>
    %6 = arith.subf %0, %5 : vector<16x32xf32>
    %7 = arith.mulf %6, %6 : vector<16x32xf32>
    %cst_2 = arith.constant dense<0.000000e+00> : vector<16xf32>
    %8 = vector.multi_reduction <add>, %7, %cst_2 [1] : vector<16x32xf32> to vector<16xf32>
    %9 = vector.shape_cast %8 : vector<16xf32> to vector<16x1xf32>
    %cst_3 = arith.constant 3.200000e+01 : f32
    %10 = vector.broadcast %cst_3 : f32 to vector<16x1xf32>
    %11 = arith.divf %9, %10 : vector<16x1xf32>
    %12 = vector.broadcast %4 : vector<16x1xf32> to vector<16x32xf32>
    %13 = arith.subf %0, %12 : vector<16x32xf32>
    %cst_4 = arith.constant 9.99999974E-6 : f32
    %14 = vector.broadcast %cst_4 : f32 to vector<16x1xf32>
    %15 = arith.addf %11, %14 : vector<16x1xf32>
    %16 = math.rsqrt %15 : vector<16x1xf32>
    %17 = vector.broadcast %16 : vector<16x1xf32> to vector<16x32xf32>
    %18 = arith.mulf %13, %17 : vector<16x32xf32>
    %c0_5 = arith.constant 0 : index
    %c0_6 = arith.constant 0 : index
    %19 = vector.load %arg2[%c0_5, %c0_6] : memref<1x32xf32, #tpu.memory_space<vmem>>, vector<1x32xf32>
    %20 = vector.broadcast %19 : vector<1x32xf32> to vector<16x32xf32>
    %21 = arith.mulf %18, %20 : vector<16x32xf32>
    %c0_7 = arith.constant 0 : index
    %c0_8 = arith.constant 0 : index
    %22 = vector.load %arg3[%c0_7, %c0_8] : memref<1x32xf32, #tpu.memory_space<vmem>>, vector<1x32xf32>
    %23 = vector.broadcast %22 : vector<1x32xf32> to vector<16x32xf32>
    %24 = arith.addf %21, %23 : vector<16x32xf32>
    %c0_9 = arith.constant 0 : index
    %c0_10 = arith.constant 0 : index
    %25 = vector.load %arg4[%c0_9, %c0_10] : memref<16x32xf32, #tpu.memory_space<vmem>>, vector<16x32xf32>
    tpu.vector_store %arg4[%c0_9, %c0_10], %24 {strides = array<i32>} : memref<16x32xf32, #tpu.memory_space<vmem>>, vector<16x32xf32>,
    return
  }
  func.func @transform_0(%arg0: i32) -> (i32, i32) {
    %c0_i32 = arith.constant 0 : i32
    %c0_i32_0 = arith.constant 0 : i32
    return %arg0, %c0_i32 : i32, i32
  }
  func.func @transform_1(%arg0: i32) -> (i32, i32) {
    %c0_i32 = arith.constant 0 : i32
    %c0_i32_0 = arith.constant 0 : i32
    %c0_i32_1 = arith.constant 0 : i32
    return %c0_i32, %c0_i32_0 : i32, i32
  }
  func.func @transform_2(%arg0: i32) -> (i32, i32) {
    %c0_i32 = arith.constant 0 : i32
    %c0_i32_0 = arith.constant 0 : i32
    %c0_i32_1 = arith.constant 0 : i32
    return %c0_i32, %c0_i32_0 : i32, i32
  }
  func.func @transform_3(%arg0: i32) -> (i32, i32) {
    %c0_i32 = arith.constant 0 : i32
    %c0_i32_0 = arith.constant 0 : i32
    return %arg0, %c0_i32 : i32, i32
  }
}

module attributes {stable_mosaic.version = 11 : i64} {
  func.func @_linear_residual_kernel(%arg0: i32, %arg1: memref<16x64xf32, #tpu.memory_space<vmem>>, %arg2: memref<64x32xbf16, #tpu.memory_space<vmem>>, %arg3: memref<1x32xf32, #tpu.memory_space<vmem>>, %arg4: memref<16x32xf32, #tpu.memory_space<vmem>>, %arg5: memref<16x32xf32, #tpu.memory_space<vmem>>) attributes {dimension_semantics = [#tpu.dimension_semantics<parallel>], iteration_bounds = array<i64: 1>, scalar_prefetch = 0 : i64, scratch_operands = 0 : i64, tpu.core_type = #tpu.core_type<tc>, window_params = [{transform_indices = @transform_0, window_bounds = array<i64: 16, 64>}, {pipeline_mode = #tpu.pipeline_mode<synchronous>, transform_indices = @transform_1, window_bounds = array<i64: 64, 32>}, {pipeline_mode = #tpu.pipeline_mode<synchronous>, transform_indices = @transform_2, window_bounds = array<i64: 1, 32>}, {transform_indices = @transform_3, window_bounds = array<i64: 16, 32>}, {transform_indices = @transform_4, window_bounds = array<i64: 16, 32>}]} {
    %c0 = arith.constant 0 : index
    %c0_0 = arith.constant 0 : index
    %0 = vector.load %arg1[%c0, %c0_0] : memref<16x64xf32, #tpu.memory_space<vmem>>, vector<16x64xf32>
    %1 = arith.truncf %0 : vector<16x64xf32> to vector<16x64xbf16>
    %c0_1 = arith.constant 0 : index
    %c0_2 = arith.constant 0 : index
    %2 = vector.load %arg2[%c0_1, %c0_2] : memref<64x32xbf16, #tpu.memory_space<vmem>>, vector<64x32xbf16>
    %cst = arith.constant dense<0.000000e+00> : vector<16x32xf32>
    %3 = tpu.matmul %1, %2, %cst {dimension_numbers = #tpu.dot_dimension_numbers<[1], [0], [0], [1], [0, 0, 1, 1], [], []>} : vector<16x64xbf16>, vector<64x32xbf16>, vector<16x32xf32> -> vector<16x32xf32>
    %c0_3 = arith.constant 0 : index
    %c0_4 = arith.constant 0 : index
    %4 = vector.load %arg3[%c0_3, %c0_4] : memref<1x32xf32, #tpu.memory_space<vmem>>, vector<1x32xf32>
    %5 = vector.broadcast %4 : vector<1x32xf32> to vector<16x32xf32>
    %6 = arith.addf %3, %5 : vector<16x32xf32>
    %c0_5 = arith.constant 0 : index
    %c0_6 = arith.constant 0 : index
    %7 = vector.load %arg4[%c0_5, %c0_6] : memref<16x32xf32, #tpu.memory_space<vmem>>, vector<16x32xf32>
    %8 = arith.addf %6, %7 : vector<16x32xf32>
    %c0_7 = arith.constant 0 : index
    %c0_8 = arith.constant 0 : index
    %9 = vector.load %arg5[%c0_7, %c0_8] : memref<16x32xf32, #tpu.memory_space<vmem>>, vector<16x32xf32>
    tpu.vector_store %arg5[%c0_7, %c0_8], %8 {strides = array<i32>} : memref<16x32xf32, #tpu.memory_space<vmem>>, vector<16x32xf32>,
    return
  }
  func.func @transform_0(%arg0: i32) -> (i32, i32) {
    %c0_i32 = arith.constant 0 : i32
    %c0_i32_0 = arith.constant 0 : i32
    return %arg0, %c0_i32 : i32, i32
  }
  func.func @transform_1(%arg0: i32) -> (i32, i32) {
    %c0_i32 = arith.constant 0 : i32
    %c0_i32_0 = arith.constant 0 : i32
    %c0_i32_1 = arith.constant 0 : i32
    return %c0_i32, %c0_i32_0 : i32, i32
  }
  func.func @transform_2(%arg0: i32) -> (i32, i32) {
    %c0_i32 = arith.constant 0 : i32
    %c0_i32_0 = arith.constant 0 : i32
    %c0_i32_1 = arith.constant 0 : i32
    return %c0_i32, %c0_i32_0 : i32, i32
  }
  func.func @transform_3(%arg0: i32) -> (i32, i32) {
    %c0_i32 = arith.constant 0 : i32
    %c0_i32_0 = arith.constant 0 : i32
    return %arg0, %c0_i32 : i32, i32
  }
  func.func @transform_4(%arg0: i32) -> (i32, i32) {
    %c0_i32 = arith.constant 0 : i32
    %c0_i32_0 = arith.constant 0 : i32
    return %arg0, %c0_i32 : i32, i32
  }
}

module attributes {stable_mosaic.version = 11 : i64} {
  func.func @_head_kernel(%arg0: i32, %arg1: memref<2x256xf32, #tpu.memory_space<vmem>>, %arg2: memref<256x10xbf16, #tpu.memory_space<vmem>>, %arg3: memref<1x10xf32, #tpu.memory_space<vmem>>, %arg4: memref<1x10xf32, #tpu.memory_space<vmem>>, %arg5: memref<1x1xf32, #tpu.memory_space<vmem>>, %arg6: memref<2x1xf32, #tpu.memory_space<vmem>>, %arg7: memref<2x10xf32, #tpu.memory_space<vmem>>) attributes {dimension_semantics = [#tpu.dimension_semantics<arbitrary>], iteration_bounds = array<i64: 1>, scalar_prefetch = 0 : i64, scratch_operands = 1 : i64, tpu.core_type = #tpu.core_type<tc>, window_params = [{transform_indices = @transform_0, window_bounds = array<i64: 2, 256>}, {transform_indices = @transform_1, window_bounds = array<i64: 256, 10>}, {pipeline_mode = #tpu.pipeline_mode<synchronous>, transform_indices = @transform_2, window_bounds = array<i64: 1, 10>}, {pipeline_mode = #tpu.pipeline_mode<synchronous>, transform_indices = @transform_3, window_bounds = array<i64: 1, 10>}, {pipeline_mode = #tpu.pipeline_mode<synchronous>, transform_indices = @transform_4, window_bounds = array<i64: 1, 1>}, {pipeline_mode = #tpu.pipeline_mode<synchronous>, transform_indices = @transform_5, window_bounds = array<i64: 2, 1>}]} {
    %c0_i32 = arith.constant 0 : i32
    %0 = arith.cmpi eq, %arg0, %c0_i32 : i32
    %1 = arith.extui %0 : i1 to i32
    %c0_i32_0 = arith.constant 0 : i32
    %2 = arith.cmpi ne, %1, %c0_i32_0 : i32
    scf.if %2 {
      %cst_10 = arith.constant 0.000000e+00 : f32
      %13 = vector.broadcast %cst_10 : f32 to vector<2x10xf32>
      %c0_11 = arith.constant 0 : index
      %c0_12 = arith.constant 0 : index
      %14 = vector.load %arg7[%c0_11, %c0_12] : memref<2x10xf32, #tpu.memory_space<vmem>>, vector<2x10xf32>
      tpu.vector_store %arg7[%c0_11, %c0_12], %13 {strides = array<i32>} : memref<2x10xf32, #tpu.memory_space<vmem>>, vector<2x10xf32>,
    } else {
    }
    %c0 = arith.constant 0 : index
    %c0_1 = arith.constant 0 : index
    %3 = vector.load %arg7[%c0, %c0_1] : memref<2x10xf32, #tpu.memory_space<vmem>>, vector<2x10xf32>
    %c0_2 = arith.constant 0 : index
    %c0_3 = arith.constant 0 : index
    %4 = vector.load %arg1[%c0_2, %c0_3] : memref<2x256xf32, #tpu.memory_space<vmem>>, vector<2x256xf32>
    %5 = arith.truncf %4 : vector<2x256xf32> to vector<2x256xbf16>
    %c0_4 = arith.constant 0 : index
    %c0_5 = arith.constant 0 : index
    %6 = vector.load %arg2[%c0_4, %c0_5] : memref<256x10xbf16, #tpu.memory_space<vmem>>, vector<256x10xbf16>
    %cst = arith.constant dense<0.000000e+00> : vector<2x10xf32>
    %7 = tpu.matmul %5, %6, %cst {dimension_numbers = #tpu.dot_dimension_numbers<[1], [0], [0], [1], [0, 0, 1, 1], [], []>} : vector<2x256xbf16>, vector<256x10xbf16>, vector<2x10xf32> -> vector<2x10xf32>
    %8 = arith.addf %3, %7 : vector<2x10xf32>
    %c0_6 = arith.constant 0 : index
    %c0_7 = arith.constant 0 : index
    %9 = vector.load %arg7[%c0_6, %c0_7] : memref<2x10xf32, #tpu.memory_space<vmem>>, vector<2x10xf32>
    tpu.vector_store %arg7[%c0_6, %c0_7], %8 {strides = array<i32>} : memref<2x10xf32, #tpu.memory_space<vmem>>, vector<2x10xf32>,
    %c0_i32_8 = arith.constant 0 : i32
    %10 = arith.cmpi eq, %arg0, %c0_i32_8 : i32
    %11 = arith.extui %10 : i1 to i32
    %c0_i32_9 = arith.constant 0 : i32
    %12 = arith.cmpi ne, %11, %c0_i32_9 : i32
    scf.if %12 {
      %c0_10 = arith.constant 0 : index
      %c0_11 = arith.constant 0 : index
      %13 = vector.load %arg7[%c0_10, %c0_11] : memref<2x10xf32, #tpu.memory_space<vmem>>, vector<2x10xf32>
      %c0_12 = arith.constant 0 : index
      %c0_13 = arith.constant 0 : index
      %14 = vector.load %arg3[%c0_12, %c0_13] : memref<1x10xf32, #tpu.memory_space<vmem>>, vector<1x10xf32>
      %15 = vector.broadcast %14 : vector<1x10xf32> to vector<2x10xf32>
      %16 = arith.addf %13, %15 : vector<2x10xf32>
      %cst_14 = arith.constant 0.000000e+00 : f32
      %17 = vector.broadcast %cst_14 : f32 to vector<2x10xf32>
      %18 = arith.maximumf %16, %17 : vector<2x10xf32>
      %c0_15 = arith.constant 0 : index
      %c0_16 = arith.constant 0 : index
      %19 = vector.load %arg4[%c0_15, %c0_16] : memref<1x10xf32, #tpu.memory_space<vmem>>, vector<1x10xf32>
      %20 = vector.broadcast %19 : vector<1x10xf32> to vector<2x10xf32>
      %21 = arith.mulf %18, %20 : vector<2x10xf32>
      %cst_17 = arith.constant dense<0.000000e+00> : vector<2xf32>
      %22 = vector.multi_reduction <add>, %21, %cst_17 [1] : vector<2x10xf32> to vector<2xf32>
      %23 = vector.shape_cast %22 : vector<2xf32> to vector<2x1xf32>
      %c0_18 = arith.constant 0 : index
      %c0_19 = arith.constant 0 : index
      %24 = vector.load %arg5[%c0_18, %c0_19] : memref<1x1xf32, #tpu.memory_space<vmem>>, vector<1x1xf32>
      %25 = vector.broadcast %24 : vector<1x1xf32> to vector<2x1xf32>
      %26 = arith.addf %23, %25 : vector<2x1xf32>
      %27 = arith.negf %26 : vector<2x1xf32>
      %28 = math.exp %27 : vector<2x1xf32>
      %cst_20 = arith.constant 1.000000e+00 : f32
      %29 = vector.broadcast %cst_20 : f32 to vector<2x1xf32>
      %30 = arith.addf %29, %28 : vector<2x1xf32>
      %31 = arith.divf %29, %30 : vector<2x1xf32>
      %c0_21 = arith.constant 0 : index
      %c0_22 = arith.constant 0 : index
      %32 = vector.load %arg6[%c0_21, %c0_22] : memref<2x1xf32, #tpu.memory_space<vmem>>, vector<2x1xf32>
      tpu.vector_store %arg6[%c0_21, %c0_22], %31 {strides = array<i32>} : memref<2x1xf32, #tpu.memory_space<vmem>>, vector<2x1xf32>,
    } else {
    }
    return
  }
  func.func @transform_0(%arg0: i32) -> (i32, i32) {
    %c0_i32 = arith.constant 0 : i32
    %c0_i32_0 = arith.constant 0 : i32
    return %c0_i32, %arg0 : i32, i32
  }
  func.func @transform_1(%arg0: i32) -> (i32, i32) {
    %c0_i32 = arith.constant 0 : i32
    %c0_i32_0 = arith.constant 0 : i32
    return %arg0, %c0_i32 : i32, i32
  }
  func.func @transform_2(%arg0: i32) -> (i32, i32) {
    %c0_i32 = arith.constant 0 : i32
    %c0_i32_0 = arith.constant 0 : i32
    %c0_i32_1 = arith.constant 0 : i32
    return %c0_i32, %c0_i32_0 : i32, i32
  }
  func.func @transform_3(%arg0: i32) -> (i32, i32) {
    %c0_i32 = arith.constant 0 : i32
    %c0_i32_0 = arith.constant 0 : i32
    %c0_i32_1 = arith.constant 0 : i32
    return %c0_i32, %c0_i32_0 : i32, i32
  }
  func.func @transform_4(%arg0: i32) -> (i32, i32) {
    %c0_i32 = arith.constant 0 : i32
    %c0_i32_0 = arith.constant 0 : i32
    %c0_i32_1 = arith.constant 0 : i32
    return %c0_i32, %c0_i32_0 : i32, i32
  }
  func.func @transform_5(%arg0: i32) -> (i32, i32) {
    %c0_i32 = arith.constant 0 : i32
    %c0_i32_0 = arith.constant 0 : i32
    %c0_i32_1 = arith.constant 0 : i32
    return %c0_i32, %c0_i32_0 : i32, i32
  }
}

</mosaic_0001>

<llo_original>
// kernel: classifier_forward.14
$region0: #{classifier_forward.14}
  #allocation0 [shape = 'u32[]', space=smem, size = 0x4, offset = 0x4, fixed_abs, tag = 'smem constant byte address 0x4 - core index']
  #allocation1 [shape = 'u32[144,128]{1,0:T(1,128)}', space=vmem, size = 0x12000, scoped, tag = 'internal scratch']
  %s0 = inlined_call_operand.vmem [shape: f32[16,32], index: 0, kind: input, shape index: {}]
  %s1 = inlined_call_operand.vmem [shape: f32[1,32], index: 1, kind: input, shape index: {}]
  %s2 = inlined_call_operand.vmem [shape: f32[1,32], index: 2, kind: input, shape index: {}]
  %s3 = inlined_call_operand.vmem [shape: bf16[32,96], index: 3, kind: input, shape index: {}]
  %s4 = inlined_call_operand.vmem [shape: f32[1,96], index: 4, kind: input, shape index: {}]
  %s5 = inlined_call_operand.vmem [shape: f32[16,96], index: 5, kind: output, shape index: {}]
  %s6 = sld [smem:[#allocation0]]
  $region30: #{classifier_forward.14} parent=0
    _
  %s8 = ssub.s32 1, %s6
  %s9 = scalar_select 0, %s8, %s6
  // Predicated region
  $region2: #{classifier_forward.14} parent=0 // pred_check
    _
  $region3: #{classifier_forward.14} parent=0 // pred_check_branch
    %11 = sbr.rel (0) target = $region5
  $region4: #{classifier_forward.14} parent=0 // pred_region
    _
  $region5: #{classifier_forward.14} parent=0 // pred_fallthru
    _
  // Predicated region
  $region6: #{classifier_forward.14} parent=0 // pred_check
    _
  $region7: #{classifier_forward.14} parent=0 // pred_check_branch
    %13 = sbr.rel (0) target = $region9
  $region8: #{classifier_forward.14} parent=0 // pred_region
    _
  $region9: #{classifier_forward.14} parent=0 // pred_fallthru
    _
  // Predicated region
  $region10: #{classifier_forward.14} parent=0 // pred_check
    _
  $region11: #{classifier_forward.14} parent=0 // pred_check_branch
    %15 = sbr.rel (0) target = $region13
  $region12: #{classifier_forward.14} parent=0 // pred_region
    _
  $region13: #{classifier_forward.14} parent=0 // pred_fallthru
    _
  // Predicated region
  $region14: #{classifier_forward.14} parent=0 // pred_check
    _
  $region15: #{classifier_forward.14} parent=0 // pred_check_branch
    %17 = sbr.rel (0) target = $region17
  $region16: #{classifier_forward.14} parent=0 // pred_region
    _
  $region17: #{classifier_forward.14} parent=0 // pred_fallthru
    _
  // Predicated region
  $region18: #{classifier_forward.14} parent=0 // pred_check
    _
  $region19: #{classifier_forward.14} parent=0 // pred_check_branch
    %19 = sbr.rel (0) target = $region21
  $region20: #{classifier_forward.14} parent=0 // pred_region
    _
  $region21: #{classifier_forward.14} parent=0 // pred_fallthru
    _
  %v21 = vld [vmem:[%s0] sm:$0xff]
  %v22 = vld [vmem:[%s0 + $0x8] sm:$0xff]
  %vm23 = vcmask 261120
  %v24 = vsel %vm23, %v21, 0.0
  %25 = vadd.xlane.f32.xlu0 %v24
  %v26 = vpop.xlane.xlu0 %25
  %v27 = vsel %vm23, %v22, 0.0
  %28 = vadd.xlane.f32.xlu0 %v27
  %v29 = vpop.xlane.xlu0 %28
  %v30 = vrcp.pop 32.0
  %v31 = vmul.f32 %v26, %v30
  %v32 = vmul.f32 %v29, %v30
  %v33 = vsub.f32 %v21, %v31
  %v34 = vsub.f32 %v22, %v32
  %v35 = vmul.f32 %v33, %v33
  %v36 = vmul.f32 %v34, %v34
  %v37 = vsel %vm23, %v35, 0.0
  %38 = vadd.xlane.f32.xlu0 %v37
  %v39 = vpop.xlane.xlu0 %38
  %v40 = vsel %vm23, %v36, 0.0
  %41 = vadd.xlane.f32.xlu0 %v40
  %v42 = vpop.xlane.xlu0 %41
  %v43 = vmul.f32 %v39, %v30
  %v44 = vmul.f32 %v42, %v30
  %v45 = vadd.f32 %v43, 1e-05
  %v46 = vadd.f32 %v44, 1e-05
  %v47 = vrsqrt.pop %v45
  %v48 = vrsqrt.pop %v46
  %v49 = vmul.f32 %v33, %v47
  %v50 = vmul.f32 %v34, %v48
  %v51 = vld [vmem:[%s1] sm:$0x1]
  %v53 = vlaneseq
  %v54 = vshrl.u32 %v53, 7
  %v55 = vsub.s32 0, %v54
  %v56 = vrot.slane %v51, %v55
  %v58 = vmul.f32 %v49, %v56
  %v59 = vmul.f32 %v50, %v56
  %v60 = vld [vmem:[%s2] sm:$0x1]
  %v62 = vlaneseq
  %v63 = vshrl.u32 %v62, 7
  %v64 = vsub.s32 0, %v63
  %v65 = vrot.slane %v60, %v64
  %v67 = vadd.f32 %v58, %v65
  %v68 = vadd.f32 %v59, %v65
  %v69 = vpack.c.bf16 %v68, %v67
  %v70 = vld [vmem:[%s3] sm:$0xf]
  %v71 = vld [vmem:[%s3 + $0x4] sm:$0xf]
  %v72 = vld [vmem:[%s3 + $0x8] sm:$0xf]
  %v73 = vld [vmem:[%s3 + $0xc] sm:$0xf]
  %v74 = vld [vmem:[%s4] sm:$0x1]
  %v76 = vlaneseq
  %v77 = vshrl.u32 %v76, 7
  %v78 = vsub.s32 0, %v77
  %v79 = vrot.slane %v74, %v78
  %v85 = vunpack.c.l.b16 %v70
  %v86 = vunpack.c.l.b16 %v71
  %v87 = vunpack.c.l.b16 %v72
  %v88 = vunpack.c.l.b16 %v73
  %v89 = vpack.c.b16 %v86, %v85
  %v90 = vpack.c.b16 %v88, %v87
  %v94 = vsel %vm23, %v69, 0
  %96 = vmatprep.subr.bf16.mxu0 0
  %97 = vmatpush1.bf16.msra.mxu0 %v89
  %98 = vmatprep.subr.bf16.mxu0 0
  %99 = vmatpush1.bf16.msra.mxu0 %v90
  %100 = vmatprep.subr.bf16.mxu0 0
  %101 = vmatpush1.bf16.msra.mxu0 0
  %102 = vmatprep.subr.bf16.mxu0 0
  %103 = vmatpush1.bf16.msra.mxu0 0
  %104 = vmatprep.subr.bf16.mxu0 0
  %105 = vmatpush1.bf16.msra.mxu0 0
  %106 = vmatprep.subr.bf16.mxu0 0
  %107 = vmatpush1.bf16.msra.mxu0 0
  %108 = vmatprep.subr.bf16.mxu0 0
  %109 = vmatpush1.bf16.msra.mxu0 0
  %110 = vmatprep.subr.bf16.mxu0 0
  %111 = vmatpush1.bf16.msra.mxu0 0
  %112 = vmatprep.subr.bf16.mxu0 0
  %113 = vmatpush1.bf16.msra.mxu0 0
  %114 = vmatprep.subr.bf16.mxu0 0
  %115 = vmatpush1.bf16.msra.mxu0 0
  %116 = vmatprep.subr.bf16.mxu0 0
  %117 = vmatpush1.bf16.msra.mxu0 0
  %118 = vmatprep.subr.bf16.mxu0 0
  %119 = vmatpush1.bf16.msra.mxu0 0
  %120 = vmatprep.subr.bf16.mxu0 0
  %121 = vmatpush1.bf16.msra.mxu0 0
  %122 = vmatprep.subr.bf16.mxu0 0
  %123 = vmatpush1.bf16.msra.mxu0 0
  %124 = vmatprep.subr.bf16.mxu0 0
  %125 = vmatpush1.bf16.msra.mxu0 0
  %126 = vmatprep.subr.bf16.mxu0 0
  %127 = vmatpush1.bf16.msra.mxu0 0
  %128 = vmatprep.mubr.bf16.mxu0 0
  %129 = vmatmul.mubr.bf16.gmra.mrb[0].mxu0 %v94
  %v130 = vpop.f32.mrb[0].mxu0
  %v131 = vadd.f32 %v79, %v130
  %v132 = vpop.f32.mrb[0].mxu0
  %v133 = vpop.f32.mrb[0].mxu0
  %v134 = vadd.f32 %v79, %v133
  %v135 = vpop.f32.mrb[0].mxu0
  %136 = vdwg.mxu0
  %vm137 = vcmask 785408
  %138 = vst.msk [vmem:[%s5] sm:$0xff] %vm137, %v131
  %139 = vst.msk [vmem:[%s5 + $0x8] sm:$0xff] %vm137, %v134
  // Predicated region
  $region22: #{classifier_forward.14} parent=0 // pred_check
    _
  $region23: #{classifier_forward.14} parent=0 // pred_check_branch
    %141 = sbr.rel (0) target = $region25
  $region24: #{classifier_forward.14} parent=0 // pred_region
    _
  $region25: #{classifier_forward.14} parent=0 // pred_fallthru
    _
  // Predicated region
  $region26: #{classifier_forward.14} parent=0 // pred_check
    _
  $region27: #{classifier_forward.14} parent=0 // pred_check_branch
    %143 = sbr.rel (0) target = $region29
  $region28: #{classifier_forward.14} parent=0 // pred_region
    _
  $region29: #{classifier_forward.14} parent=0 // pred_fallthru
    _

// kernel: classifier_forward.12
$region0: #{classifier_forward.12}
  #allocation0 [shape = 'u32[]', space=smem, size = 0x4, offset = 0x4, fixed_abs, tag = 'smem constant byte address 0x4 - core index']
  #allocation1 [shape = 'u32[144,128]{1,0:T(1,128)}', space=vmem, size = 0x12000, scoped, tag = 'internal scratch']
  %s0 = inlined_call_operand.vmem [shape: f32[2,18,8], index: 0, kind: input, shape index: {}]
  %s1 = inlined_call_operand.vmem [shape: bf16[3,8,32], index: 1, kind: input, shape index: {}]
  %s2 = inlined_call_operand.vmem [shape: f32[1,32], index: 2, kind: input, shape index: {}]
  %s3 = inlined_call_operand.vmem [shape: f32[2,16,32], index: 3, kind: output, shape index: {}]
  %s4 = sld [smem:[#allocation0]]
  $region45: #{classifier_forward.12} parent=0
    _
  %s6 = ssub.s32 1, %s4
  %s7 = scalar_select 0, %s6, %s4
  loop: start=0, step=1, limit=4
  $region2: #{classifier_forward.12} parent=0 // loop_pre_header
    _
  $region3: #{classifier_forward.12} parent=0 // loop_header
    %s9 = sphi 0, %s13
    %p10 = scmp.ge.s32.totalorder %s9, 4
    %s19 = sphi 0, %s21
    %s22 = sphi 0, %s19
    %s23 = sphi 0, %s22
    %s39 = sphi 0, %s23
    %s43 = sphi 0, %s43
    %s45 = sphi 0, %s43
    %s46 = sphi 0, %s45
    %s60 = sphi 0, %s46
    %s64 = sphi 0, %s64
    %s66 = sphi 0, %s64
    %s67 = sphi 0, %s66
    %s81 = sphi 0, %s67
    %s87 = sphi 0, %s89
    %s90 = sphi 0, %s87
    %s91 = sphi 0, %s90
    %s107 = sphi 0, %s91
  $region4: #{classifier_forward.12} parent=0 // loop_header_branch
    %12 = sbr.rel (%p10) target = $region8
  $region5: #{classifier_forward.12} parent=0 // loop_body
    %s14 = ssub.s32 %s9, 1
    %s15 = ssub.s32 %s9, 2
    %s16 = sadd.s32 %s9, 1
    %s17 = ssub.s32 %s9, %s16
    %p18 = scmp.eq.s32.totalorder %s17, 0
    %s20 = sadd.s32 %s19, 1
    %s21 = scalar_select %p18, %s19, %s20
    %p24 = pneg %p18
    %p25 = scmp.eq.s32.totalorder %s9, 1
    %p26 = por %p24, %p25
    %p27 = scmp.ne.s32.totalorder %s19, %s22
    %p28 = scmp.eq.s32.totalorder %s9, 0
    %p29 = por %p27, %p28
    %p30 = scmp.ne.s32.totalorder %s19, %s22
    %p31 = scmp.eq.s32.totalorder %s14, 1
    %p32 = por %p30, %p31
    %p33 = scmp.ne.s32.totalorder %s22, %s23
    %p34 = scmp.eq.s32.totalorder %s14, 0
    %p35 = por %p33, %p34
    %p36 = scmp.ne.s32.totalorder %s22, %s23
    %p37 = scmp.eq.s32.totalorder %s15, 1
    %p38 = por %p36, %p37
    %p40 = scmp.ne.s32.totalorder %s23, %s39
    %p41 = scmp.eq.s32.totalorder %s15, 0
    %p42 = por %p40, %p41
    %s44 = sadd.s32 %s43, 1
    %p47 = scmp.eq.s32.totalorder %s9, 1
    %p48 = scmp.ne.s32.totalorder %s43, %s45
    %p49 = scmp.eq.s32.totalorder %s9, 0
    %p50 = por %p48, %p49
    %p51 = scmp.ne.s32.totalorder %s43, %s45
    %p52 = scmp.eq.s32.totalorder %s14, 1
    %p53 = por %p51, %p52
    %p54 = scmp.ne.s32.totalorder %s45, %s46
    %p55 = scmp.eq.s32.totalorder %s14, 0
    %p56 = por %p54, %p55
    %p57 = scmp.ne.s32.totalorder %s45, %s46
    %p58 = scmp.eq.s32.totalorder %s15, 1
    %p59 = por %p57, %p58
    %p61 = scmp.ne.s32.totalorder %s46, %s60
    %p62 = scmp.eq.s32.totalorder %s15, 0
    %p63 = por %p61, %p62
    %s65 = sadd.s32 %s64, 1
    %p68 = scmp.eq.s32.totalorder %s9, 1
    %p69 = scmp.ne.s32.totalorder %s64, %s66
    %p70 = scmp.eq.s32.totalorder %s9, 0
    %p71 = por %p69, %p70
    %p72 = scmp.ne.s32.totalorder %s64, %s66
    %p73 = scmp.eq.s32.totalorder %s14, 1
    %p74 = por %p72, %p73
    %p75 = scmp.ne.s32.totalorder %s66, %s67
    %p76 = scmp.eq.s32.totalorder %s14, 0
    %p77 = por %p75, %p76
    %p78 = scmp.ne.s32.totalorder %s66, %s67
    %p79 = scmp.eq.s32.totalorder %s15, 1
    %p80 = por %p78, %p79
    %p82 = scmp.ne.s32.totalorder %s67, %s81
    %p83 = scmp.eq.s32.totalorder %s15, 0
    %p84 = por %p82, %p83
    %s85 = ssub.s32 %s9, %s16
    %p86 = scmp.eq.s32.totalorder %s85, 0
    %s88 = sadd.s32 %s87, 1
    %s89 = scalar_select %p86, %s87, %s88
    %p92 = pneg %p86
    %p93 = scmp.eq.s32.totalorder %s9, 1
    %p94 = por %p92, %p93
    %p95 = scmp.ne.s32.totalorder %s87, %s90
    %p96 = scmp.eq.s32.totalorder %s9, 0
    %p97 = por %p95, %p96
    %p98 = scmp.ne.s32.totalorder %s87, %s90
    %p99 = scmp.eq.s32.totalorder %s14, 1
    %p100 = por %p98, %p99
    %p101 = scmp.ne.s32.totalorder %s90, %s91
    %p102 = scmp.eq.s32.totalorder %s14, 0
    %p103 = por %p101, %p102
    %p104 = scmp.ne.s32.totalorder %s90, %s91
    %p105 = scmp.eq.s32.totalorder %s15, 1
    %p106 = por %p104, %p105
    %p108 = scmp.ne.s32.totalorder %s91, %s107
    %p109 = scmp.eq.s32.totalorder %s15, 0
    %p110 = por %p108, %p109
    %p111 = scmp.le.s32.totalorder 1, %s9
    %p112 = scmp.lt.s32.totalorder %s9, 3
    %p113 = pnand %p111, %p112
    %p114 = pneg %p113
    // Predicated region
    $region9: #{classifier_forward.12} parent=5 // pred_check
      _
    $region10: #{classifier_forward.12} parent=5 // pred_check_branch
      %116 = sbr.rel (%p113) target = $region12
    $region11: #{classifier_forward.12} parent=5 // pred_region
      %s117 = ssub.s32 %s9, 1
      // Predicated region
      $region13: #{classifier_forward.12} parent=11 // pred_check
        %p118 = pneg %p56
      $region14: #{classifier_forward.12} parent=11 // pred_check_branch
        %120 = sbr.rel (%p118) target = $region16
      $region15: #{classifier_forward.12} parent=11 // pred_region
        _
      $region16: #{classifier_forward.12} parent=11 // pred_fallthru
        _
      // Predicated region
      $region17: #{classifier_forward.12} parent=11 // pred_check
        %p121 = pneg %p77
      $region18: #{classifier_forward.12} parent=11 // pred_check_branch
        %123 = sbr.rel (%p121) target = $region20
      $region19: #{classifier_forward.12} parent=11 // pred_region
        _
      $region20: #{classifier_forward.12} parent=11 // pred_fallthru
        _
    $region12: #{classifier_forward.12} parent=5 // pred_fallthru
      _
    %p124 = scmp.lt.s32.totalorder %s9, 2
    // Predicated region
    $region21: #{classifier_forward.12} parent=5 // pred_check
      %p125 = pneg %p124
    $region22: #{classifier_forward.12} parent=5 // pred_check_branch
      %127 = sbr.rel (%p125) target = $region24
    $region23: #{classifier_forward.12} parent=5 // pred_region
      // Predicated region
      $region25: #{classifier_forward.12} parent=23 // pred_check
        %p128 = pneg %p29
      $region26: #{classifier_forward.12} parent=23 // pred_check_branch
        %130 = sbr.rel (%p128) target = $region28
      $region27: #{classifier_forward.12} parent=23 // pred_region
        %p131 = scmp.lt.s32.totalorder %s9, 1
        %s132 = scalar_select %p131, %s9, 1
        %s133 = smul.addr %s132, 3
        %s134 = smul.addr %s133, 8
        %s135 = scalar_lea.vmem %s0, %s134
      $region28: #{classifier_forward.12} parent=23 // pred_fallthru
        _
    $region24: #{classifier_forward.12} parent=5 // pred_fallthru
      _
    %p136 = scmp.le.s32.totalorder 1, %s9
    %p137 = scmp.lt.s32.totalorder %s9, 3
    %p138 = pnand %p136, %p137
    %p139 = pneg %p138
    // Predicated region
    $region29: #{classifier_forward.12} parent=5 // pred_check
      _
    $region30: #{classifier_forward.12} parent=5 // pred_check_branch
      %141 = sbr.rel (%p138) target = $region32
    $region31: #{classifier_forward.12} parent=5 // pred_region
      %s142 = ssub.s32 %s9, 1
      %p143 = scmp.lt.s32.totalorder %s14, 1
      %s144 = scalar_select %p143, %s14, 1
      %s145 = smul.addr %s144, 3
      %s146 = smul.addr %s145, 8
      %s147 = scalar_lea.vmem %s0, %s146
      %p148 = pneg %p35
      %p149 = pneg %p32
      %p150 = pneg %p56
      %p151 = pneg %p53
      %p152 = pneg %p77
      %p153 = pneg %p74
      %p154 = pneg %p103
      %p155 = pneg %p100
      %p156 = scmp.lt.s32.totalorder %s14, 1
      %s157 = scalar_select %p156, %s14, 1
      %s158 = smul.addr %s157, 2
      %s159 = smul.addr %s158, 8
      %s160 = scalar_lea.vmem %s3, %s159
      %p161 = scmp.lt.s32.totalorder %s14, 1
      %s162 = scalar_select %p161, %s14, 1
      %s163 = smul.addr %s162, 3
      %s164 = smul.addr %s163, 8
      %s165 = scalar_lea.vmem %s0, %s164
      %p166 = scmp.lt.s32.totalorder %s14, 1
      %s167 = scalar_select %p166, %s14, 1
      %s168 = smul.addr %s167, 2
      %s169 = smul.addr %s168, 8
      %s170 = scalar_lea.vmem %s3, %s169
      %v172 = vld [vmem:[%s165] sm:$0xff]
      %v173 = vld [vmem:[%s165 + $0x8] sm:$0xff]
      %v174 = vpack.c.bf16 %v173, %v172
      %v175 = vld [vmem:[%s1] sm:$0xf]
      %v176 = vld [vmem:[%s165 + $0x1] sm:$0xff]
      %v177 = vld [vmem:[%s165 + $0x9] sm:$0xff]
      %v178 = vpack.c.bf16 %v177, %v176
      %s179 = scalar_lea.vmem %s1, 4
      %v180 = vld [vmem:[%s179] sm:$0xf]
      %vm181 = vcmask 64512
      %v183 = vsel %vm181, %v178, 0
      %vm185 = vcmask 1043456
      %v187 = vsel %vm185, %v180, 0
      %189 = vmatprep.subr.bf16.mxu0 0
      %190 = vmatpush1.bf16.msra.mxu0 %v187
      %191 = vmatprep.subr.bf16.mxu0 0
      %192 = vmatpush1.bf16.msra.mxu0 0
      %193 = vmatprep.subr.bf16.mxu0 0
      %194 = vmatpush1.bf16.msra.mxu0 0
      %195 = vmatprep.subr.bf16.mxu0 0
      %196 = vmatpush1.bf16.msra.mxu0 0
      %197 = vmatprep.subr.bf16.mxu0 0
      %198 = vmatpush1.bf16.msra.mxu0 0
      %199 = vmatprep.subr.bf16.mxu0 0
      %200 = vmatpush1.bf16.msra.mxu0 0
      %201 = vmatprep.subr.bf16.mxu0 0
      %202 = vmatpush1.bf16.msra.mxu0 0
      %203 = vmatprep.subr.bf16.mxu0 0
      %204 = vmatpush1.bf16.msra.mxu0 0
      %205 = vmatprep.subr.bf16.mxu0 0
      %206 = vmatpush1.bf16.msra.mxu0 0
      %207 = vmatprep.subr.bf16.mxu0 0
      %208 = vmatpush1.bf16.msra.mxu0 0
      %209 = vmatprep.subr.bf16.mxu0 0
      %210 = vmatpush1.bf16.msra.mxu0 0
      %211 = vmatprep.subr.bf16.mxu0 0
      %212 = vmatpush1.bf16.msra.mxu0 0
      %213 = vmatprep.subr.bf16.mxu0 0
      %214 = vmatpush1.bf16.msra.mxu0 0
      %215 = vmatprep.subr.bf16.mxu0 0
      %216 = vmatpush1.bf16.msra.mxu0 0
      %217 = vmatprep.subr.bf16.mxu0 0
      %218 = vmatpush1.bf16.msra.mxu0 0
      %219 = vmatprep.subr.bf16.mxu0 0
      %220 = vmatpush1.bf16.msra.mxu0 0
      %221 = vmatprep.mubr.bf16.mxu0 0
      %222 = vmatmul.mubr.bf16.gmra.mrb[0].mxu0 %v183
      %v223 = vpop.f32.mrb[0].mxu0
      %v224 = vadd.f32 0.0, %v223
      %v225 = vpop.f32.mrb[0].mxu0
      %v226 = vpop.f32.mrb[0].mxu0
      %v227 = vadd.f32 0.0, %v226
      %v228 = vpop.f32.mrb[0].mxu0
      %229 = vdwg.mxu0
      %v231 = vsel %vm181, %v174, 0
      %v234 = vsel %vm185, %v175, 0
      %236 = vmatprep.subr.bf16.mxu0 0
      %237 = vmatpush1.bf16.msra.mxu0 %v234
      %238 = vmatprep.subr.bf16.mxu0 0
      %239 = vmatpush1.bf16.msra.mxu0 0
      %240 = vmatprep.subr.bf16.mxu0 0
      %241 = vmatpush1.bf16.msra.mxu0 0
      %242 = vmatprep.subr.bf16.mxu0 0
      %243 = vmatpush1.bf16.msra.mxu0 0
      %244 = vmatprep.subr.bf16.mxu0 0
      %245 = vmatpush1.bf16.msra.mxu0 0
      %246 = vmatprep.subr.bf16.mxu0 0
      %247 = vmatpush1.bf16.msra.mxu0 0
      %248 = vmatprep.subr.bf16.mxu0 0
      %249 = vmatpush1.bf16.msra.mxu0 0
      %250 = vmatprep.subr.bf16.mxu0 0
      %251 = vmatpush1.bf16.msra.mxu0 0
      %252 = vmatprep.subr.bf16.mxu0 0
      %253 = vmatpush1.bf16.msra.mxu0 0
      %254 = vmatprep.subr.bf16.mxu0 0
      %255 = vmatpush1.bf16.msra.mxu0 0
      %256 = vmatprep.subr.bf16.mxu0 0
      %257 = vmatpush1.bf16.msra.mxu0 0
      %258 = vmatprep.subr.bf16.mxu0 0
      %259 = vmatpush1.bf16.msra.mxu0 0
      %260 = vmatprep.subr.bf16.mxu0 0
      %261 = vmatpush1.bf16.msra.mxu0 0
      %262 = vmatprep.subr.bf16.mxu0 0
      %263 = vmatpush1.bf16.msra.mxu0 0
      %264 = vmatprep.subr.bf16.mxu0 0
      %265 = vmatpush1.bf16.msra.mxu0 0
      %266 = vmatprep.subr.bf16.mxu0 0
      %267 = vmatpush1.bf16.msra.mxu0 0
      %268 = vmatprep.mubr.bf16.mxu0 0
      %269 = vmatmul.mubr.bf16.gmra.mrb[0].mxu0 %v231
      %v270 = vpop.f32.mrb[0].mxu0
      %v271 = vadd.f32 %v224, %v270
      %v272 = vpop.f32.mrb[0].mxu0
      %v273 = vpop.f32.mrb[0].mxu0
      %v274 = vadd.f32 %v227, %v273
      %v275 = vpop.f32.mrb[0].mxu0
      %276 = vdwg.mxu0
      %v277 = vld [vmem:[%s165 + $0x2] sm:$0xff]
      %v278 = vld [vmem:[%s165 + $0xa] sm:$0xff]
      %v279 = vpack.c.bf16 %v278, %v277
      %s280 = scalar_lea.vmem %s1, 8
      %v281 = vld [vmem:[%s280] sm:$0xf]
      %v283 = vsel %vm181, %v279, 0
      %v286 = vsel %vm185, %v281, 0
      %288 = vmatprep.subr.bf16.mxu0 0
      %289 = vmatpush1.bf16.msra.mxu0 %v286
      %290 = vmatprep.subr.bf16.mxu0 0
      %291 = vmatpush1.bf16.msra.mxu0 0
      %292 = vmatprep.subr.bf16.mxu0 0
      %293 = vmatpush1.bf16.msra.mxu0 0
      %294 = vmatprep.subr.bf16.mxu0 0
      %295 = vmatpush1.bf16.msra.mxu0 0
      %296 = vmatprep.subr.bf16.mxu0 0
      %297 = vmatpush1.bf16.msra.mxu0 0
      %298 = vmatprep.subr.bf16.mxu0 0
      %299 = vmatpush1.bf16.msra.mxu0 0
      %300 = vmatprep.subr.bf16.mxu0 0
      %301 = vmatpush1.bf16.msra.mxu0 0
      %302 = vmatprep.subr.bf16.mxu0 0
      %303 = vmatpush1.bf16.msra.mxu0 0
      %304 = vmatprep.subr.bf16.mxu0 0
      %305 = vmatpush1.bf16.msra.mxu0 0
      %306 = vmatprep.subr.bf16.mxu0 0
      %307 = vmatpush1.bf16.msra.mxu0 0
      %308 = vmatprep.subr.bf16.mxu0 0
      %309 = vmatpush1.bf16.msra.mxu0 0
      %310 = vmatprep.subr.bf16.mxu0 0
      %311 = vmatpush1.bf16.msra.mxu0 0
      %312 = vmatprep.subr.bf16.mxu0 0
      %313 = vmatpush1.bf16.msra.mxu0 0
      %314 = vmatprep.subr.bf16.mxu0 0
      %315 = vmatpush1.bf16.msra.mxu0 0
      %316 = vmatprep.subr.bf16.mxu0 0
      %317 = vmatpush1.bf16.msra.mxu0 0
      %318 = vmatprep.subr.bf16.mxu0 0
      %319 = vmatpush1.bf16.msra.mxu0 0
      %320 = vmatprep.mubr.bf16.mxu0 0
      %321 = vmatmul.mubr.bf16.gmra.mrb[0].mxu0 %v283
      %v322 = vpop.f32.mrb[0].mxu0
      %v323 = vadd.f32 0.0, %v322
      %v324 = vpop.f32.mrb[0].mxu0
      %v325 = vpop.f32.mrb[0].mxu0
      %v326 = vadd.f32 0.0, %v325
      %v327 = vpop.f32.mrb[0].mxu0
      %328 = vdwg.mxu0
      %v329 = vadd.f32 %v271, %v323
      %v330 = vadd.f32 %v274, %v326
      %v331 = vld [vmem:[%s2] sm:$0x1]
      %v333 = vlaneseq
      %v334 = vshrl.u32 %v333, 7
      %v335 = vsub.s32 0, %v334
      %v336 = vrot.slane %v331, %v335
      %v338 = vadd.f32 %v329, %v336
      %v339 = vadd.f32 %v330, %v336
      %v340 = vmul.f32 %v338, %v338
      %v341 = vmul.f32 %v339, %v339
      %v342 = vmul.f32 %v338, %v340
      %v343 = vmul.f32 %v339, %v341
      %v344 = vmul.f32 %v342, 0.044715
      %v345 = vmul.f32 %v343, 0.044715
      %v346 = vadd.f32 %v338, %v344
      %v347 = vadd.f32 %v339, %v345
      %v348 = vmul.f32 %v346, 0.7978846
      %v349 = vmul.f32 %v347, 0.7978846
      %v350 = vtanh.pop %v348
      %v351 = vtanh.pop %v349
      %v352 = vadd.f32 %v350, 1.0
      %v353 = vadd.f32 %v351, 1.0
      %v354 = vmul.f32 %v352, 0.5
      %v355 = vmul.f32 %v353, 0.5
      %v356 = vmul.f32 %v338, %v354
      %v357 = vmul.f32 %v339, %v355
      %vm358 = vcmask 261120
      %359 = vst.msk [vmem:[%s170] sm:$0xff] %vm358, %v356
      %360 = vst.msk [vmem:[%s170 + $0x8] sm:$0xff] %vm358, %v357
      %p361 = scmp.lt.s32.totalorder %s14, 1
      %s362 = scalar_select %p361, %s14, 1
      %s363 = smul.addr %s362, 2
      %s364 = smul.addr %s363, 8
      %s365 = scalar_lea.vmem %s3, %s364
      // Predicated region
      $region33: #{classifier_forward.12} parent=31 // pred_check
        %p366 = pneg %p100
      $region34: #{classifier_forward.12} parent=31 // pred_check_branch
        %368 = sbr.rel (%p366) target = $region36
      $region35: #{classifier_forward.12} parent=31 // pred_region
        _
      $region36: #{classifier_forward.12} parent=31 // pred_fallthru
        _
    $region32: #{classifier_forward.12} parent=5 // pred_fallthru
      _
    %p369 = scmp.le.s32.totalorder 2, %s9
    // Predicated region
    $region37: #{classifier_forward.12} parent=5 // pred_check
      %p370 = pneg %p369
    $region38: #{classifier_forward.12} parent=5 // pred_check_branch
      %372 = sbr.rel (%p370) target = $region40
    $region39: #{classifier_forward.12} parent=5 // pred_region
      %s373 = ssub.s32 %s9, 2
      // Predicated region
      $region41: #{classifier_forward.12} parent=39 // pred_check
        %p374 = pneg %p106
      $region42: #{classifier_forward.12} parent=39 // pred_check_branch
        %376 = sbr.rel (%p374) target = $region44
      $region43: #{classifier_forward.12} parent=39 // pred_region
        %p377 = scmp.lt.s32.totalorder %s15, 1
        %s378 = scalar_select %p377, %s15, 1
        %s379 = smul.addr %s378, 2
        %s380 = smul.addr %s379, 8
        %s381 = scalar_lea.vmem %s3, %s380
      $region44: #{classifier_forward.12} parent=39 // pred_fallthru
        _
    $region40: #{classifier_forward.12} parent=5 // pred_fallthru
      _
  $region6: #{classifier_forward.12} parent=0 // loop_footer
    %s13 = sadd.s32 1, %s9
  $region7: #{classifier_forward.12} parent=0 // loop_footer_branch
    %8 = sbr.rel target = $region3
  $region8: #{classifier_forward.12} parent=0 // loop_exit
    _

// kernel: classifier_forward.13
$region0: #{classifier_forward.13}
  #allocation0 [shape = 'u32[]', space=smem, size = 0x4, offset = 0x4, fixed_abs, tag = 'smem constant byte address 0x4 - core index']
  #allocation1 [shape = 'u32[144,128]{1,0:T(1,128)}', space=vmem, size = 0x12000, scoped, tag = 'internal scratch']
  %s0 = inlined_call_operand.vmem [shape: f32[2,9,64], index: 0, kind: input, shape index: {}]
  %s1 = inlined_call_operand.vmem [shape: bf16[64,32], index: 1, kind: input, shape index: {}]
  %s2 = inlined_call_operand.vmem [shape: bf16[32,32], index: 2, kind: input, shape index: {}]
  %s3 = inlined_call_operand.vmem [shape: f32[1,32], index: 3, kind: input, shape index: {}]
  %s4 = inlined_call_operand.vmem [shape: f32[8,32], index: 4, kind: input, shape index: {}]
  %s5 = inlined_call_operand.vmem [shape: f32[2,8,32], index: 5, kind: output, shape index: {}]
  %s6 = sld [smem:[#allocation0]]
  $region53: #{classifier_forward.13} parent=0
    _
  %s8 = ssub.s32 1, %s6
  %s9 = scalar_select 0, %s8, %s6
  loop: start=0, step=1, limit=4
  $region2: #{classifier_forward.13} parent=0 // loop_pre_header
    _
  $region3: #{classifier_forward.13} parent=0 // loop_header
    %s11 = sphi 0, %s15
    %p12 = scmp.ge.s32.totalorder %s11, 4
    %s21 = sphi 0, %s23
    %s24 = sphi 0, %s21
    %s25 = sphi 0, %s24
    %s41 = sphi 0, %s25
    %s45 = sphi 0, %s45
    %s47 = sphi 0, %s45
    %s48 = sphi 0, %s47
    %s62 = sphi 0, %s48
    %s66 = sphi 0, %s66
    %s68 = sphi 0, %s66
    %s69 = sphi 0, %s68
    %s83 = sphi 0, %s69
    %s87 = sphi 0, %s87
    %s89 = sphi 0, %s87
    %s90 = sphi 0, %s89
    %s104 = sphi 0, %s90
    %s108 = sphi 0, %s108
    %s110 = sphi 0, %s108
    %s111 = sphi 0, %s110
    %s125 = sphi 0, %s111
    %s131 = sphi 0, %s133
    %s134 = sphi 0, %s131
    %s135 = sphi 0, %s134
    %s151 = sphi 0, %s135
  $region4: #{classifier_forward.13} parent=0 // loop_header_branch
    %14 = sbr.rel (%p12) target = $region8
  $region5: #{classifier_forward.13} parent=0 // loop_body
    %s16 = ssub.s32 %s11, 1
    %s17 = ssub.s32 %s11, 2
    %s18 = sadd.s32 %s11, 1
    %s19 = ssub.s32 %s11, %s18
    %p20 = scmp.eq.s32.totalorder %s19, 0
    %s22 = sadd.s32 %s21, 1
    %s23 = scalar_select %p20, %s21, %s22
    %p26 = pneg %p20
    %p27 = scmp.eq.s32.totalorder %s11, 1
    %p28 = por %p26, %p27
    %p29 = scmp.ne.s32.totalorder %s21, %s24
    %p30 = scmp.eq.s32.totalorder %s11, 0
    %p31 = por %p29, %p30
    %p32 = scmp.ne.s32.totalorder %s21, %s24
    %p33 = scmp.eq.s32.totalorder %s16, 1
    %p34 = por %p32, %p33
    %p35 = scmp.ne.s32.totalorder %s24, %s25
    %p36 = scmp.eq.s32.totalorder %s16, 0
    %p37 = por %p35, %p36
    %p38 = scmp.ne.s32.totalorder %s24, %s25
    %p39 = scmp.eq.s32.totalorder %s17, 1
    %p40 = por %p38, %p39
    %p42 = scmp.ne.s32.totalorder %s25, %s41
    %p43 = scmp.eq.s32.totalorder %s17, 0
    %p44 = por %p42, %p43
    %s46 = sadd.s32 %s45, 1
    %p49 = scmp.eq.s32.totalorder %s11, 1
    %p50 = scmp.ne.s32.totalorder %s45, %s47
    %p51 = scmp.eq.s32.totalorder %s11, 0
    %p52 = por %p50, %p51
    %p53 = scmp.ne.s32.totalorder %s45, %s47
    %p54 = scmp.eq.s32.totalorder %s16, 1
    %p55 = por %p53, %p54
    %p56 = scmp.ne.s32.totalorder %s47, %s48
    %p57 = scmp.eq.s32.totalorder %s16, 0
    %p58 = por %p56, %p57
    %p59 = scmp.ne.s32.totalorder %s47, %s48
    %p60 = scmp.eq.s32.totalorder %s17, 1
    %p61 = por %p59, %p60
    %p63 = scmp.ne.s32.totalorder %s48, %s62
    %p64 = scmp.eq.s32.totalorder %s17, 0
    %p65 = por %p63, %p64
    %s67 = sadd.s32 %s66, 1
    %p70 = scmp.eq.s32.totalorder %s11, 1
    %p71 = scmp.ne.s32.totalorder %s66, %s68
    %p72 = scmp.eq.s32.totalorder %s11, 0
    %p73 = por %p71, %p72
    %p74 = scmp.ne.s32.totalorder %s66, %s68
    %p75 = scmp.eq.s32.totalorder %s16, 1
    %p76 = por %p74, %p75
    %p77 = scmp.ne.s32.totalorder %s68, %s69
    %p78 = scmp.eq.s32.totalorder %s16, 0
    %p79 = por %p77, %p78
    %p80 = scmp.ne.s32.totalorder %s68, %s69
    %p81 = scmp.eq.s32.totalorder %s17, 1
    %p82 = por %p80, %p81
    %p84 = scmp.ne.s32.totalorder %s69, %s83
    %p85 = scmp.eq.s32.totalorder %s17, 0
    %p86 = por %p84, %p85
    %s88 = sadd.s32 %s87, 1
    %p91 = scmp.eq.s32.totalorder %s11, 1
    %p92 = scmp.ne.s32.totalorder %s87, %s89
    %p93 = scmp.eq.s32.totalorder %s11, 0
    %p94 = por %p92, %p93
    %p95 = scmp.ne.s32.totalorder %s87, %s89
    %p96 = scmp.eq.s32.totalorder %s16, 1
    %p97 = por %p95, %p96
    %p98 = scmp.ne.s32.totalorder %s89, %s90
    %p99 = scmp.eq.s32.totalorder %s16, 0
    %p100 = por %p98, %p99
    %p101 = scmp.ne.s32.totalorder %s89, %s90
    %p102 = scmp.eq.s32.totalorder %s17, 1
    %p103 = por %p101, %p102
    %p105 = scmp.ne.s32.totalorder %s90, %s104
    %p106 = scmp.eq.s32.totalorder %s17, 0
    %p107 = por %p105, %p106
    %s109 = sadd.s32 %s108, 1
    %p112 = scmp.eq.s32.totalorder %s11, 1
    %p113 = scmp.ne.s32.totalorder %s108, %s110
    %p114 = scmp.eq.s32.totalorder %s11, 0
    %p115 = por %p113, %p114
    %p116 = scmp.ne.s32.totalorder %s108, %s110
    %p117 = scmp.eq.s32.totalorder %s16, 1
    %p118 = por %p116, %p117
    %p119 = scmp.ne.s32.totalorder %s110, %s111
    %p120 = scmp.eq.s32.totalorder %s16, 0
    %p121 = por %p119, %p120
    %p122 = scmp.ne.s32.totalorder %s110, %s111
    %p123 = scmp.eq.s32.totalorder %s17, 1
    %p124 = por %p122, %p123
    %p126 = scmp.ne.s32.totalorder %s111, %s125
    %p127 = scmp.eq.s32.totalorder %s17, 0
    %p128 = por %p126, %p127
    %s129 = ssub.s32 %s11, %s18
    %p130 = scmp.eq.s32.totalorder %s129, 0
    %s132 = sadd.s32 %s131, 1
    %s133 = scalar_select %p130, %s131, %s132
    %p136 = pneg %p130
    %p137 = scmp.eq.s32.totalorder %s11, 1
    %p138 = por %p136, %p137
    %p139 = scmp.ne.s32.totalorder %s131, %s134
    %p140 = scmp.eq.s32.totalorder %s11, 0
    %p141 = por %p139, %p140
    %p142 = scmp.ne.s32.totalorder %s131, %s134
    %p143 = scmp.eq.s32.totalorder %s16, 1
    %p144 = por %p142, %p143
    %p145 = scmp.ne.s32.totalorder %s134, %s135
    %p146 = scmp.eq.s32.totalorder %s16, 0
    %p147 = por %p145, %p146
    %p148 = scmp.ne.s32.totalorder %s134, %s135
    %p149 = scmp.eq.s32.totalorder %s17, 1
    %p150 = por %p148, %p149
    %p152 = scmp.ne.s32.totalorder %s135, %s151
    %p153 = scmp.eq.s32.totalorder %s17, 0
    %p154 = por %p152, %p153
    %p155 = scmp.le.s32.totalorder 1, %s11
    %p156 = scmp.lt.s32.totalorder %s11, 3
    %p157 = pnand %p155, %p156
    %p158 = pneg %p157
    // Predicated region
    $region9: #{classifier_forward.13} parent=5 // pred_check
      _
    $region10: #{classifier_forward.13} parent=5 // pred_check_branch
      %160 = sbr.rel (%p157) target = $region12
    $region11: #{classifier_forward.13} parent=5 // pred_region
      %s161 = ssub.s32 %s11, 1
      // Predicated region
      $region13: #{classifier_forward.13} parent=11 // pred_check
        %p162 = pneg %p58
      $region14: #{classifier_forward.13} parent=11 // pred_check_branch
        %164 = sbr.rel (%p162) target = $region16
      $region15: #{classifier_forward.13} parent=11 // pred_region
        _
      $region16: #{classifier_forward.13} parent=11 // pred_fallthru
        _
      // Predicated region
      $region17: #{classifier_forward.13} parent=11 // pred_check
        %p165 = pneg %p79
      $region18: #{classifier_forward.13} parent=11 // pred_check_branch
        %167 = sbr.rel (%p165) target = $region20
      $region19: #{classifier_forward.13} parent=11 // pred_region
        _
      $region20: #{classifier_forward.13} parent=11 // pred_fallthru
        _
      // Predicated region
      $region21: #{classifier_forward.13} parent=11 // pred_check
        %p168 = pneg %p100
      $region22: #{classifier_forward.13} parent=11 // pred_check_branch
        %170 = sbr.rel (%p168) target = $region24
      $region23: #{classifier_forward.13} parent=11 // pred_region
        _
      $region24: #{classifier_forward.13} parent=11 // pred_fallthru
        _
      // Predicated region
      $region25: #{classifier_forward.13} parent=11 // pred_check
        %p171 = pneg %p121
      $region26: #{classifier_forward.13} parent=11 // pred_check_branch
        %173 = sbr.rel (%p171) target = $region28
      $region27: #{classifier_forward.13} parent=11 // pred_region
        _
      $region28: #{classifier_forward.13} parent=11 // pred_fallthru
        _
    $region12: #{classifier_forward.13} parent=5 // pred_fallthru
      _
    %p174 = scmp.lt.s32.totalorder %s11, 2
    // Predicated region
    $region29: #{classifier_forward.13} parent=5 // pred_check
      %p175 = pneg %p174
    $region30: #{classifier_forward.13} parent=5 // pred_check_branch
      %177 = sbr.rel (%p175) target = $region32
    $region31: #{classifier_forward.13} parent=5 // pred_region
      // Predicated region
      $region33: #{classifier_forward.13} parent=31 // pred_check
        %p178 = pneg %p31
      $region34: #{classifier_forward.13} parent=31 // pred_check_branch
        %180 = sbr.rel (%p178) target = $region36
      $region35: #{classifier_forward.13} parent=31 // pred_region
        %p181 = scmp.lt.s32.totalorder %s11, 1
        %s182 = scalar_select %p181, %s11, 1
        %s183 = smul.addr %s182, 2
        %s184 = smul.addr %s183, 8
        %s185 = scalar_lea.vmem %s0, %s184
      $region36: #{classifier_forward.13} parent=31 // pred_fallthru
        _
    $region32: #{classifier_forward.13} parent=5 // pred_fallthru
      _
    %p186 = scmp.le.s32.totalorder 1, %s11
    %p187 = scmp.lt.s32.totalorder %s11, 3
    %p188 = pnand %p186, %p187
    %p189 = pneg %p188
    // Predicated region
    $region37: #{classifier_forward.13} parent=5 // pred_check
      _
    $region38: #{classifier_forward.13} parent=5 // pred_check_branch
      %191 = sbr.rel (%p188) target = $region40
    $region39: #{classifier_forward.13} parent=5 // pred_region
      %s192 = ssub.s32 %s11, 1
      %p193 = scmp.lt.s32.totalorder %s16, 1
      %s194 = scalar_select %p193, %s16, 1
      %s195 = smul.addr %s194, 2
      %s196 = smul.addr %s195, 8
      %s197 = scalar_lea.vmem %s0, %s196
      %p198 = pneg %p37
      %p199 = pneg %p34
      %p200 = pneg %p58
      %p201 = pneg %p55
      %p202 = pneg %p79
      %p203 = pneg %p76
      %p204 = pneg %p100
      %p205 = pneg %p97
      %p206 = pneg %p121
      %p207 = pneg %p118
      %p208 = pneg %p147
      %p209 = pneg %p144
      %p210 = scmp.lt.s32.totalorder %s16, 1
      %s211 = scalar_select %p210, %s16, 1
      %s212 = smul.addr %s211, 8
      %s213 = scalar_lea.vmem %s5, %s212
      %p214 = scmp.lt.s32.totalorder %s16, 1
      %s215 = scalar_select %p214, %s16, 1
      %s216 = smul.addr %s215, 2
      %s217 = smul.addr %s216, 8
      %s218 = scalar_lea.vmem %s0, %s217
      %p219 = scmp.lt.s32.totalorder %s16, 1
      %s220 = scalar_select %p219, %s16, 1
      %s221 = smul.addr %s220, 8
      %s222 = scalar_lea.vmem %s5, %s221
      %v224 = vld [vmem:[%s218] sm:$0xff]
      %v225 = vpack.c.bf16 %v224, %v224
      %v226 = vld [vmem:[%s1] sm:$0xf]
      %v227 = vld [vmem:[%s1 + $0x4] sm:$0xf]
      %v228 = vld [vmem:[%s1 + $0x8] sm:$0xf]
      %v229 = vld [vmem:[%s1 + $0xc] sm:$0xf]
      %v230 = vld [vmem:[%s1 + $0x10] sm:$0xf]
      %v231 = vld [vmem:[%s1 + $0x14] sm:$0xf]
      %v232 = vld [vmem:[%s1 + $0x18] sm:$0xf]
      %v233 = vld [vmem:[%s1 + $0x1c] sm:$0xf]
      %v234 = vld [vmem:[%s218 + $0x1] sm:$0xff]
      %v235 = vpack.c.bf16 %v234, %v234
      %v236 = vld [vmem:[%s2] sm:$0xf]
      %v237 = vld [vmem:[%s2 + $0x4] sm:$0xf]
      %v238 = vld [vmem:[%s2 + $0x8] sm:$0xf]
      %v239 = vld [vmem:[%s2 + $0xc] sm:$0xf]
      %v244 = vunpack.c.l.b16 %v236
      %v245 = vunpack.c.l.b16 %v237
      %v246 = vunpack.c.l.b16 %v238
      %v247 = vunpack.c.l.b16 %v239
      %v248 = vpack.c.b16 %v245, %v244
      %v249 = vpack.c.b16 %v247, %v246
      %vm252 = vcmask 261120
      %v254 = vsel %vm252, %v235, 0
      %256 = vmatprep.subr.bf16.mxu0 0
      %257 = vmatpush1.bf16.msra.mxu0 %v248
      %258 = vmatprep.subr.bf16.mxu0 0
      %259 = vmatpush1.bf16.msra.mxu0 %v249
      %260 = vmatprep.subr.bf16.mxu0 0
      %261 = vmatpush1.bf16.msra.mxu0 0
      %262 = vmatprep.subr.bf16.mxu0 0
      %263 = vmatpush1.bf16.msra.mxu0 0
      %264 = vmatprep.subr.bf16.mxu0 0
      %265 = vmatpush1.bf16.msra.mxu0 0
      %266 = vmatprep.subr.bf16.mxu0 0
      %267 = vmatpush1.bf16.msra.mxu0 0
      %268 = vmatprep.subr.bf16.mxu0 0
      %269 = vmatpush1.bf16.msra.mxu0 0
      %270 = vmatprep.subr.bf16.mxu0 0
      %271 = vmatpush1.bf16.msra.mxu0 0
      %272 = vmatprep.subr.bf16.mxu0 0
      %273 = vmatpush1.bf16.msra.mxu0 0
      %274 = vmatprep.subr.bf16.mxu0 0
      %275 = vmatpush1.bf16.msra.mxu0 0
      %276 = vmatprep.subr.bf16.mxu0 0
      %277 = vmatpush1.bf16.msra.mxu0 0
      %278 = vmatprep.subr.bf16.mxu0 0
      %279 = vmatpush1.bf16.msra.mxu0 0
      %280 = vmatprep.subr.bf16.mxu0 0
      %281 = vmatpush1.bf16.msra.mxu0 0
      %282 = vmatprep.subr.bf16.mxu0 0
      %283 = vmatpush1.bf16.msra.mxu0 0
      %284 = vmatprep.subr.bf16.mxu0 0
      %285 = vmatpush1.bf16.msra.mxu0 0
      %286 = vmatprep.subr.bf16.mxu0 0
      %287 = vmatpush1.bf16.msra.mxu0 0
      %288 = vmatprep.mubr.bf16.mxu0 0
      %289 = vmatmul.mubr.bf16.gmra.mrb[0].mxu0 %v254
      %v290 = vpop.f32.mrb[0].mxu0
      %v291 = vadd.f32 0.0, %v290
      %v292 = vpop.f32.mrb[0].mxu0
      %v293 = vpop.f32.mrb[0].mxu0
      %v294 = vpop.f32.mrb[0].mxu0
      %295 = vdwg.mxu0
      %v304 = vunpack.c.l.b16 %v226
      %v305 = vunpack.c.l.b16 %v227
      %v306 = vunpack.c.l.b16 %v228
      %v307 = vunpack.c.l.b16 %v229
      %v308 = vunpack.c.l.b16 %v230
      %v309 = vunpack.c.l.b16 %v231
      %v310 = vunpack.c.l.b16 %v232
      %v311 = vunpack.c.l.b16 %v233
      %v312 = vpack.c.b16 %v305, %v304
      %v313 = vpack.c.b16 %v307, %v306
      %v314 = vpack.c.b16 %v309, %v308
      %v315 = vpack.c.b16 %v311, %v310
      %vm320 = vcmask 523264
      %v322 = vsel %vm320, %v225, 0
      %324 = vmatprep.subr.bf16.mxu0 0
      %325 = vmatpush1.bf16.msra.mxu0 %v312
      %326 = vmatprep.subr.bf16.mxu0 0
      %327 = vmatpush1.bf16.msra.mxu0 %v313
      %328 = vmatprep.subr.bf16.mxu0 0
      %329 = vmatpush1.bf16.msra.mxu0 %v314
      %330 = vmatprep.subr.bf16.mxu0 0
      %331 = vmatpush1.bf16.msra.mxu0 %v315
      %332 = vmatprep.subr.bf16.mxu0 0
      %333 = vmatpush1.bf16.msra.mxu0 0
      %334 = vmatprep.subr.bf16.mxu0 0
      %335 = vmatpush1.bf16.msra.mxu0 0
      %336 = vmatprep.subr.bf16.mxu0 0
      %337 = vmatpush1.bf16.msra.mxu0 0
      %338 = vmatprep.subr.bf16.mxu0 0
      %339 = vmatpush1.bf16.msra.mxu0 0
      %340 = vmatprep.subr.bf16.mxu0 0
      %341 = vmatpush1.bf16.msra.mxu0 0
      %342 = vmatprep.subr.bf16.mxu0 0
      %343 = vmatpush1.bf16.msra.mxu0 0
      %344 = vmatprep.subr.bf16.mxu0 0
      %345 = vmatpush1.bf16.msra.mxu0 0
      %346 = vmatprep.subr.bf16.mxu0 0
      %347 = vmatpush1.bf16.msra.mxu0 0
      %348 = vmatprep.subr.bf16.mxu0 0
      %349 = vmatpush1.bf16.msra.mxu0 0
      %350 = vmatprep.subr.bf16.mxu0 0
      %351 = vmatpush1.bf16.msra.mxu0 0
      %352 = vmatprep.subr.bf16.mxu0 0
      %353 = vmatpush1.bf16.msra.mxu0 0
      %354 = vmatprep.subr.bf16.mxu0 0
      %355 = vmatpush1.bf16.msra.mxu0 0
      %356 = vmatprep.mubr.bf16.mxu0 0
      %357 = vmatmul.mubr.bf16.gmra.mrb[0].mxu0 %v322
      %v358 = vpop.f32.mrb[0].mxu0
      %v359 = vadd.f32 %v291, %v358
      %v360 = vpop.f32.mrb[0].mxu0
      %v361 = vpop.f32.mrb[0].mxu0
      %v362 = vpop.f32.mrb[0].mxu0
      %363 = vdwg.mxu0
      %v364 = vld [vmem:[%s3] sm:$0x1]
      %v366 = vlaneseq
      %v367 = vshrl.u32 %v366, 7
      %v368 = vsub.s32 0, %v367
      %v369 = vrot.slane %v364, %v368
      %v371 = vadd.f32 %v359, %v369
      %v372 = vmul.f32 %v371, %v371
      %v373 = vmul.f32 %v371, %v372
      %v374 = vmul.f32 %v373, 0.044715
      %v375 = vadd.f32 %v371, %v374
      %v376 = vmul.f32 %v375, 0.7978846
      %v377 = vtanh.pop %v376
      %v378 = vadd.f32 %v377, 1.0
      %v379 = vmul.f32 %v378, 0.5
      %v380 = vmul.f32 %v371, %v379
      %v381 = vld [vmem:[%s4] sm:$0xff]
      %v382 = vadd.f32 %v380, %v381
      %383 = vst.msk [vmem:[%s222] sm:$0xff] %vm252, %v382
      %p384 = scmp.lt.s32.totalorder %s16, 1
      %s385 = scalar_select %p384, %s16, 1
      %s386 = smul.addr %s385, 8
      %s387 = scalar_lea.vmem %s5, %s386
      // Predicated region
      $region41: #{classifier_forward.13} parent=39 // pred_check
        %p388 = pneg %p144
      $region42: #{classifier_forward.13} parent=39 // pred_check_branch
        %390 = sbr.rel (%p388) target = $region44
      $region43: #{classifier_forward.13} parent=39 // pred_region
        _
      $region44: #{classifier_forward.13} parent=39 // pred_fallthru
        _
    $region40: #{classifier_forward.13} parent=5 // pred_fallthru
      _
    %p391 = scmp.le.s32.totalorder 2, %s11
    // Predicated region
    $region45: #{classifier_forward.13} parent=5 // pred_check
      %p392 = pneg %p391
    $region46: #{classifier_forward.13} parent=5 // pred_check_branch
      %394 = sbr.rel (%p392) target = $region48
    $region47: #{classifier_forward.13} parent=5 // pred_region
      %s395 = ssub.s32 %s11, 2
      // Predicated region
      $region49: #{classifier_forward.13} parent=47 // pred_check
        %p396 = pneg %p150
      $region50: #{classifier_forward.13} parent=47 // pred_check_branch
        %398 = sbr.rel (%p396) target = $region52
      $region51: #{classifier_forward.13} parent=47 // pred_region
        %p399 = scmp.lt.s32.totalorder %s17, 1
        %s400 = scalar_select %p399, %s17, 1
        %s401 = smul.addr %s400, 8
        %s402 = scalar_lea.vmem %s5, %s401
      $region52: #{classifier_forward.13} parent=47 // pred_fallthru
        _
    $region48: #{classifier_forward.13} parent=5 // pred_fallthru
      _
  $region6: #{classifier_forward.13} parent=0 // loop_footer
    %s15 = sadd.s32 1, %s11
  $region7: #{classifier_forward.13} parent=0 // loop_footer_branch
    %10 = sbr.rel target = $region3
  $region8: #{classifier_forward.13} parent=0 // loop_exit
    _

// kernel: classifier_forward.15
$region0: #{classifier_forward.15}
  #allocation0 [shape = 'u32[]', space=smem, size = 0x4, offset = 0x4, fixed_abs, tag = 'smem constant byte address 0x4 - core index']
  #allocation1 [shape = 'u32[144,128]{1,0:T(1,128)}', space=vmem, size = 0x12000, scoped, tag = 'internal scratch']
  %s0 = inlined_call_operand.vmem [shape: f32[2,8,96], index: 0, kind: input, shape index: {}]
  %s1 = inlined_call_operand.vmem [shape: f32[2,8,32], index: 1, kind: input, shape index: {}]
  %s2 = inlined_call_operand.vmem [shape: bf16[32,32], index: 2, kind: input, shape index: {}]
  %s3 = inlined_call_operand.vmem [shape: f32[1,32], index: 3, kind: input, shape index: {}]
  %s4 = inlined_call_operand.vmem [shape: f32[2,8,32], index: 4, kind: output, shape index: {}]
  %s5 = sld [smem:[#allocation0]]
  $region49: #{classifier_forward.15} parent=0
    _
  %s7 = ssub.s32 1, %s5
  %s8 = scalar_select 0, %s7, %s5
  loop: start=0, step=1, limit=4
  $region2: #{classifier_forward.15} parent=0 // loop_pre_header
    _
  $region3: #{classifier_forward.15} parent=0 // loop_header
    %s10 = sphi 0, %s14
    %p11 = scmp.ge.s32.totalorder %s10, 4
    %s20 = sphi 0, %s22
    %s23 = sphi 0, %s20
    %s24 = sphi 0, %s23
    %s40 = sphi 0, %s24
    %s46 = sphi 0, %s48
    %s49 = sphi 0, %s46
    %s50 = sphi 0, %s49
    %s66 = sphi 0, %s50
    %s70 = sphi 0, %s70
    %s72 = sphi 0, %s70
    %s73 = sphi 0, %s72
    %s87 = sphi 0, %s73
    %s91 = sphi 0, %s91
    %s93 = sphi 0, %s91
    %s94 = sphi 0, %s93
    %s108 = sphi 0, %s94
    %s114 = sphi 0, %s116
    %s117 = sphi 0, %s114
    %s118 = sphi 0, %s117
    %s134 = sphi 0, %s118
  $region4: #{classifier_forward.15} parent=0 // loop_header_branch
    %13 = sbr.rel (%p11) target = $region8
  $region5: #{classifier_forward.15} parent=0 // loop_body
    %s15 = ssub.s32 %s10, 1
    %s16 = ssub.s32 %s10, 2
    %s17 = sadd.s32 %s10, 1
    %s18 = ssub.s32 %s10, %s17
    %p19 = scmp.eq.s32.totalorder %s18, 0
    %s21 = sadd.s32 %s20, 1
    %s22 = scalar_select %p19, %s20, %s21
    %p25 = pneg %p19
    %p26 = scmp.eq.s32.totalorder %s10, 1
    %p27 = por %p25, %p26
    %p28 = scmp.ne.s32.totalorder %s20, %s23
    %p29 = scmp.eq.s32.totalorder %s10, 0
    %p30 = por %p28, %p29
    %p31 = scmp.ne.s32.totalorder %s20, %s23
    %p32 = scmp.eq.s32.totalorder %s15, 1
    %p33 = por %p31, %p32
    %p34 = scmp.ne.s32.totalorder %s23, %s24
    %p35 = scmp.eq.s32.totalorder %s15, 0
    %p36 = por %p34, %p35
    %p37 = scmp.ne.s32.totalorder %s23, %s24
    %p38 = scmp.eq.s32.totalorder %s16, 1
    %p39 = por %p37, %p38
    %p41 = scmp.ne.s32.totalorder %s24, %s40
    %p42 = scmp.eq.s32.totalorder %s16, 0
    %p43 = por %p41, %p42
    %s44 = ssub.s32 %s10, %s17
    %p45 = scmp.eq.s32.totalorder %s44, 0
    %s47 = sadd.s32 %s46, 1
    %s48 = scalar_select %p45, %s46, %s47
    %p51 = pneg %p45
    %p52 = scmp.eq.s32.totalorder %s10, 1
    %p53 = por %p51, %p52
    %p54 = scmp.ne.s32.totalorder %s46, %s49
    %p55 = scmp.eq.s32.totalorder %s10, 0
    %p56 = por %p54, %p55
    %p57 = scmp.ne.s32.totalorder %s46, %s49
    %p58 = scmp.eq.s32.totalorder %s15, 1
    %p59 = por %p57, %p58
    %p60 = scmp.ne.s32.totalorder %s49, %s50
    %p61 = scmp.eq.s32.totalorder %s15, 0
    %p62 = por %p60, %p61
    %p63 = scmp.ne.s32.totalorder %s49, %s50
    %p64 = scmp.eq.s32.totalorder %s16, 1
    %p65 = por %p63, %p64
    %p67 = scmp.ne.s32.totalorder %s50, %s66
    %p68 = scmp.eq.s32.totalorder %s16, 0
    %p69 = por %p67, %p68
    %s71 = sadd.s32 %s70, 1
    %p74 = scmp.eq.s32.totalorder %s10, 1
    %p75 = scmp.ne.s32.totalorder %s70, %s72
    %p76 = scmp.eq.s32.totalorder %s10, 0
    %p77 = por %p75, %p76
    %p78 = scmp.ne.s32.totalorder %s70, %s72
    %p79 = scmp.eq.s32.totalorder %s15, 1
    %p80 = por %p78, %p79
    %p81 = scmp.ne.s32.totalorder %s72, %s73
    %p82 = scmp.eq.s32.totalorder %s15, 0
    %p83 = por %p81, %p82
    %p84 = scmp.ne.s32.totalorder %s72, %s73
    %p85 = scmp.eq.s32.totalorder %s16, 1
    %p86 = por %p84, %p85
    %p88 = scmp.ne.s32.totalorder %s73, %s87
    %p89 = scmp.eq.s32.totalorder %s16, 0
    %p90 = por %p88, %p89
    %s92 = sadd.s32 %s91, 1
    %p95 = scmp.eq.s32.totalorder %s10, 1
    %p96 = scmp.ne.s32.totalorder %s91, %s93
    %p97 = scmp.eq.s32.totalorder %s10, 0
    %p98 = por %p96, %p97
    %p99 = scmp.ne.s32.totalorder %s91, %s93
    %p100 = scmp.eq.s32.totalorder %s15, 1
    %p101 = por %p99, %p100
    %p102 = scmp.ne.s32.totalorder %s93, %s94
    %p103 = scmp.eq.s32.totalorder %s15, 0
    %p104 = por %p102, %p103
    %p105 = scmp.ne.s32.totalorder %s93, %s94
    %p106 = scmp.eq.s32.totalorder %s16, 1
    %p107 = por %p105, %p106
    %p109 = scmp.ne.s32.totalorder %s94, %s108
    %p110 = scmp.eq.s32.totalorder %s16, 0
    %p111 = por %p109, %p110
    %s112 = ssub.s32 %s10, %s17
    %p113 = scmp.eq.s32.totalorder %s112, 0
    %s115 = sadd.s32 %s114, 1
    %s116 = scalar_select %p113, %s114, %s115
    %p119 = pneg %p113
    %p120 = scmp.eq.s32.totalorder %s10, 1
    %p121 = por %p119, %p120
    %p122 = scmp.ne.s32.totalorder %s114, %s117
    %p123 = scmp.eq.s32.totalorder %s10, 0
    %p124 = por %p122, %p123
    %p125 = scmp.ne.s32.totalorder %s114, %s117
    %p126 = scmp.eq.s32.totalorder %s15, 1
    %p127 = por %p125, %p126
    %p128 = scmp.ne.s32.totalorder %s117, %s118
    %p129 = scmp.eq.s32.totalorder %s15, 0
    %p130 = por %p128, %p129
    %p131 = scmp.ne.s32.totalorder %s117, %s118
    %p132 = scmp.eq.s32.totalorder %s16, 1
    %p133 = por %p131, %p132
    %p135 = scmp.ne.s32.totalorder %s118, %s134
    %p136 = scmp.eq.s32.totalorder %s16, 0
    %p137 = por %p135, %p136
    %p138 = scmp.le.s32.totalorder 1, %s10
    %p139 = scmp.lt.s32.totalorder %s10, 3
    %p140 = pnand %p138, %p139
    %p141 = pneg %p140
    // Predicated region
    $region9: #{classifier_forward.15} parent=5 // pred_check
      _
    $region10: #{classifier_forward.15} parent=5 // pred_check_branch
      %143 = sbr.rel (%p140) target = $region12
    $region11: #{classifier_forward.15} parent=5 // pred_region
      %s144 = ssub.s32 %s10, 1
      // Predicated region
      $region13: #{classifier_forward.15} parent=11 // pred_check
        %p145 = pneg %p83
      $region14: #{classifier_forward.15} parent=11 // pred_check_branch
        %147 = sbr.rel (%p145) target = $region16
      $region15: #{classifier_forward.15} parent=11 // pred_region
        _
      $region16: #{classifier_forward.15} parent=11 // pred_fallthru
        _
      // Predicated region
      $region17: #{classifier_forward.15} parent=11 // pred_check
        %p148 = pneg %p104
      $region18: #{classifier_forward.15} parent=11 // pred_check_branch
        %150 = sbr.rel (%p148) target = $region20
      $region19: #{classifier_forward.15} parent=11 // pred_region
        _
      $region20: #{classifier_forward.15} parent=11 // pred_fallthru
        _
    $region12: #{classifier_forward.15} parent=5 // pred_fallthru
      _
    %p151 = scmp.lt.s32.totalorder %s10, 2
    // Predicated region
    $region21: #{classifier_forward.15} parent=5 // pred_check
      %p152 = pneg %p151
    $region22: #{classifier_forward.15} parent=5 // pred_check_branch
      %154 = sbr.rel (%p152) target = $region24
    $region23: #{classifier_forward.15} parent=5 // pred_region
      // Predicated region
      $region25: #{classifier_forward.15} parent=23 // pred_check
        %p155 = pneg %p30
      $region26: #{classifier_forward.15} parent=23 // pred_check_branch
        %157 = sbr.rel (%p155) target = $region28
      $region27: #{classifier_forward.15} parent=23 // pred_region
        %p158 = scmp.lt.s32.totalorder %s10, 1
        %s159 = scalar_select %p158, %s10, 1
        %s160 = smul.addr %s159, 8
        %s161 = scalar_lea.vmem %s0, %s160
      $region28: #{classifier_forward.15} parent=23 // pred_fallthru
        _
      // Predicated region
      $region29: #{classifier_forward.15} parent=23 // pred_check
        %p162 = pneg %p56
      $region30: #{classifier_forward.15} parent=23 // pred_check_branch
        %164 = sbr.rel (%p162) target = $region32
      $region31: #{classifier_forward.15} parent=23 // pred_region
        %p165 = scmp.lt.s32.totalorder %s10, 1
        %s166 = scalar_select %p165, %s10, 1
        %s167 = smul.addr %s166, 8
        %s168 = scalar_lea.vmem %s1, %s167
      $region32: #{classifier_forward.15} parent=23 // pred_fallthru
        _
    $region24: #{classifier_forward.15} parent=5 // pred_fallthru
      _
    %p169 = scmp.le.s32.totalorder 1, %s10
    %p170 = scmp.lt.s32.totalorder %s10, 3
    %p171 = pnand %p169, %p170
    %p172 = pneg %p171
    // Predicated region
    $region33: #{classifier_forward.15} parent=5 // pred_check
      _
    $region34: #{classifier_forward.15} parent=5 // pred_check_branch
      %174 = sbr.rel (%p171) target = $region36
    $region35: #{classifier_forward.15} parent=5 // pred_region
      %s175 = ssub.s32 %s10, 1
      %p176 = scmp.lt.s32.totalorder %s15, 1
      %s177 = scalar_select %p176, %s15, 1
      %s178 = smul.addr %s177, 8
      %s179 = scalar_lea.vmem %s0, %s178
      %p180 = pneg %p36
      %p181 = pneg %p33
      %p182 = scmp.lt.s32.totalorder %s15, 1
      %s183 = scalar_select %p182, %s15, 1
      %s184 = smul.addr %s183, 8
      %s185 = scalar_lea.vmem %s1, %s184
      %p186 = pneg %p62
      %p187 = pneg %p59
      %p188 = pneg %p83
      %p189 = pneg %p80
      %p190 = pneg %p104
      %p191 = pneg %p101
      %p192 = pneg %p130
      %p193 = pneg %p127
      %p194 = scmp.lt.s32.totalorder %s15, 1
      %s195 = scalar_select %p194, %s15, 1
      %s196 = smul.addr %s195, 8
      %s197 = scalar_lea.vmem %s4, %s196
      %p198 = scmp.lt.s32.totalorder %s15, 1
      %s199 = scalar_select %p198, %s15, 1
      %s200 = smul.addr %s199, 8
      %s201 = scalar_lea.vmem %s0, %s200
      %p202 = scmp.lt.s32.totalorder %s15, 1
      %s203 = scalar_select %p202, %s15, 1
      %s204 = smul.addr %s203, 8
      %s205 = scalar_lea.vmem %s1, %s204
      %p206 = scmp.lt.s32.totalorder %s15, 1
      %s207 = scalar_select %p206, %s15, 1
      %s208 = smul.addr %s207, 8
      %s209 = scalar_lea.vmem %s4, %s208
      %v211 = vld [vmem:[%s201] sm:$0xff]
      %v212 = vld [vmem:[%s205] sm:$0xff]
      %v213 = vld [vmem:[%s3] sm:$0x1]
      %v215 = vlaneseq
      %v216 = vshrl.u32 %v215, 7
      %v217 = vsub.s32 0, %v216
      %v218 = vrot.slane %v213, %v217
      %v220 = vadd.f32 %v212, %v218
      %v221 = vpack.c.bf16 %v211, %v211
      %223 = vrot.lane.b32.xlu0 %v221, 96
      %v224 = vpop.permute.xlu0 %223
      %vm225 = vcmask 130048
      %v227 = vsel %vm225, %v221, 0
      %v230 = vsel %vm225, %v224, 0
      %232 = vmatprep.subr.bf16.mxu0 0
      %233 = vmatpush1.bf16.xpose.msra.mxu0 %v230
      %234 = vmatprep.subr.bf16.mxu0 0
      %235 = vmatpush1.bf16.xpose.msra.mxu0 0
      %236 = vmatprep.subr.bf16.mxu0 0
      %237 = vmatpush1.bf16.xpose.msra.mxu0 0
      %238 = vmatprep.subr.bf16.mxu0 0
      %239 = vmatpush1.bf16.xpose.msra.mxu0 0
      %240 = vmatprep.subr.bf16.mxu0 0
      %241 = vmatpush1.bf16.xpose.msra.mxu0 0
      %242 = vmatprep.subr.bf16.mxu0 0
      %243 = vmatpush1.bf16.xpose.msra.mxu0 0
      %244 = vmatprep.subr.bf16.mxu0 0
      %245 = vmatpush1.bf16.xpose.msra.mxu0 0
      %246 = vmatprep.subr.bf16.mxu0 0
      %247 = vmatpush1.bf16.xpose.msra.mxu0 0
      %248 = vmatprep.subr.bf16.mxu0 0
      %249 = vmatpush1.bf16.xpose.msra.mxu0 0
      %250 = vmatprep.subr.bf16.mxu0 0
      %251 = vmatpush1.bf16.xpose.msra.mxu0 0
      %252 = vmatprep.subr.bf16.mxu0 0
      %253 = vmatpush1.bf16.xpose.msra.mxu0 0
      %254 = vmatprep.subr.bf16.mxu0 0
      %255 = vmatpush1.bf16.xpose.msra.mxu0 0
      %256 = vmatprep.subr.bf16.mxu0 0
      %257 = vmatpush1.bf16.xpose.msra.mxu0 0
      %258 = vmatprep.subr.bf16.mxu0 0
      %259 = vmatpush1.bf16.xpose.msra.mxu0 0
      %260 = vmatprep.subr.bf16.mxu0 0
      %261 = vmatpush1.bf16.xpose.msra.mxu0 0
      %262 = vmatprep.subr.bf16.mxu0 0
      %263 = vmatpush1.bf16.xpose.msra.mxu0 0
      %264 = vmatprep.mubr.bf16.mxu0 0
      %265 = vmatmul.mubr.bf16.gmra.mrb[0].mxu0 %v227
      %v266 = vpop.f32.mrb[0].mxu0
      %v267 = vadd.f32 0.0, %v266
      %v268 = vpop.f32.mrb[0].mxu0
      %v269 = vpop.f32.mrb[0].mxu0
      %v270 = vpop.f32.mrb[0].mxu0
      %271 = vdwg.mxu0
      %v272 = vmul.f32 %v267, 0.25
      %vm273 = vcmask 64512
      %v274 = vsel %vm273, %v272, -inf
      %275 = vmax.xlane.f32.xlu0 %v274
      %v276 = vpop.xlane.xlu0 %275
      %v277 = vsub.f32 %v272, %v276
      %v278 = vmul.f32 %v277, 1.442695
      %v279 = vpow.pop %v278
      %v280 = vsel %vm273, %v279, 0.0
      %281 = vadd.xlane.f32.xlu0 %v280
      %v282 = vpop.xlane.xlu0 %281
      %v283 = vrcp.pop %v282
      %v284 = vmul.f32 %v279, %v283
      %v285 = vpack.c.bf16 %v284, %v284
      %286 = vrot.lane.b32.xlu0 %v221, 64
      %v287 = vpop.permute.xlu0 %286
      %v289 = vsel %vm273, %v285, 0
      %vm291 = vcmask 1043456
      %v293 = vsel %vm291, %v287, 0
      %295 = vmatprep.subr.bf16.mxu0 0
      %296 = vmatpush1.bf16.msra.mxu0 %v293
      %297 = vmatprep.subr.bf16.mxu0 0
      %298 = vmatpush1.bf16.msra.mxu0 0
      %299 = vmatprep.subr.bf16.mxu0 0
      %300 = vmatpush1.bf16.msra.mxu0 0
      %301 = vmatprep.subr.bf16.mxu0 0
      %302 = vmatpush1.bf16.msra.mxu0 0
      %303 = vmatprep.subr.bf16.mxu0 0
      %304 = vmatpush1.bf16.msra.mxu0 0
      %305 = vmatprep.subr.bf16.mxu0 0
      %306 = vmatpush1.bf16.msra.mxu0 0
      %307 = vmatprep.subr.bf16.mxu0 0
      %308 = vmatpush1.bf16.msra.mxu0 0
      %309 = vmatprep.subr.bf16.mxu0 0
      %310 = vmatpush1.bf16.msra.mxu0 0
      %311 = vmatprep.subr.bf16.mxu0 0
      %312 = vmatpush1.bf16.msra.mxu0 0
      %313 = vmatprep.subr.bf16.mxu0 0
      %314 = vmatpush1.bf16.msra.mxu0 0
      %315 = vmatprep.subr.bf16.mxu0 0
      %316 = vmatpush1.bf16.msra.mxu0 0
      %317 = vmatprep.subr.bf16.mxu0 0
      %318 = vmatpush1.bf16.msra.mxu0 0
      %319 = vmatprep.subr.bf16.mxu0 0
      %320 = vmatpush1.bf16.msra.mxu0 0
      %321 = vmatprep.subr.bf16.mxu0 0
      %322 = vmatpush1.bf16.msra.mxu0 0
      %323 = vmatprep.subr.bf16.mxu0 0
      %324 = vmatpush1.bf16.msra.mxu0 0
      %325 = vmatprep.subr.bf16.mxu0 0
      %326 = vmatpush1.bf16.msra.mxu0 0
      %327 = vmatprep.mubr.bf16.mxu0 0
      %328 = vmatmul.mubr.bf16.gmra.mrb[0].mxu0 %v289
      %v329 = vpop.f32.mrb[0].mxu0
      %v330 = vadd.f32 0.0, %v329
      %v331 = vpop.f32.mrb[0].mxu0
      %v332 = vpop.f32.mrb[0].mxu0
      %v333 = vpop.f32.mrb[0].mxu0
      %334 = vdwg.mxu0
      %v335 = vpack.c.bf16 %v330, %v330
      %v336 = vld [vmem:[%s2] sm:$0xf]
      %v337 = vld [vmem:[%s2 + $0x4] sm:$0xf]
      %v340 = vunpack.c.l.b16 %v336
      %v341 = vunpack.c.l.b16 %v337
      %v342 = vpack.c.b16 %v341, %v340
      %v345 = vsel %vm225, %v335, 0
      %347 = vmatprep.subr.bf16.mxu0 0
      %348 = vmatpush1.bf16.msra.mxu0 %v342
      %349 = vmatprep.subr.bf16.mxu0 0
      %350 = vmatpush1.bf16.msra.mxu0 0
      %351 = vmatprep.subr.bf16.mxu0 0
      %352 = vmatpush1.bf16.msra.mxu0 0
      %353 = vmatprep.subr.bf16.mxu0 0
      %354 = vmatpush1.bf16.msra.mxu0 0
      %355 = vmatprep.subr.bf16.mxu0 0
      %356 = vmatpush1.bf16.msra.mxu0 0
      %357 = vmatprep.subr.bf16.mxu0 0
      %358 = vmatpush1.bf16.msra.mxu0 0
      %359 = vmatprep.subr.bf16.mxu0 0
      %360 = vmatpush1.bf16.msra.mxu0 0
      %361 = vmatprep.subr.bf16.mxu0 0
      %362 = vmatpush1.bf16.msra.mxu0 0
      %363 = vmatprep.subr.bf16.mxu0 0
      %364 = vmatpush1.bf16.msra.mxu0 0
      %365 = vmatprep.subr.bf16.mxu0 0
      %366 = vmatpush1.bf16.msra.mxu0 0
      %367 = vmatprep.subr.bf16.mxu0 0
      %368 = vmatpush1.bf16.msra.mxu0 0
      %369 = vmatprep.subr.bf16.mxu0 0
      %370 = vmatpush1.bf16.msra.mxu0 0
      %371 = vmatprep.subr.bf16.mxu0 0
      %372 = vmatpush1.bf16.msra.mxu0 0
      %373 = vmatprep.subr.bf16.mxu0 0
      %374 = vmatpush1.bf16.msra.mxu0 0
      %375 = vmatprep.subr.bf16.mxu0 0
      %376 = vmatpush1.bf16.msra.mxu0 0
      %377 = vmatprep.subr.bf16.mxu0 0
      %378 = vmatpush1.bf16.msra.mxu0 0
      %379 = vmatprep.mubr.bf16.mxu0 0
      %380 = vmatmul.mubr.bf16.gmra.mrb[0].mxu0 %v345
      %v381 = vpop.f32.mrb[0].mxu0
      %v382 = vadd.f32 0.0, %v381
      %v383 = vpop.f32.mrb[0].mxu0
      %v384 = vpop.f32.mrb[0].mxu0
      %v385 = vpop.f32.mrb[0].mxu0
      %386 = vdwg.mxu0
      %v387 = vadd.f32 %v220, %v382
      %388 = vrot.lane.b32.xlu0 %v221, 112
      %v389 = vpop.permute.xlu0 %388
      %390 = vrot.lane.b32.xlu0 %v221, 80
      %v391 = vpop.permute.xlu0 %390
      %v393 = vsel %vm225, %v389, 0
      %v396 = vsel %vm225, %v391, 0
      %398 = vmatprep.subr.bf16.mxu0 0
      %399 = vmatpush1.bf16.xpose.msra.mxu0 %v396
      %400 = vmatprep.subr.bf16.mxu0 0
      %401 = vmatpush1.bf16.xpose.msra.mxu0 0
      %402 = vmatprep.subr.bf16.mxu0 0
      %403 = vmatpush1.bf16.xpose.msra.mxu0 0
      %404 = vmatprep.subr.bf16.mxu0 0
      %405 = vmatpush1.bf16.xpose.msra.mxu0 0
      %406 = vmatprep.subr.bf16.mxu0 0
      %407 = vmatpush1.bf16.xpose.msra.mxu0 0
      %408 = vmatprep.subr.bf16.mxu0 0
      %409 = vmatpush1.bf16.xpose.msra.mxu0 0
      %410 = vmatprep.subr.bf16.mxu0 0
      %411 = vmatpush1.bf16.xpose.msra.mxu0 0
      %412 = vmatprep.subr.bf16.mxu0 0
      %413 = vmatpush1.bf16.xpose.msra.mxu0 0
      %414 = vmatprep.subr.bf16.mxu0 0
      %415 = vmatpush1.bf16.xpose.msra.mxu0 0
      %416 = vmatprep.subr.bf16.mxu0 0
      %417 = vmatpush1.bf16.xpose.msra.mxu0 0
      %418 = vmatprep.subr.bf16.mxu0 0
      %419 = vmatpush1.bf16.xpose.msra.mxu0 0
      %420 = vmatprep.subr.bf16.mxu0 0
      %421 = vmatpush1.bf16.xpose.msra.mxu0 0
      %422 = vmatprep.subr.bf16.mxu0 0
      %423 = vmatpush1.bf16.xpose.msra.mxu0 0
      %424 = vmatprep.subr.bf16.mxu0 0
      %425 = vmatpush1.bf16.xpose.msra.mxu0 0
      %426 = vmatprep.subr.bf16.mxu0 0
      %427 = vmatpush1.bf16.xpose.msra.mxu0 0
      %428 = vmatprep.subr.bf16.mxu0 0
      %429 = vmatpush1.bf16.xpose.msra.mxu0 0
      %430 = vmatprep.mubr.bf16.mxu0 0
      %431 = vmatmul.mubr.bf16.gmra.mrb[0].mxu0 %v393
      %v432 = vpop.f32.mrb[0].mxu0
      %v433 = vadd.f32 0.0, %v432
      %v434 = vpop.f32.mrb[0].mxu0
      %v435 = vpop.f32.mrb[0].mxu0
      %v436 = vpop.f32.mrb[0].mxu0
      %437 = vdwg.mxu0
      %v438 = vmul.f32 %v433, 0.25
      %v439 = vsel %vm273, %v438, -inf
      %440 = vmax.xlane.f32.xlu0 %v439
      %v441 = vpop.xlane.xlu0 %440
      %v442 = vsub.f32 %v438, %v441
      %v443 = vmul.f32 %v442, 1.442695
      %v444 = vpow.pop %v443
      %v445 = vsel %vm273, %v444, 0.0
      %446 = vadd.xlane.f32.xlu0 %v445
      %v447 = vpop.xlane.xlu0 %446
      %v448 = vrcp.pop %v447
      %v449 = vmul.f32 %v444, %v448
      %v450 = vpack.c.bf16 %v449, %v449
      %451 = vrot.lane.b32.xlu0 %v221, 48
      %v452 = vpop.permute.xlu0 %451
      %v454 = vsel %vm273, %v450, 0
      %v457 = vsel %vm291, %v452, 0
      %459 = vmatprep.subr.bf16.mxu0 0
      %460 = vmatpush1.bf16.msra.mxu0 %v457
      %461 = vmatprep.subr.bf16.mxu0 0
      %462 = vmatpush1.bf16.msra.mxu0 0
      %463 = vmatprep.subr.bf16.mxu0 0
      %464 = vmatpush1.bf16.msra.mxu0 0
      %465 = vmatprep.subr.bf16.mxu0 0
      %466 = vmatpush1.bf16.msra.mxu0 0
      %467 = vmatprep.subr.bf16.mxu0 0
      %468 = vmatpush1.bf16.msra.mxu0 0
      %469 = vmatprep.subr.bf16.mxu0 0
      %470 = vmatpush1.bf16.msra.mxu0 0
      %471 = vmatprep.subr.bf16.mxu0 0
      %472 = vmatpush1.bf16.msra.mxu0 0
      %473 = vmatprep.subr.bf16.mxu0 0
      %474 = vmatpush1.bf16.msra.mxu0 0
      %475 = vmatprep.subr.bf16.mxu0 0
      %476 = vmatpush1.bf16.msra.mxu0 0
      %477 = vmatprep.subr.bf16.mxu0 0
      %478 = vmatpush1.bf16.msra.mxu0 0
      %479 = vmatprep.subr.bf16.mxu0 0
      %480 = vmatpush1.bf16.msra.mxu0 0
      %481 = vmatprep.subr.bf16.mxu0 0
      %482 = vmatpush1.bf16.msra.mxu0 0
      %483 = vmatprep.subr.bf16.mxu0 0
      %484 = vmatpush1.bf16.msra.mxu0 0
      %485 = vmatprep.subr.bf16.mxu0 0
      %486 = vmatpush1.bf16.msra.mxu0 0
      %487 = vmatprep.subr.bf16.mxu0 0
      %488 = vmatpush1.bf16.msra.mxu0 0
      %489 = vmatprep.subr.bf16.mxu0 0
      %490 = vmatpush1.bf16.msra.mxu0 0
      %491 = vmatprep.mubr.bf16.mxu0 0
      %492 = vmatmul.mubr.bf16.gmra.mrb[0].mxu0 %v454
      %v493 = vpop.f32.mrb[0].mxu0
      %v494 = vadd.f32 0.0, %v493
      %v495 = vpop.f32.mrb[0].mxu0
      %v496 = vpop.f32.mrb[0].mxu0
      %v497 = vpop.f32.mrb[0].mxu0
      %498 = vdwg.mxu0
      %v499 = vpack.c.bf16 %v494, %v494
      %v500 = vld [vmem:[%s2 + $0x8] sm:$0xf]
      %v501 = vld [vmem:[%s2 + $0xc] sm:$0xf]
      %v504 = vunpack.c.l.b16 %v500
      %v505 = vunpack.c.l.b16 %v501
      %v506 = vpack.c.b16 %v505, %v504
      %v509 = vsel %vm225, %v499, 0
      %511 = vmatprep.subr.bf16.mxu0 0
      %512 = vmatpush1.bf16.msra.mxu0 %v506
      %513 = vmatprep.subr.bf16.mxu0 0
      %514 = vmatpush1.bf16.msra.mxu0 0
      %515 = vmatprep.subr.bf16.mxu0 0
      %516 = vmatpush1.bf16.msra.mxu0 0
      %517 = vmatprep.subr.bf16.mxu0 0
      %518 = vmatpush1.bf16.msra.mxu0 0
      %519 = vmatprep.subr.bf16.mxu0 0
      %520 = vmatpush1.bf16.msra.mxu0 0
      %521 = vmatprep.subr.bf16.mxu0 0
      %522 = vmatpush1.bf16.msra.mxu0 0
      %523 = vmatprep.subr.bf16.mxu0 0
      %524 = vmatpush1.bf16.msra.mxu0 0
      %525 = vmatprep.subr.bf16.mxu0 0
      %526 = vmatpush1.bf16.msra.mxu0 0
      %527 = vmatprep.subr.bf16.mxu0 0
      %528 = vmatpush1.bf16.msra.mxu0 0
      %529 = vmatprep.subr.bf16.mxu0 0
      %530 = vmatpush1.bf16.msra.mxu0 0
      %531 = vmatprep.subr.bf16.mxu0 0
      %532 = vmatpush1.bf16.msra.mxu0 0
      %533 = vmatprep.subr.bf16.mxu0 0
      %534 = vmatpush1.bf16.msra.mxu0 0
      %535 = vmatprep.subr.bf16.mxu0 0
      %536 = vmatpush1.bf16.msra.mxu0 0
      %537 = vmatprep.subr.bf16.mxu0 0
      %538 = vmatpush1.bf16.msra.mxu0 0
      %539 = vmatprep.subr.bf16.mxu0 0
      %540 = vmatpush1.bf16.msra.mxu0 0
      %541 = vmatprep.subr.bf16.mxu0 0
      %542 = vmatpush1.bf16.msra.mxu0 0
      %543 = vmatprep.mubr.bf16.mxu0 0
      %544 = vmatmul.mubr.bf16.gmra.mrb[0].mxu0 %v509
      %v545 = vpop.f32.mrb[0].mxu0
      %v546 = vadd.f32 0.0, %v545
      %v547 = vpop.f32.mrb[0].mxu0
      %v548 = vpop.f32.mrb[0].mxu0
      %v549 = vpop.f32.mrb[0].mxu0
      %550 = vdwg.mxu0
      %v551 = vadd.f32 %v387, %v546
      %vm552 = vcmask 261120
      %553 = vst.msk [vmem:[%s209] sm:$0xff] %vm552, %v551
      %p554 = scmp.lt.s32.totalorder %s15, 1
      %s555 = scalar_select %p554, %s15, 1
      %s556 = smul.addr %s555, 8
      %s557 = scalar_lea.vmem %s4, %s556
      // Predicated region
      $region37: #{classifier_forward.15} parent=35 // pred_check
        %p558 = pneg %p127
      $region38: #{classifier_forward.15} parent=35 // pred_check_branch
        %560 = sbr.rel (%p558) target = $region40
      $region39: #{classifier_forward.15} parent=35 // pred_region
        _
      $region40: #{classifier_forward.15} parent=35 // pred_fallthru
        _
    $region36: #{classifier_forward.15} parent=5 // pred_fallthru
      _
    %p561 = scmp.le.s32.totalorder 2, %s10
    // Predicated region
    $region41: #{classifier_forward.15} parent=5 // pred_check
      %p562 = pneg %p561
    $region42: #{classifier_forward.15} parent=5 // pred_check_branch
      %564 = sbr.rel (%p562) target = $region44
    $region43: #{classifier_forward.15} parent=5 // pred_region
      %s565 = ssub.s32 %s10, 2
      // Predicated region
      $region45: #{classifier_forward.15} parent=43 // pred_check
        %p566 = pneg %p133
      $region46: #{classifier_forward.15} parent=43 // pred_check_branch
        %568 = sbr.rel (%p566) target = $region48
      $region47: #{classifier_forward.15} parent=43 // pred_region
        %p569 = scmp.lt.s32.totalorder %s16, 1
        %s570 = scalar_select %p569, %s16, 1
        %s571 = smul.addr %s570, 8
        %s572 = scalar_lea.vmem %s4, %s571
      $region48: #{classifier_forward.15} parent=43 // pred_fallthru
        _
    $region44: #{classifier_forward.15} parent=5 // pred_fallthru
      _
  $region6: #{classifier_forward.15} parent=0 // loop_footer
    %s14 = sadd.s32 1, %s10
  $region7: #{classifier_forward.15} parent=0 // loop_footer_branch
    %9 = sbr.rel target = $region3
  $region8: #{classifier_forward.15} parent=0 // loop_exit
    _

// kernel: classifier_forward.22
$region0: #{classifier_forward.22}
  #allocation0 [shape = 'u32[]', space=smem, size = 0x4, offset = 0x4, fixed_abs, tag = 'smem constant byte address 0x4 - core index']
  #allocation1 [shape = 'u32[144,128]{1,0:T(1,128)}', space=vmem, size = 0x12000, scoped, tag = 'internal scratch']
  %s0 = inlined_call_operand.vmem [shape: f32[16,32], index: 0, kind: input, shape index: {}]
  %s1 = inlined_call_operand.vmem [shape: f32[1,32], index: 1, kind: input, shape index: {}]
  %s2 = inlined_call_operand.vmem [shape: f32[1,32], index: 2, kind: input, shape index: {}]
  %s3 = inlined_call_operand.vmem [shape: f32[16,32], index: 3, kind: output, shape index: {}]
  %s4 = sld [smem:[#allocation0]]
  $region22: #{classifier_forward.22} parent=0
    _
  %s6 = ssub.s32 1, %s4
  %s7 = scalar_select 0, %s6, %s4
  // Predicated region
  $region2: #{classifier_forward.22} parent=0 // pred_check
    _
  $region3: #{classifier_forward.22} parent=0 // pred_check_branch
    %9 = sbr.rel (0) target = $region5
  $region4: #{classifier_forward.22} parent=0 // pred_region
    _
  $region5: #{classifier_forward.22} parent=0 // pred_fallthru
    _
  // Predicated region
  $region6: #{classifier_forward.22} parent=0 // pred_check
    _
  $region7: #{classifier_forward.22} parent=0 // pred_check_branch
    %11 = sbr.rel (0) target = $region9
  $region8: #{classifier_forward.22} parent=0 // pred_region
    _
  $region9: #{classifier_forward.22} parent=0 // pred_fallthru
    _
  // Predicated region
  $region10: #{classifier_forward.22} parent=0 // pred_check
    _
  $region11: #{classifier_forward.22} parent=0 // pred_check_branch
    %13 = sbr.rel (0) target = $region13
  $region12: #{classifier_forward.22} parent=0 // pred_region
    _
  $region13: #{classifier_forward.22} parent=0 // pred_fallthru
    _
  %v14 = vld [vmem:[%s0] sm:$0xff]
  %v15 = vld [vmem:[%s0 + $0x8] sm:$0xff]
  %vm16 = vcmask 261120
  %v17 = vsel %vm16, %v14, 0.0
  %18 = vadd.xlane.f32.xlu0 %v17
  %v19 = vpop.xlane.xlu0 %18
  %v20 = vsel %vm16, %v15, 0.0
  %21 = vadd.xlane.f32.xlu0 %v20
  %v22 = vpop.xlane.xlu0 %21
  %v23 = vrcp.pop 32.0
  %v24 = vmul.f32 %v19, %v23
  %v25 = vmul.f32 %v22, %v23
  %v26 = vsub.f32 %v14, %v24
  %v27 = vsub.f32 %v15, %v25
  %v28 = vmul.f32 %v26, %v26
  %v29 = vmul.f32 %v27, %v27
  %v30 = vsel %vm16, %v28, 0.0
  %31 = vadd.xlane.f32.xlu0 %v30
  %v32 = vpop.xlane.xlu0 %31
  %v33 = vsel %vm16, %v29, 0.0
  %34 = vadd.xlane.f32.xlu0 %v33
  %v35 = vpop.xlane.xlu0 %34
  %v36 = vmul.f32 %v32, %v23
  %v37 = vmul.f32 %v35, %v23
  %v38 = vadd.f32 %v36, 1e-05
  %v39 = vadd.f32 %v37, 1e-05
  %v40 = vrsqrt.pop %v38
  %v41 = vrsqrt.pop %v39
  %v42 = vmul.f32 %v26, %v40
  %v43 = vmul.f32 %v27, %v41
  %v44 = vld [vmem:[%s1] sm:$0x1]
  %v46 = vlaneseq
  %v47 = vshrl.u32 %v46, 7
  %v48 = vsub.s32 0, %v47
  %v49 = vrot.slane %v44, %v48
  %v51 = vmul.f32 %v42, %v49
  %v52 = vmul.f32 %v43, %v49
  %v53 = vld [vmem:[%s2] sm:$0x1]
  %v55 = vlaneseq
  %v56 = vshrl.u32 %v55, 7
  %v57 = vsub.s32 0, %v56
  %v58 = vrot.slane %v53, %v57
  %v60 = vadd.f32 %v51, %v58
  %v61 = vadd.f32 %v52, %v58
  %62 = vst.msk [vmem:[%s3] sm:$0xff] %vm16, %v60
  %63 = vst.msk [vmem:[%s3 + $0x8] sm:$0xff] %vm16, %v61
  // Predicated region
  $region14: #{classifier_forward.22} parent=0 // pred_check
    _
  $region15: #{classifier_forward.22} parent=0 // pred_check_branch
    %65 = sbr.rel (0) target = $region17
  $region16: #{classifier_forward.22} parent=0 // pred_region
    _
  $region17: #{classifier_forward.22} parent=0 // pred_fallthru
    _
  // Predicated region
  $region18: #{classifier_forward.22} parent=0 // pred_check
    _
  $region19: #{classifier_forward.22} parent=0 // pred_check_branch
    %67 = sbr.rel (0) target = $region21
  $region20: #{classifier_forward.22} parent=0 // pred_region
    _
  $region21: #{classifier_forward.22} parent=0 // pred_fallthru
    _

// kernel: classifier_forward.16
$region0: #{classifier_forward.16}
  #allocation0 [shape = 'u32[]', space=smem, size = 0x4, offset = 0x4, fixed_abs, tag = 'smem constant byte address 0x4 - core index']
  #allocation1 [shape = 'u32[144,128]{1,0:T(1,128)}', space=vmem, size = 0x12000, scoped, tag = 'internal scratch']
  %s0 = inlined_call_operand.vmem [shape: f32[16,32], index: 0, kind: input, shape index: {}]
  %s1 = inlined_call_operand.vmem [shape: f32[1,32], index: 1, kind: input, shape index: {}]
  %s2 = inlined_call_operand.vmem [shape: f32[1,32], index: 2, kind: input, shape index: {}]
  %s3 = inlined_call_operand.vmem [shape: bf16[32,64], index: 3, kind: input, shape index: {}]
  %s4 = inlined_call_operand.vmem [shape: f32[1,64], index: 4, kind: input, shape index: {}]
  %s5 = inlined_call_operand.vmem [shape: f32[16,64], index: 5, kind: output, shape index: {}]
  %s6 = sld [smem:[#allocation0]]
  $region30: #{classifier_forward.16} parent=0
    _
  %s8 = ssub.s32 1, %s6
  %s9 = scalar_select 0, %s8, %s6
  // Predicated region
  $region2: #{classifier_forward.16} parent=0 // pred_check
    _
  $region3: #{classifier_forward.16} parent=0 // pred_check_branch
    %11 = sbr.rel (0) target = $region5
  $region4: #{classifier_forward.16} parent=0 // pred_region
    _
  $region5: #{classifier_forward.16} parent=0 // pred_fallthru
    _
  // Predicated region
  $region6: #{classifier_forward.16} parent=0 // pred_check
    _
  $region7: #{classifier_forward.16} parent=0 // pred_check_branch
    %13 = sbr.rel (0) target = $region9
  $region8: #{classifier_forward.16} parent=0 // pred_region
    _
  $region9: #{classifier_forward.16} parent=0 // pred_fallthru
    _
  // Predicated region
  $region10: #{classifier_forward.16} parent=0 // pred_check
    _
  $region11: #{classifier_forward.16} parent=0 // pred_check_branch
    %15 = sbr.rel (0) target = $region13
  $region12: #{classifier_forward.16} parent=0 // pred_region
    _
  $region13: #{classifier_forward.16} parent=0 // pred_fallthru
    _
  // Predicated region
  $region14: #{classifier_forward.16} parent=0 // pred_check
    _
  $region15: #{classifier_forward.16} parent=0 // pred_check_branch
    %17 = sbr.rel (0) target = $region17
  $region16: #{classifier_forward.16} parent=0 // pred_region
    _
  $region17: #{classifier_forward.16} parent=0 // pred_fallthru
    _
  // Predicated region
  $region18: #{classifier_forward.16} parent=0 // pred_check
    _
  $region19: #{classifier_forward.16} parent=0 // pred_check_branch
    %19 = sbr.rel (0) target = $region21
  $region20: #{classifier_forward.16} parent=0 // pred_region
    _
  $region21: #{classifier_forward.16} parent=0 // pred_fallthru
    _
  %v21 = vld [vmem:[%s0] sm:$0xff]
  %v22 = vld [vmem:[%s0 + $0x8] sm:$0xff]
  %vm23 = vcmask 261120
  %v24 = vsel %vm23, %v21, 0.0
  %25 = vadd.xlane.f32.xlu0 %v24
  %v26 = vpop.xlane.xlu0 %25
  %v27 = vsel %vm23, %v22, 0.0
  %28 = vadd.xlane.f32.xlu0 %v27
  %v29 = vpop.xlane.xlu0 %28
  %v30 = vrcp.pop 32.0
  %v31 = vmul.f32 %v26, %v30
  %v32 = vmul.f32 %v29, %v30
  %v33 = vsub.f32 %v21, %v31
  %v34 = vsub.f32 %v22, %v32
  %v35 = vmul.f32 %v33, %v33
  %v36 = vmul.f32 %v34, %v34
  %v37 = vsel %vm23, %v35, 0.0
  %38 = vadd.xlane.f32.xlu0 %v37
  %v39 = vpop.xlane.xlu0 %38
  %v40 = vsel %vm23, %v36, 0.0
  %41 = vadd.xlane.f32.xlu0 %v40
  %v42 = vpop.xlane.xlu0 %41
  %v43 = vmul.f32 %v39, %v30
  %v44 = vmul.f32 %v42, %v30
  %v45 = vadd.f32 %v43, 1e-05
  %v46 = vadd.f32 %v44, 1e-05
  %v47 = vrsqrt.pop %v45
  %v48 = vrsqrt.pop %v46
  %v49 = vmul.f32 %v33, %v47
  %v50 = vmul.f32 %v34, %v48
  %v51 = vld [vmem:[%s1] sm:$0x1]
  %v53 = vlaneseq
  %v54 = vshrl.u32 %v53, 7
  %v55 = vsub.s32 0, %v54
  %v56 = vrot.slane %v51, %v55
  %v58 = vmul.f32 %v49, %v56
  %v59 = vmul.f32 %v50, %v56
  %v60 = vld [vmem:[%s2] sm:$0x1]
  %v62 = vlaneseq
  %v63 = vshrl.u32 %v62, 7
  %v64 = vsub.s32 0, %v63
  %v65 = vrot.slane %v60, %v64
  %v67 = vadd.f32 %v58, %v65
  %v68 = vadd.f32 %v59, %v65
  %v69 = vpack.c.bf16 %v68, %v67
  %v70 = vld [vmem:[%s3] sm:$0xf]
  %v71 = vld [vmem:[%s3 + $0x4] sm:$0xf]
  %v72 = vld [vmem:[%s3 + $0x8] sm:$0xf]
  %v73 = vld [vmem:[%s3 + $0xc] sm:$0xf]
  %v74 = vld [vmem:[%s4] sm:$0x1]
  %v76 = vlaneseq
  %v77 = vshrl.u32 %v76, 7
  %v78 = vsub.s32 0, %v77
  %v79 = vrot.slane %v74, %v78
  %v85 = vunpack.c.l.b16 %v70
  %v86 = vunpack.c.l.b16 %v71
  %v87 = vunpack.c.l.b16 %v72
  %v88 = vunpack.c.l.b16 %v73
  %v89 = vpack.c.b16 %v86, %v85
  %v90 = vpack.c.b16 %v88, %v87
  %v94 = vsel %vm23, %v69, 0
  %96 = vmatprep.subr.bf16.mxu0 0
  %97 = vmatpush1.bf16.msra.mxu0 %v89
  %98 = vmatprep.subr.bf16.mxu0 0
  %99 = vmatpush1.bf16.msra.mxu0 %v90
  %100 = vmatprep.subr.bf16.mxu0 0
  %101 = vmatpush1.bf16.msra.mxu0 0
  %102 = vmatprep.subr.bf16.mxu0 0
  %103 = vmatpush1.bf16.msra.mxu0 0
  %104 = vmatprep.subr.bf16.mxu0 0
  %105 = vmatpush1.bf16.msra.mxu0 0
  %106 = vmatprep.subr.bf16.mxu0 0
  %107 = vmatpush1.bf16.msra.mxu0 0
  %108 = vmatprep.subr.bf16.mxu0 0
  %109 = vmatpush1.bf16.msra.mxu0 0
  %110 = vmatprep.subr.bf16.mxu0 0
  %111 = vmatpush1.bf16.msra.mxu0 0
  %112 = vmatprep.subr.bf16.mxu0 0
  %113 = vmatpush1.bf16.msra.mxu0 0
  %114 = vmatprep.subr.bf16.mxu0 0
  %115 = vmatpush1.bf16.msra.mxu0 0
  %116 = vmatprep.subr.bf16.mxu0 0
  %117 = vmatpush1.bf16.msra.mxu0 0
  %118 = vmatprep.subr.bf16.mxu0 0
  %119 = vmatpush1.bf16.msra.mxu0 0
  %120 = vmatprep.subr.bf16.mxu0 0
  %121 = vmatpush1.bf16.msra.mxu0 0
  %122 = vmatprep.subr.bf16.mxu0 0
  %123 = vmatpush1.bf16.msra.mxu0 0
  %124 = vmatprep.subr.bf16.mxu0 0
  %125 = vmatpush1.bf16.msra.mxu0 0
  %126 = vmatprep.subr.bf16.mxu0 0
  %127 = vmatpush1.bf16.msra.mxu0 0
  %128 = vmatprep.mubr.bf16.mxu0 0
  %129 = vmatmul.mubr.bf16.gmra.mrb[0].mxu0 %v94
  %v130 = vpop.f32.mrb[0].mxu0
  %v131 = vadd.f32 %v79, %v130
  %v132 = vpop.f32.mrb[0].mxu0
  %v133 = vpop.f32.mrb[0].mxu0
  %v134 = vadd.f32 %v79, %v133
  %v135 = vpop.f32.mrb[0].mxu0
  %136 = vdwg.mxu0
  %v137 = vmul.f32 %v131, %v131
  %v138 = vmul.f32 %v134, %v134
  %v139 = vmul.f32 %v131, %v137
  %v140 = vmul.f32 %v134, %v138
  %v141 = vmul.f32 %v139, 0.044715
  %v142 = vmul.f32 %v140, 0.044715
  %v143 = vadd.f32 %v131, %v141
  %v144 = vadd.f32 %v134, %v142
  %v145 = vmul.f32 %v143, 0.7978846
  %v146 = vmul.f32 %v144, 0.7978846
  %v147 = vtanh.pop %v145
  %v148 = vtanh.pop %v146
  %v149 = vadd.f32 %v147, 1.0
  %v150 = vadd.f32 %v148, 1.0
  %v151 = vmul.f32 %v149, 0.5
  %v152 = vmul.f32 %v150, 0.5
  %v153 = vmul.f32 %v131, %v151
  %v154 = vmul.f32 %v134, %v152
  %vm155 = vcmask 523264
  %156 = vst.msk [vmem:[%s5] sm:$0xff] %vm155, %v153
  %157 = vst.msk [vmem:[%s5 + $0x8] sm:$0xff] %vm155, %v154
  // Predicated region
  $region22: #{classifier_forward.16} parent=0 // pred_check
    _
  $region23: #{classifier_forward.16} parent=0 // pred_check_branch
    %159 = sbr.rel (0) target = $region25
  $region24: #{classifier_forward.16} parent=0 // pred_region
    _
  $region25: #{classifier_forward.16} parent=0 // pred_fallthru
    _
  // Predicated region
  $region26: #{classifier_forward.16} parent=0 // pred_check
    _
  $region27: #{classifier_forward.16} parent=0 // pred_check_branch
    %161 = sbr.rel (0) target = $region29
  $region28: #{classifier_forward.16} parent=0 // pred_region
    _
  $region29: #{classifier_forward.16} parent=0 // pred_fallthru
    _

// kernel: classifier_forward.17
$region0: #{classifier_forward.17}
  #allocation0 [shape = 'u32[]', space=smem, size = 0x4, offset = 0x4, fixed_abs, tag = 'smem constant byte address 0x4 - core index']
  #allocation1 [shape = 'u32[144,128]{1,0:T(1,128)}', space=vmem, size = 0x12000, scoped, tag = 'internal scratch']
  %s0 = inlined_call_operand.vmem [shape: f32[16,64], index: 0, kind: input, shape index: {}]
  %s1 = inlined_call_operand.vmem [shape: bf16[64,32], index: 1, kind: input, shape index: {}]
  %s2 = inlined_call_operand.vmem [shape: f32[1,32], index: 2, kind: input, shape index: {}]
  %s3 = inlined_call_operand.vmem [shape: f32[16,32], index: 3, kind: input, shape index: {}]
  %s4 = inlined_call_operand.vmem [shape: f32[16,32], index: 4, kind: output, shape index: {}]
  %s5 = sld [smem:[#allocation0]]
  $region26: #{classifier_forward.17} parent=0
    _
  %s7 = ssub.s32 1, %s5
  %s8 = scalar_select 0, %s7, %s5
  // Predicated region
  $region2: #{classifier_forward.17} parent=0 // pred_check
    _
  $region3: #{classifier_forward.17} parent=0 // pred_check_branch
    %10 = sbr.rel (0) target = $region5
  $region4: #{classifier_forward.17} parent=0 // pred_region
    _
  $region5: #{classifier_forward.17} parent=0 // pred_fallthru
    _
  // Predicated region
  $region6: #{classifier_forward.17} parent=0 // pred_check
    _
  $region7: #{classifier_forward.17} parent=0 // pred_check_branch
    %12 = sbr.rel (0) target = $region9
  $region8: #{classifier_forward.17} parent=0 // pred_region
    _
  $region9: #{classifier_forward.17} parent=0 // pred_fallthru
    _
  // Predicated region
  $region10: #{classifier_forward.17} parent=0 // pred_check
    _
  $region11: #{classifier_forward.17} parent=0 // pred_check_branch
    %14 = sbr.rel (0) target = $region13
  $region12: #{classifier_forward.17} parent=0 // pred_region
    _
  $region13: #{classifier_forward.17} parent=0 // pred_fallthru
    _
  // Predicated region
  $region14: #{classifier_forward.17} parent=0 // pred_check
    _
  $region15: #{classifier_forward.17} parent=0 // pred_check_branch
    %16 = sbr.rel (0) target = $region17
  $region16: #{classifier_forward.17} parent=0 // pred_region
    _
  $region17: #{classifier_forward.17} parent=0 // pred_fallthru
    _
  %v18 = vld [vmem:[%s0] sm:$0xff]
  %v19 = vld [vmem:[%s0 + $0x8] sm:$0xff]
  %v20 = vpack.c.bf16 %v19, %v18
  %v21 = vld [vmem:[%s1] sm:$0xf]
  %v22 = vld [vmem:[%s1 + $0x4] sm:$0xf]
  %v23 = vld [vmem:[%s1 + $0x8] sm:$0xf]
  %v24 = vld [vmem:[%s1 + $0xc] sm:$0xf]
  %v25 = vld [vmem:[%s1 + $0x10] sm:$0xf]
  %v26 = vld [vmem:[%s1 + $0x14] sm:$0xf]
  %v27 = vld [vmem:[%s1 + $0x18] sm:$0xf]
  %v28 = vld [vmem:[%s1 + $0x1c] sm:$0xf]
  %v29 = vld [vmem:[%s2] sm:$0x1]
  %v31 = vlaneseq
  %v32 = vshrl.u32 %v31, 7
  %v33 = vsub.s32 0, %v32
  %v34 = vrot.slane %v29, %v33
  %v44 = vunpack.c.l.b16 %v21
  %v45 = vunpack.c.l.b16 %v22
  %v46 = vunpack.c.l.b16 %v23
  %v47 = vunpack.c.l.b16 %v24
  %v48 = vunpack.c.l.b16 %v25
  %v49 = vunpack.c.l.b16 %v26
  %v50 = vunpack.c.l.b16 %v27
  %v51 = vunpack.c.l.b16 %v28
  %v52 = vpack.c.b16 %v45, %v44
  %v53 = vpack.c.b16 %v47, %v46
  %v54 = vpack.c.b16 %v49, %v48
  %v55 = vpack.c.b16 %v51, %v50
  %vm60 = vcmask 523264
  %v62 = vsel %vm60, %v20, 0
  %64 = vmatprep.subr.bf16.mxu0 0
  %65 = vmatpush1.bf16.msra.mxu0 %v52
  %66 = vmatprep.subr.bf16.mxu0 0
  %67 = vmatpush1.bf16.msra.mxu0 %v53
  %68 = vmatprep.subr.bf16.mxu0 0
  %69 = vmatpush1.bf16.msra.mxu0 %v54
  %70 = vmatprep.subr.bf16.mxu0 0
  %71 = vmatpush1.bf16.msra.mxu0 %v55
  %72 = vmatprep.subr.bf16.mxu0 0
  %73 = vmatpush1.bf16.msra.mxu0 0
  %74 = vmatprep.subr.bf16.mxu0 0
  %75 = vmatpush1.bf16.msra.mxu0 0
  %76 = vmatprep.subr.bf16.mxu0 0
  %77 = vmatpush1.bf16.msra.mxu0 0
  %78 = vmatprep.subr.bf16.mxu0 0
  %79 = vmatpush1.bf16.msra.mxu0 0
  %80 = vmatprep.subr.bf16.mxu0 0
  %81 = vmatpush1.bf16.msra.mxu0 0
  %82 = vmatprep.subr.bf16.mxu0 0
  %83 = vmatpush1.bf16.msra.mxu0 0
  %84 = vmatprep.subr.bf16.mxu0 0
  %85 = vmatpush1.bf16.msra.mxu0 0
  %86 = vmatprep.subr.bf16.mxu0 0
  %87 = vmatpush1.bf16.msra.mxu0 0
  %88 = vmatprep.subr.bf16.mxu0 0
  %89 = vmatpush1.bf16.msra.mxu0 0
  %90 = vmatprep.subr.bf16.mxu0 0
  %91 = vmatpush1.bf16.msra.mxu0 0
  %92 = vmatprep.subr.bf16.mxu0 0
  %93 = vmatpush1.bf16.msra.mxu0 0
  %94 = vmatprep.subr.bf16.mxu0 0
  %95 = vmatpush1.bf16.msra.mxu0 0
  %96 = vmatprep.mubr.bf16.mxu0 0
  %97 = vmatmul.mubr.bf16.gmra.mrb[0].mxu0 %v62
  %v98 = vpop.f32.mrb[0].mxu0
  %v99 = vadd.f32 %v34, %v98
  %v100 = vpop.f32.mrb[0].mxu0
  %v101 = vpop.f32.mrb[0].mxu0
  %v102 = vadd.f32 %v34, %v101
  %v103 = vpop.f32.mrb[0].mxu0
  %104 = vdwg.mxu0
  %v105 = vld [vmem:[%s3] sm:$0xff]
  %v106 = vld [vmem:[%s3 + $0x8] sm:$0xff]
  %v107 = vadd.f32 %v99, %v105
  %v108 = vadd.f32 %v102, %v106
  %vm109 = vcmask 261120
  %110 = vst.msk [vmem:[%s4] sm:$0xff] %vm109, %v107
  %111 = vst.msk [vmem:[%s4 + $0x8] sm:$0xff] %vm109, %v108
  // Predicated region
  $region18: #{classifier_forward.17} parent=0 // pred_check
    _
  $region19: #{classifier_forward.17} parent=0 // pred_check_branch
    %113 = sbr.rel (0) target = $region21
  $region20: #{classifier_forward.17} parent=0 // pred_region
    _
  $region21: #{classifier_forward.17} parent=0 // pred_fallthru
    _
  // Predicated region
  $region22: #{classifier_forward.17} parent=0 // pred_check
    _
  $region23: #{classifier_forward.17} parent=0 // pred_check_branch
    %115 = sbr.rel (0) target = $region25
  $region24: #{classifier_forward.17} parent=0 // pred_region
    _
  $region25: #{classifier_forward.17} parent=0 // pred_fallthru
    _

// kernel: classifier_forward.23
$region0: #{classifier_forward.23}
  #allocation0 [shape = 'u32[]', space=smem, size = 0x4, offset = 0x4, fixed_abs, tag = 'smem constant byte address 0x4 - core index']
  #allocation1 [shape = 'u32[144,128]{1,0:T(1,128)}', space=vmem, size = 0x12000, scoped, tag = 'internal scratch']
  #allocation2 [shape = 'f32[2,10]{1,0:T(2,128)}', space=vmem, size = 0x400, scoped, tag = 'scratch operand']
  #allocation3 [shape = 'f32[1,1]{1,0:T(1,128)S(1)}', space=vmem, size = 0x200, scoped, tag = 'scoped memory for classifier_forward.23']
  %s0 = inlined_call_operand.vmem [shape: f32[2,256], index: 0, kind: input, shape index: {}]
  %s1 = inlined_call_operand.vmem [shape: bf16[256,10], index: 1, kind: input, shape index: {}]
  %s2 = inlined_call_operand.vmem [shape: f32[1,10], index: 2, kind: input, shape index: {}]
  %s3 = inlined_call_operand.vmem [shape: f32[1,10], index: 3, kind: input, shape index: {}]
  %s4 = inlined_call_operand.<no memory space> [shape: f32[1,1], index: 4, kind: input, shape index: {}]
  %s5 = inlined_call_operand.vmem [shape: f32[2,1], index: 5, kind: output, shape index: {}]
  %s6 = sld [smem:[#allocation0]]
  $region38: #{classifier_forward.23} parent=0
    _
  %s8 = ssub.s32 1, %s6
  %s9 = scalar_select 0, %s8, %s6
  %v10 = vstv %s4
  %11 = vst [vmem:[#allocation3] sm:$0x1] %v10
  // Predicated region
  $region2: #{classifier_forward.23} parent=0 // pred_check
    _
  $region3: #{classifier_forward.23} parent=0 // pred_check_branch
    %13 = sbr.rel (0) target = $region5
  $region4: #{classifier_forward.23} parent=0 // pred_region
    _
  $region5: #{classifier_forward.23} parent=0 // pred_fallthru
    _
  // Predicated region
  $region6: #{classifier_forward.23} parent=0 // pred_check
    _
  $region7: #{classifier_forward.23} parent=0 // pred_check_branch
    %15 = sbr.rel (0) target = $region9
  $region8: #{classifier_forward.23} parent=0 // pred_region
    _
  $region9: #{classifier_forward.23} parent=0 // pred_fallthru
    _
  // Predicated region
  $region10: #{classifier_forward.23} parent=0 // pred_check
    _
  $region11: #{classifier_forward.23} parent=0 // pred_check_branch
    %17 = sbr.rel (0) target = $region13
  $region12: #{classifier_forward.23} parent=0 // pred_region
    _
  $region13: #{classifier_forward.23} parent=0 // pred_fallthru
    _
  // Predicated region
  $region14: #{classifier_forward.23} parent=0 // pred_check
    _
  $region15: #{classifier_forward.23} parent=0 // pred_check_branch
    %19 = sbr.rel (0) target = $region17
  $region16: #{classifier_forward.23} parent=0 // pred_region
    _
  $region17: #{classifier_forward.23} parent=0 // pred_fallthru
    _
  // Predicated region
  $region18: #{classifier_forward.23} parent=0 // pred_check
    _
  $region19: #{classifier_forward.23} parent=0 // pred_check_branch
    %21 = sbr.rel (0) target = $region21
  $region20: #{classifier_forward.23} parent=0 // pred_region
    _
  $region21: #{classifier_forward.23} parent=0 // pred_fallthru
    _
  %p23 = scmp.eq.s32.totalorder 0, 0
  // Predicated region
  $region22: #{classifier_forward.23} parent=0 // pred_check
    %p24 = pneg %p23
  $region23: #{classifier_forward.23} parent=0 // pred_check_branch
    %26 = sbr.rel (%p24) target = $region25
  $region24: #{classifier_forward.23} parent=0 // pred_region
    %vm27 = vcmask 74752
    %28 = vst.msk [vmem:[#allocation2] sm:$0x3] %vm27, 0.0
  $region25: #{classifier_forward.23} parent=0 // pred_fallthru
    _
  %v29 = vld [vmem:[#allocation2] sm:$0x3]
  %v30 = vld [vmem:[%s0] sm:$0xf]
  %v33 = vunpack.c.l.s4 1983009808
  %v34 = vunpack.c.0.s8 %v33
  %v35 = vlaneseq
  %v36 = vshrl.u32 %v35, 7
  %v37 = vsub.s32 %v34, %v36
  %v38 = vrot.slane %v30, %v37
  %v39 = vcombine.high %v38, %v38
  %v42 = vpack.c.bf16 %v38, %v38
  %v43 = vpack.c.bf16 %v39, %v39
  %v44 = vld [vmem:[%s1] sm:$0xf]
  %v45 = vld [vmem:[%s1 + $0x4] sm:$0xf]
  %v46 = vld [vmem:[%s1 + $0x8] sm:$0xf]
  %v47 = vld [vmem:[%s1 + $0xc] sm:$0xf]
  %v48 = vld [vmem:[%s1 + $0x10] sm:$0xf]
  %v49 = vld [vmem:[%s1 + $0x14] sm:$0xf]
  %v50 = vld [vmem:[%s1 + $0x18] sm:$0xf]
  %v51 = vld [vmem:[%s1 + $0x1c] sm:$0xf]
  %v52 = vld [vmem:[%s1 + $0x20] sm:$0xf]
  %v53 = vld [vmem:[%s1 + $0x24] sm:$0xf]
  %v54 = vld [vmem:[%s1 + $0x28] sm:$0xf]
  %v55 = vld [vmem:[%s1 + $0x2c] sm:$0xf]
  %v56 = vld [vmem:[%s1 + $0x30] sm:$0xf]
  %v57 = vld [vmem:[%s1 + $0x34] sm:$0xf]
  %v58 = vld [vmem:[%s1 + $0x38] sm:$0xf]
  %v59 = vld [vmem:[%s1 + $0x3c] sm:$0xf]
  %v60 = vld [vmem:[%s1 + $0x40] sm:$0xf]
  %v61 = vld [vmem:[%s1 + $0x44] sm:$0xf]
  %v62 = vld [vmem:[%s1 + $0x48] sm:$0xf]
  %v63 = vld [vmem:[%s1 + $0x4c] sm:$0xf]
  %v64 = vld [vmem:[%s1 + $0x50] sm:$0xf]
  %v65 = vld [vmem:[%s1 + $0x54] sm:$0xf]
  %v66 = vld [vmem:[%s1 + $0x58] sm:$0xf]
  %v67 = vld [vmem:[%s1 + $0x5c] sm:$0xf]
  %v68 = vld [vmem:[%s1 + $0x60] sm:$0xf]
  %v69 = vld [vmem:[%s1 + $0x64] sm:$0xf]
  %v70 = vld [vmem:[%s1 + $0x68] sm:$0xf]
  %v71 = vld [vmem:[%s1 + $0x6c] sm:$0xf]
  %v72 = vld [vmem:[%s1 + $0x70] sm:$0xf]
  %v73 = vld [vmem:[%s1 + $0x74] sm:$0xf]
  %v74 = vld [vmem:[%s1 + $0x78] sm:$0xf]
  %v75 = vld [vmem:[%s1 + $0x7c] sm:$0xf]
  %v108 = vunpack.c.l.b16 %v44
  %v109 = vunpack.c.l.b16 %v45
  %v110 = vunpack.c.l.b16 %v46
  %v111 = vunpack.c.l.b16 %v47
  %v112 = vunpack.c.l.b16 %v48
  %v113 = vunpack.c.l.b16 %v49
  %v114 = vunpack.c.l.b16 %v50
  %v115 = vunpack.c.l.b16 %v51
  %v116 = vunpack.c.l.b16 %v52
  %v117 = vunpack.c.l.b16 %v53
  %v118 = vunpack.c.l.b16 %v54
  %v119 = vunpack.c.l.b16 %v55
  %v120 = vunpack.c.l.b16 %v56
  %v121 = vunpack.c.l.b16 %v57
  %v122 = vunpack.c.l.b16 %v58
  %v123 = vunpack.c.l.b16 %v59
  %v124 = vunpack.c.l.b16 %v60
  %v125 = vunpack.c.l.b16 %v61
  %v126 = vunpack.c.l.b16 %v62
  %v127 = vunpack.c.l.b16 %v63
  %v128 = vunpack.c.l.b16 %v64
  %v129 = vunpack.c.l.b16 %v65
  %v130 = vunpack.c.l.b16 %v66
  %v131 = vunpack.c.l.b16 %v67
  %v132 = vunpack.c.l.b16 %v68
  %v133 = vunpack.c.l.b16 %v69
  %v134 = vunpack.c.l.b16 %v70
  %v135 = vunpack.c.l.b16 %v71
  %v136 = vunpack.c.l.b16 %v72
  %v137 = vunpack.c.l.b16 %v73
  %v138 = vunpack.c.l.b16 %v74
  %v139 = vunpack.c.l.b16 %v75
  %v140 = vpack.c.b16 %v109, %v108
  %v141 = vpack.c.b16 %v111, %v110
  %v142 = vpack.c.b16 %v113, %v112
  %v143 = vpack.c.b16 %v115, %v114
  %v144 = vpack.c.b16 %v117, %v116
  %v145 = vpack.c.b16 %v119, %v118
  %v146 = vpack.c.b16 %v121, %v120
  %v147 = vpack.c.b16 %v123, %v122
  %v148 = vpack.c.b16 %v125, %v124
  %v149 = vpack.c.b16 %v127, %v126
  %v150 = vpack.c.b16 %v129, %v128
  %v151 = vpack.c.b16 %v131, %v130
  %v152 = vpack.c.b16 %v133, %v132
  %v153 = vpack.c.b16 %v135, %v134
  %v154 = vpack.c.b16 %v137, %v136
  %v155 = vpack.c.b16 %v139, %v138
  %172 = vmatprep.subr.bf16.mxu0 0
  %173 = vmatpush1.bf16.msra.mxu0 %v140
  %174 = vmatprep.subr.bf16.mxu0 0
  %175 = vmatpush1.bf16.msra.mxu0 %v141
  %176 = vmatprep.subr.bf16.mxu0 0
  %177 = vmatpush1.bf16.msra.mxu0 %v142
  %178 = vmatprep.subr.bf16.mxu0 0
  %179 = vmatpush1.bf16.msra.mxu0 %v143
  %180 = vmatprep.subr.bf16.mxu0 0
  %181 = vmatpush1.bf16.msra.mxu0 %v144
  %182 = vmatprep.subr.bf16.mxu0 0
  %183 = vmatpush1.bf16.msra.mxu0 %v145
  %184 = vmatprep.subr.bf16.mxu0 0
  %185 = vmatpush1.bf16.msra.mxu0 %v146
  %186 = vmatprep.subr.bf16.mxu0 0
  %187 = vmatpush1.bf16.msra.mxu0 %v147
  %188 = vmatprep.subr.bf16.mxu0 0
  %189 = vmatpush1.bf16.msra.mxu0 %v148
  %190 = vmatprep.subr.bf16.mxu0 0
  %191 = vmatpush1.bf16.msra.mxu0 %v149
  %192 = vmatprep.subr.bf16.mxu0 0
  %193 = vmatpush1.bf16.msra.mxu0 %v150
  %194 = vmatprep.subr.bf16.mxu0 0
  %195 = vmatpush1.bf16.msra.mxu0 %v151
  %196 = vmatprep.subr.bf16.mxu0 0
  %197 = vmatpush1.bf16.msra.mxu0 %v152
  %198 = vmatprep.subr.bf16.mxu0 0
  %199 = vmatpush1.bf16.msra.mxu0 %v153
  %200 = vmatprep.subr.bf16.mxu0 0
  %201 = vmatpush1.bf16.msra.mxu0 %v154
  %202 = vmatprep.subr.bf16.mxu0 0
  %203 = vmatpush1.bf16.msra.mxu0 %v155
  %204 = vmatprep.mubr.bf16.mxu0 %v43
  %205 = vmatmul.mubr.bf16.gmra.mrb[0].mxu0 %v42
  %v206 = vpop.f32.mrb[0].mxu0
  %v207 = vadd.f32 0.0, %v206
  %v208 = vpop.f32.mrb[0].mxu0
  %v209 = vpop.f32.mrb[0].mxu0
  %v210 = vpop.f32.mrb[0].mxu0
  %211 = vdwg.mxu0
  %v212 = vadd.f32 %v29, %v207
  %vm213 = vcmask 74752
  %214 = vst.msk [vmem:[#allocation2] sm:$0x3] %vm213, %v212
  // Predicated region
  $region26: #{classifier_forward.23} parent=0 // pred_check
    %p215 = pneg %p23
  $region27: #{classifier_forward.23} parent=0 // pred_check_branch
    %217 = sbr.rel (%p215) target = $region29
  $region28: #{classifier_forward.23} parent=0 // pred_region
    %v218 = vld [vmem:[#allocation2] sm:$0x3]
    %v219 = vld [vmem:[%s2] sm:$0x1]
    %v221 = vlaneseq
    %v222 = vshrl.u32 %v221, 7
    %v223 = vsub.s32 0, %v222
    %v224 = vrot.slane %v219, %v223
    %v226 = vadd.f32 %v218, %v224
    %v227 = vmax.f32 %v226, 0.0
    %v228 = vld [vmem:[%s3] sm:$0x1]
    %v230 = vlaneseq
    %v231 = vshrl.u32 %v230, 7
    %v232 = vsub.s32 0, %v231
    %v233 = vrot.slane %v228, %v232
    %v235 = vmul.f32 %v227, %v233
    %v236 = vsel %vm213, %v235, 0.0
    %237 = vadd.xlane.f32.xlu0 %v236
    %v238 = vpop.xlane.xlu0 %237
    %v239 = vld [vmem:[#allocation3] sm:$0x1]
    %v241 = vlaneseq
    %v242 = vshrl.u32 %v241, 7
    %v243 = vsub.s32 0, %v242
    %v244 = vrot.slane %v239, %v243
    %v246 = vadd.f32 %v238, %v244
    %v247 = vxor.u32 %v246, 2147483648
    %v248 = vmul.f32 %v247, 1.442695
    %v249 = vpow.pop %v248
    %v250 = vadd.f32 %v249, 1.0
    %v251 = vrcp.pop %v250
    %v252 = vmul.f32 1.0, %v251
    %vm253 = vcmask 1024
    %254 = vst.msk [vmem:[%s5] sm:$0x3] %vm253, %v252
  $region29: #{classifier_forward.23} parent=0 // pred_fallthru
    _
  // Predicated region
  $region30: #{classifier_forward.23} parent=0 // pred_check
    _
  $region31: #{classifier_forward.23} parent=0 // pred_check_branch
    %256 = sbr.rel (0) target = $region33
  $region32: #{classifier_forward.23} parent=0 // pred_region
    _
  $region33: #{classifier_forward.23} parent=0 // pred_fallthru
    _
  // Predicated region
  $region34: #{classifier_forward.23} parent=0 // pred_check
    _
  $region35: #{classifier_forward.23} parent=0 // pred_check_branch
    %258 = sbr.rel (0) target = $region37
  $region36: #{classifier_forward.23} parent=0 // pred_region
    _
  $region37: #{classifier_forward.23} parent=0 // pred_fallthru
    _

</llo_original>
